<compile_context>
chip_gen: v5e
topology: v5e:2x2
jax: 0.10.0
libtpu: 0.0.40
codegen_flags: <defaults>
</compile_context>

<pallas_src>
import math

import jax
import jax.numpy as jnp
from jax.experimental import pallas as pl
from jax.experimental.pallas import tpu as pltpu


# ----------------------------- shared math ---------------------------------

def _layernorm(v, g, b, eps=1e-5):
    mu = jnp.mean(v, axis=-1, keepdims=True)
    var = jnp.mean((v - mu) ** 2, axis=-1, keepdims=True)
    return (v - mu) * jax.lax.rsqrt(var + eps) * g + b


def _gelu(v):
    # exact (erf) GELU, matching PyTorch's activation='gelu' default
    return 0.5 * v * (1.0 + jax.lax.erf(v * (1.0 / math.sqrt(2.0))))


# ------------------------------- kernel ------------------------------------

def _make_kernel(P, E, H, L):
    """Fused PatchTST forward for one batch element (one grid step)."""
    bf16 = jnp.bfloat16
    f32 = jnp.float32

    def kernel(x_ref, pos_ref,
               wp_ref, bp_ref,
               wq_ref, bq_ref, wk_ref, bk_ref, wvo_ref, bo_ref,
               ln1g_ref, ln1b_ref, w1_ref, b1_ref, w2_ref, b2_ref,
               ln2g_ref, ln2b_ref,
               ng_ref, nb_ref, h1w_ref, h1b_ref, h2w_ref, h2b_ref,
               out_ref):
        # Conv1d(1, E, kernel=stride=patch) == patches @ Wp + bp  (bf16 MXU,
        # f32 accumulate), then add positional embedding.  (P, E) f32.
        u = jnp.dot(x_ref[...], wp_ref[...],
                    preferred_element_type=f32) + bp_ref[...]
        u = u + pos_ref[...]

        for l in range(L):                       # post-norm encoder layers
            ub = u.astype(bf16)                  # single bf16 cast reused below
            acc = None
            for h in range(H):
                # Pre-split, pre-scaled per-head projections (no qkv slicing).
                qh = jnp.dot(ub, wq_ref[l, h],
                             preferred_element_type=f32) + bq_ref[l, h]
                kh = jnp.dot(ub, wk_ref[l, h],
                             preferred_element_type=f32) + bk_ref[l, h]
                # scores = (q/sqrt(hd)) @ k^T ; softmax kept entirely in f32.
                s = jax.lax.dot_general(
                    qh.astype(bf16), kh.astype(bf16),
                    (((1,), (1,)), ((), ())),
                    preferred_element_type=f32)              # (P, P)
                s = s - jnp.max(s, axis=-1, keepdims=True)
                p = jnp.exp(s)
                p = p * pl.reciprocal(jnp.sum(p, axis=-1, keepdims=True),
                                      approx=True)
                # V projection with Wo pre-folded: (P,E), head-merge is a sum.
                vproj = jnp.dot(ub, wvo_ref[l, h],
                                preferred_element_type=f32)
                part = jnp.dot(p.astype(bf16), vproj.astype(bf16),
                               preferred_element_type=f32)
                acc = part if acc is None else acc + part
            u = _layernorm(u + acc + bo_ref[l], ln1g_ref[l], ln1b_ref[l])

            # ---- feed-forward block ----
            ff = _gelu(jnp.dot(u.astype(bf16), w1_ref[l],
                               preferred_element_type=f32) + b1_ref[l])
            ff = jnp.dot(ff.astype(bf16), w2_ref[l],
                         preferred_element_type=f32) + b2_ref[l]
            u = _layernorm(u + ff, ln2g_ref[l], ln2b_ref[l])

        # ---- mean-pool over patches + final norm + head ----
        z = jnp.sum(u, axis=0, keepdims=True) * (1.0 / P)     # (1, E)
        z = _layernorm(z, ng_ref[...], nb_ref[...])
        h1 = _gelu(jnp.dot(z.astype(bf16), h1w_ref[...],
                           preferred_element_type=f32) + h1b_ref[...])
        # h2 weights are lane-padded to 128 -> full-lane store.
        out_ref[...] = jnp.dot(h1.astype(bf16), h2w_ref[...],
                               preferred_element_type=f32) + h2b_ref[...]

    return kernel


# ------------------------------ wrapper -------------------------------------

def patchtst_forward(x, params, *, patch_size, n_heads):
    B, C, T = x.shape
    assert C == 1, "univariate only"
    assert T % patch_size == 0
    P = T // patch_size

    E = params["w_patch"].shape[1]
    L = params["wqkv"].shape[0]
    H = n_heads
    hd = E // H
    scale = 1.0 / math.sqrt(hd)
    out_h = params["h2w"].shape[1]
    OUT_PAD = 128                     # lane-dense final store; slice in wrapper

    f32, bf16 = jnp.float32, jnp.bfloat16

    # ---- layout / weight refactoring (pure glue, done once, in f32) ----
    xp = x.reshape(B, P, patch_size).astype(bf16)             # (B, P, K)

    wqkv = params["wqkv"].astype(f32)                         # (L, E, 3E)
    bqkv = params["bqkv"].astype(f32)                         # (L, 1, 3E)
    wo = params["wo"].astype(f32)                             # (L, E, E)
    bo = params["bo"].astype(f32)                             # (L, 1, E)

    # per-head Q/K with 1/sqrt(hd) folded into Q
    wq = wqkv[:, :, :E].reshape(L, E, H, hd).transpose(0, 2, 1, 3) * scale
    wk = wqkv[:, :, E:2 * E].reshape(L, E, H, hd).transpose(0, 2, 1, 3)
    bq = bqkv[:, :, :E].reshape(L, 1, H, hd).transpose(0, 2, 1, 3) * scale
    bk = bqkv[:, :, E:2 * E].reshape(L, 1, H, hd).transpose(0, 2, 1, 3)

    # fold Wo into V:  Wvo[l,h] = Wv_h @ Wo_h   (E, E); fold V-bias into bo
    wv = wqkv[:, :, 2 * E:].reshape(L, E, H, hd).transpose(0, 2, 1, 3)
    wo_h = wo.reshape(L, H, hd, E)
    wvo = jnp.einsum('lhed,lhdf->lhef', wv, wo_h)             # (L, H, E, E)
    bv = bqkv[:, :, 2 * E:]                                   # (L, 1, E)
    bo_eff = bo + jnp.einsum('lre,lef->lrf', bv, wo)          # (L, 1, E)

    # pad final head projection to 128 lanes (unmasked store)
    h2w_pad = jnp.zeros((E, OUT_PAD), f32).at[:, :out_h].set(
        params["h2w"].astype(f32))
    h2b_pad = jnp.zeros((1, OUT_PAD), f32).at[:, :out_h].set(
        params["h2b"].astype(f32))

    args = (
        xp,                                                   # blocked per batch
        params["pos"].astype(f32),                            # (P, E)
        params["w_patch"].astype(bf16), params["b_patch"].astype(f32),
        wq.astype(bf16), bq,
        wk.astype(bf16), bk,
        wvo.astype(bf16), bo_eff,
        params["ln1g"].astype(f32), params["ln1b"].astype(f32),
        params["w1"].astype(bf16), params["b1"].astype(f32),
        params["w2"].astype(bf16), params["b2"].astype(f32),
        params["ln2g"].astype(f32), params["ln2b"].astype(f32),
        params["norm_g"].astype(f32), params["norm_b"].astype(f32),
        params["h1w"].astype(bf16), params["h1b"].astype(f32),
        h2w_pad.astype(bf16), h2b_pad,
    )

    kernel = _make_kernel(P, E, H, L)

    vmem_full = pl.BlockSpec(memory_space=pltpu.MemorySpace.VMEM)
    in_specs = ([pl.BlockSpec((None, P, patch_size), lambda b: (b, 0, 0))]
                + [vmem_full] * (len(args) - 1))
    out_specs = pl.BlockSpec((None, 1, OUT_PAD), lambda b: (b, 0, 0))

    out = pl.pallas_call(
        kernel,
        out_shape=jax.ShapeDtypeStruct((B, 1, OUT_PAD), f32),
        grid=(B,),
        in_specs=in_specs,
        out_specs=out_specs,
        compiler_params=pltpu.CompilerParams(
            dimension_semantics=("parallel",)),   # v7x: split batch across TCs
    )(*args)
    # out_horizon == 1 -> squeeze(-1), matching the module
    return out[:, 0, 0]


# --------------------------- parameter init ---------------------------------

def init_params(key, *, patch_size, n_patches, emb_dim, ff_mult, n_layers,
                out_horizon=1):
    F = emb_dim * ff_mult
    keys = jax.random.split(key, 16)

    def rnd(k, shape, scale=0.05):
        return (scale * jax.random.normal(k, shape)).astype(jnp.float32)

    return dict(
        # Conv1d(1, E, kernel=patch, stride=patch) stored as (patch_size, E)
        w_patch=rnd(keys[0], (patch_size, emb_dim), 0.1),
        b_patch=rnd(keys[1], (1, emb_dim)),
        pos=rnd(keys[2], (n_patches, emb_dim), 0.02),
        # per-layer stacked transformer params
        wqkv=rnd(keys[3], (n_layers, emb_dim, 3 * emb_dim)),
        bqkv=rnd(keys[4], (n_layers, 1, 3 * emb_dim), 0.02),
        wo=rnd(keys[5], (n_layers, emb_dim, emb_dim)),
        bo=rnd(keys[6], (n_layers, 1, emb_dim), 0.02),
        ln1g=jnp.ones((n_layers, 1, emb_dim), jnp.float32),
        ln1b=jnp.zeros((n_layers, 1, emb_dim), jnp.float32),
        w1=rnd(keys[7], (n_layers, emb_dim, F)),
        b1=rnd(keys[8], (n_layers, 1, F), 0.02),
        w2=rnd(keys[9], (n_layers, F, emb_dim)),
        b2=rnd(keys[10], (n_layers, 1, emb_dim), 0.02),
        ln2g=jnp.ones((n_layers, 1, emb_dim), jnp.float32),
        ln2b=jnp.zeros((n_layers, 1, emb_dim), jnp.float32),
        # final LayerNorm + head
        norm_g=jnp.ones((1, emb_dim), jnp.float32),
        norm_b=jnp.zeros((1, emb_dim), jnp.float32),
        h1w=rnd(keys[11], (emb_dim, emb_dim)),
        h1b=rnd(keys[12], (1, emb_dim), 0.02),
        h2w=rnd(keys[13], (emb_dim, out_horizon)),
        h2b=rnd(keys[14], (1, out_horizon), 0.02),
    )


# ------------------------ pure-JAX reference ---------------------------------

def reference_forward(x, params, *, patch_size, n_heads):
    B, C, T = x.shape
    P = T // patch_size
    E = params["w_patch"].shape[1]
    hd = E // n_heads
    u = x.reshape(B, P, patch_size) @ params["w_patch"] + params["b_patch"]
    u = u + params["pos"][None]
    L = params["wqkv"].shape[0]
    for l in range(L):
        qkv = u @ params["wqkv"][l] + params["bqkv"][l]
        q, k, v = qkv[..., :E], qkv[..., E:2 * E], qkv[..., 2 * E:]
        q = q.reshape(B, P, n_heads, hd)
        k = k.reshape(B, P, n_heads, hd)
        v = v.reshape(B, P, n_heads, hd)
        s = jnp.einsum('bqhd,bkhd->bhqk', q, k) / math.sqrt(hd)
        a = jax.nn.softmax(s, axis=-1)
        o = jnp.einsum('bhqk,bkhd->bqhd', a, v).reshape(B, P, E)
        o = o @ params["wo"][l] + params["bo"][l]
        u = _layernorm(u + o, params["ln1g"][l], params["ln1b"][l])
        ff = _gelu(u @ params["w1"][l] + params["b1"][l]) @ params["w2"][l] + params["b2"][l]
        u = _layernorm(u + ff, params["ln2g"][l], params["ln2b"][l])
    z = u.mean(axis=1)
    z = _layernorm(z, params["norm_g"], params["norm_b"])
    h1 = _gelu(z @ params["h1w"] + params["h1b"])
    out = h1 @ params["h2w"] + params["h2b"]
    return out[:, 0]


# --------------------------------- main --------------------------------------

if __name__ == "__main__":
    # small shapes consistent with the module:
    # B=2, in_channels=1, seq_len=16, patch_size=4 -> 4 patches,
    # emb_dim=32, n_heads=4, ff_mult=4 (ff=128), n_layers=2, out_horizon=1
    B, C = 2, 1
    seq_len, patch_size = 16, 4
    emb_dim, n_heads, ff_mult, n_layers = 32, 4, 4, 2
    n_patches = seq_len // patch_size

    key = jax.random.PRNGKey(0)
    kx, kp = jax.random.split(key)
    x = jax.random.normal(kx, (B, C, seq_len), jnp.float32)
    params = init_params(kp, patch_size=patch_size, n_patches=n_patches,
                         emb_dim=emb_dim, ff_mult=ff_mult, n_layers=n_layers)

    out = patchtst_forward(x, params, patch_size=patch_size, n_heads=n_heads)
    out = jax.block_until_ready(out)

    ref = reference_forward(x, params, patch_size=patch_size, n_heads=n_heads)
    assert out.shape == (B,), out.shape
    # bf16 MXU operands + EUP approx-reciprocal softmax give ~1e-3-level
    # deviations vs the f32 reference; 1e-2 still catches structural bugs.
    assert jnp.allclose(out, ref, atol=1e-2, rtol=1e-2), (out, ref)
    print("KERNEL_OK")
</pallas_src>

<mosaic_0001>
module attributes {stable_mosaic.version = 11 : i64} {
  func.func @kernel(%arg0: i32, %arg1: memref<1x4x4xbf16, #tpu.memory_space<vmem>>, %arg2: memref<4x32xf32, #tpu.memory_space<vmem>>, %arg3: memref<4x32xbf16, #tpu.memory_space<vmem>>, %arg4: memref<1x32xf32, #tpu.memory_space<vmem>>, %arg5: memref<2x4x32x8xbf16, #tpu.memory_space<vmem>>, %arg6: memref<2x4x1x8xf32, #tpu.memory_space<vmem>>, %arg7: memref<2x4x32x8xbf16, #tpu.memory_space<vmem>>, %arg8: memref<2x4x1x8xf32, #tpu.memory_space<vmem>>, %arg9: memref<2x4x32x32xbf16, #tpu.memory_space<vmem>>, %arg10: memref<2x1x32xf32, #tpu.memory_space<vmem>>, %arg11: memref<2x1x32xf32, #tpu.memory_space<vmem>>, %arg12: memref<2x1x32xf32, #tpu.memory_space<vmem>>, %arg13: memref<2x32x128xbf16, #tpu.memory_space<vmem>>, %arg14: memref<2x1x128xf32, #tpu.memory_space<vmem>>, %arg15: memref<2x128x32xbf16, #tpu.memory_space<vmem>>, %arg16: memref<2x1x32xf32, #tpu.memory_space<vmem>>, %arg17: memref<2x1x32xf32, #tpu.memory_space<vmem>>, %arg18: memref<2x1x32xf32, #tpu.memory_space<vmem>>, %arg19: memref<1x32xf32, #tpu.memory_space<vmem>>, %arg20: memref<1x32xf32, #tpu.memory_space<vmem>>, %arg21: memref<32x32xbf16, #tpu.memory_space<vmem>>, %arg22: memref<1x32xf32, #tpu.memory_space<vmem>>, %arg23: memref<32x128xbf16, #tpu.memory_space<vmem>>, %arg24: memref<1x128xf32, #tpu.memory_space<vmem>>, %arg25: memref<1x1x128xf32, #tpu.memory_space<vmem>>) attributes {dimension_semantics = [#tpu.dimension_semantics<parallel>], iteration_bounds = array<i64: 2>, scalar_prefetch = 0 : i64, scratch_operands = 0 : i64, tpu.core_type = #tpu.core_type<tc>, window_params = [{transform_indices = @transform_0, window_bounds = array<i64: 1, 4, 4>}, {pipeline_mode = #tpu.pipeline_mode<synchronous>, transform_indices = @transform_1, window_bounds = array<i64: 4, 32>}, {pipeline_mode = #tpu.pipeline_mode<synchronous>, transform_indices = @transform_2, window_bounds = array<i64: 4, 32>}, {pipeline_mode = #tpu.pipeline_mode<synchronous>, transform_indices = @transform_3, window_bounds = array<i64: 1, 32>}, {pipeline_mode = #tpu.pipeline_mode<synchronous>, transform_indices = @transform_4, window_bounds = array<i64: 2, 4, 32, 8>}, {pipeline_mode = #tpu.pipeline_mode<synchronous>, transform_indices = @transform_5, window_bounds = array<i64: 2, 4, 1, 8>}, {pipeline_mode = #tpu.pipeline_mode<synchronous>, transform_indices = @transform_6, window_bounds = array<i64: 2, 4, 32, 8>}, {pipeline_mode = #tpu.pipeline_mode<synchronous>, transform_indices = @transform_7, window_bounds = array<i64: 2, 4, 1, 8>}, {pipeline_mode = #tpu.pipeline_mode<synchronous>, transform_indices = @transform_8, window_bounds = array<i64: 2, 4, 32, 32>}, {pipeline_mode = #tpu.pipeline_mode<synchronous>, transform_indices = @transform_9, window_bounds = array<i64: 2, 1, 32>}, {pipeline_mode = #tpu.pipeline_mode<synchronous>, transform_indices = @transform_10, window_bounds = array<i64: 2, 1, 32>}, {pipeline_mode = #tpu.pipeline_mode<synchronous>, transform_indices = @transform_11, window_bounds = array<i64: 2, 1, 32>}, {pipeline_mode = #tpu.pipeline_mode<synchronous>, transform_indices = @transform_12, window_bounds = array<i64: 2, 32, 128>}, {pipeline_mode = #tpu.pipeline_mode<synchronous>, transform_indices = @transform_13, window_bounds = array<i64: 2, 1, 128>}, {pipeline_mode = #tpu.pipeline_mode<synchronous>, transform_indices = @transform_14, window_bounds = array<i64: 2, 128, 32>}, {pipeline_mode = #tpu.pipeline_mode<synchronous>, transform_indices = @transform_15, window_bounds = array<i64: 2, 1, 32>}, {pipeline_mode = #tpu.pipeline_mode<synchronous>, transform_indices = @transform_16, window_bounds = array<i64: 2, 1, 32>}, {pipeline_mode = #tpu.pipeline_mode<synchronous>, transform_indices = @transform_17, window_bounds = array<i64: 2, 1, 32>}, {pipeline_mode = #tpu.pipeline_mode<synchronous>, transform_indices = @transform_18, window_bounds = array<i64: 1, 32>}, {pipeline_mode = #tpu.pipeline_mode<synchronous>, transform_indices = @transform_19, window_bounds = array<i64: 1, 32>}, {pipeline_mode = #tpu.pipeline_mode<synchronous>, transform_indices = @transform_20, window_bounds = array<i64: 32, 32>}, {pipeline_mode = #tpu.pipeline_mode<synchronous>, transform_indices = @transform_21, window_bounds = array<i64: 1, 32>}, {pipeline_mode = #tpu.pipeline_mode<synchronous>, transform_indices = @transform_22, window_bounds = array<i64: 32, 128>}, {pipeline_mode = #tpu.pipeline_mode<synchronous>, transform_indices = @transform_23, window_bounds = array<i64: 1, 128>}, {transform_indices = @transform_24, window_bounds = array<i64: 1, 1, 128>}]} {
    %c0 = arith.constant 0 : index
    %c0_0 = arith.constant 0 : index
    %c0_1 = arith.constant 0 : index
    %0 = vector.load %arg1[%c0, %c0_0, %c0_1] : memref<1x4x4xbf16, #tpu.memory_space<vmem>>, vector<1x4x4xbf16>
    %1 = vector.shape_cast %0 : vector<1x4x4xbf16> to vector<4x4xbf16>
    %c0_2 = arith.constant 0 : index
    %c0_3 = arith.constant 0 : index
    %2 = vector.load %arg3[%c0_2, %c0_3] : memref<4x32xbf16, #tpu.memory_space<vmem>>, vector<4x32xbf16>
    %cst = arith.constant dense<0.000000e+00> : vector<4x32xf32>
    %3 = tpu.matmul %1, %2, %cst {dimension_numbers = #tpu.dot_dimension_numbers<[1], [0], [0], [1], [0, 0, 1, 1], [], []>} : vector<4x4xbf16>, vector<4x32xbf16>, vector<4x32xf32> -> vector<4x32xf32>
    %c0_4 = arith.constant 0 : index
    %c0_5 = arith.constant 0 : index
    %4 = vector.load %arg4[%c0_4, %c0_5] : memref<1x32xf32, #tpu.memory_space<vmem>>, vector<1x32xf32>
    %5 = vector.broadcast %4 : vector<1x32xf32> to vector<4x32xf32>
    %6 = arith.addf %3, %5 : vector<4x32xf32>
    %c0_6 = arith.constant 0 : index
    %c0_7 = arith.constant 0 : index
    %7 = vector.load %arg2[%c0_6, %c0_7] : memref<4x32xf32, #tpu.memory_space<vmem>>, vector<4x32xf32>
    %8 = arith.addf %6, %7 : vector<4x32xf32>
    %9 = arith.truncf %8 : vector<4x32xf32> to vector<4x32xbf16>
    %c0_8 = arith.constant 0 : index
    %c0_9 = arith.constant 0 : index
    %c0_10 = arith.constant 0 : index
    %c0_11 = arith.constant 0 : index
    %10 = vector.load %arg5[%c0_8, %c0_9, %c0_10, %c0_11] : memref<2x4x32x8xbf16, #tpu.memory_space<vmem>>, vector<1x1x32x8xbf16>
    %11 = vector.shape_cast %10 : vector<1x1x32x8xbf16> to vector<32x8xbf16>
    %cst_12 = arith.constant dense<0.000000e+00> : vector<4x8xf32>
    %12 = tpu.matmul %9, %11, %cst_12 {dimension_numbers = #tpu.dot_dimension_numbers<[1], [0], [0], [1], [0, 0, 1, 1], [], []>} : vector<4x32xbf16>, vector<32x8xbf16>, vector<4x8xf32> -> vector<4x8xf32>
    %c0_13 = arith.constant 0 : index
    %c0_14 = arith.constant 0 : index
    %c0_15 = arith.constant 0 : index
    %c0_16 = arith.constant 0 : index
    %13 = vector.load %arg6[%c0_13, %c0_14, %c0_15, %c0_16] : memref<2x4x1x8xf32, #tpu.memory_space<vmem>>, vector<1x1x1x8xf32>
    %14 = vector.shape_cast %13 : vector<1x1x1x8xf32> to vector<1x8xf32>
    %15 = vector.broadcast %14 : vector<1x8xf32> to vector<4x8xf32>
    %16 = arith.addf %12, %15 : vector<4x8xf32>
    %c0_17 = arith.constant 0 : index
    %c0_18 = arith.constant 0 : index
    %c0_19 = arith.constant 0 : index
    %c0_20 = arith.constant 0 : index
    %17 = vector.load %arg7[%c0_17, %c0_18, %c0_19, %c0_20] : memref<2x4x32x8xbf16, #tpu.memory_space<vmem>>, vector<1x1x32x8xbf16>
    %18 = vector.shape_cast %17 : vector<1x1x32x8xbf16> to vector<32x8xbf16>
    %cst_21 = arith.constant dense<0.000000e+00> : vector<4x8xf32>
    %19 = tpu.matmul %9, %18, %cst_21 {dimension_numbers = #tpu.dot_dimension_numbers<[1], [0], [0], [1], [0, 0, 1, 1], [], []>} : vector<4x32xbf16>, vector<32x8xbf16>, vector<4x8xf32> -> vector<4x8xf32>
    %c0_22 = arith.constant 0 : index
    %c0_23 = arith.constant 0 : index
    %c0_24 = arith.constant 0 : index
    %c0_25 = arith.constant 0 : index
    %20 = vector.load %arg8[%c0_22, %c0_23, %c0_24, %c0_25] : memref<2x4x1x8xf32, #tpu.memory_space<vmem>>, vector<1x1x1x8xf32>
    %21 = vector.shape_cast %20 : vector<1x1x1x8xf32> to vector<1x8xf32>
    %22 = vector.broadcast %21 : vector<1x8xf32> to vector<4x8xf32>
    %23 = arith.addf %19, %22 : vector<4x8xf32>
    %24 = arith.truncf %16 : vector<4x8xf32> to vector<4x8xbf16>
    %25 = arith.truncf %23 : vector<4x8xf32> to vector<4x8xbf16>
    %cst_26 = arith.constant dense<0.000000e+00> : vector<4x4xf32>
    %26 = tpu.matmul %24, %25, %cst_26 {dimension_numbers = #tpu.dot_dimension_numbers<[1], [1], [0], [0], [0, 0, 1, 0], [], []>} : vector<4x8xbf16>, vector<4x8xbf16>, vector<4x4xf32> -> vector<4x4xf32>
    %cst_27 = arith.constant dense<0xFF800000> : vector<4xf32>
    %27 = vector.multi_reduction <maximumf>, %26, %cst_27 [1] : vector<4x4xf32> to vector<4xf32>
    %28 = vector.shape_cast %27 : vector<4xf32> to vector<4x1xf32>
    %29 = vector.broadcast %28 : vector<4x1xf32> to vector<4x4xf32>
    %30 = arith.subf %26, %29 : vector<4x4xf32>
    %31 = math.exp %30 : vector<4x4xf32>
    %cst_28 = arith.constant dense<0.000000e+00> : vector<4xf32>
    %32 = vector.multi_reduction <add>, %31, %cst_28 [1] : vector<4x4xf32> to vector<4xf32>
    %33 = vector.shape_cast %32 : vector<4xf32> to vector<4x1xf32>
    %34 = tpu.reciprocal %33 {approx = true} : vector<4x1xf32> -> vector<4x1xf32>
    %35 = vector.broadcast %34 : vector<4x1xf32> to vector<4x4xf32>
    %36 = arith.mulf %31, %35 : vector<4x4xf32>
    %c0_29 = arith.constant 0 : index
    %c0_30 = arith.constant 0 : index
    %c0_31 = arith.constant 0 : index
    %c0_32 = arith.constant 0 : index
    %37 = vector.load %arg9[%c0_29, %c0_30, %c0_31, %c0_32] : memref<2x4x32x32xbf16, #tpu.memory_space<vmem>>, vector<1x1x32x32xbf16>
    %38 = vector.shape_cast %37 : vector<1x1x32x32xbf16> to vector<32x32xbf16>
    %cst_33 = arith.constant dense<0.000000e+00> : vector<4x32xf32>
    %39 = tpu.matmul %9, %38, %cst_33 {dimension_numbers = #tpu.dot_dimension_numbers<[1], [0], [0], [1], [0, 0, 1, 1], [], []>} : vector<4x32xbf16>, vector<32x32xbf16>, vector<4x32xf32> -> vector<4x32xf32>
    %40 = arith.truncf %36 : vector<4x4xf32> to vector<4x4xbf16>
    %41 = arith.truncf %39 : vector<4x32xf32> to vector<4x32xbf16>
    %cst_34 = arith.constant dense<0.000000e+00> : vector<4x32xf32>
    %42 = tpu.matmul %40, %41, %cst_34 {dimension_numbers = #tpu.dot_dimension_numbers<[1], [0], [0], [1], [0, 0, 1, 1], [], []>} : vector<4x4xbf16>, vector<4x32xbf16>, vector<4x32xf32> -> vector<4x32xf32>
    %c0_35 = arith.constant 0 : index
    %c1 = arith.constant 1 : index
    %c0_36 = arith.constant 0 : index
    %c0_37 = arith.constant 0 : index
    %43 = vector.load %arg5[%c0_35, %c1, %c0_36, %c0_37] : memref<2x4x32x8xbf16, #tpu.memory_space<vmem>>, vector<1x1x32x8xbf16>
    %44 = vector.shape_cast %43 : vector<1x1x32x8xbf16> to vector<32x8xbf16>
    %cst_38 = arith.constant dense<0.000000e+00> : vector<4x8xf32>
    %45 = tpu.matmul %9, %44, %cst_38 {dimension_numbers = #tpu.dot_dimension_numbers<[1], [0], [0], [1], [0, 0, 1, 1], [], []>} : vector<4x32xbf16>, vector<32x8xbf16>, vector<4x8xf32> -> vector<4x8xf32>
    %c0_39 = arith.constant 0 : index
    %c1_40 = arith.constant 1 : index
    %c0_41 = arith.constant 0 : index
    %c0_42 = arith.constant 0 : index
    %46 = vector.load %arg6[%c0_39, %c1_40, %c0_41, %c0_42] : memref<2x4x1x8xf32, #tpu.memory_space<vmem>>, vector<1x1x1x8xf32>
    %47 = vector.shape_cast %46 : vector<1x1x1x8xf32> to vector<1x8xf32>
    %48 = vector.broadcast %47 : vector<1x8xf32> to vector<4x8xf32>
    %49 = arith.addf %45, %48 : vector<4x8xf32>
    %c0_43 = arith.constant 0 : index
    %c1_44 = arith.constant 1 : index
    %c0_45 = arith.constant 0 : index
    %c0_46 = arith.constant 0 : index
    %50 = vector.load %arg7[%c0_43, %c1_44, %c0_45, %c0_46] : memref<2x4x32x8xbf16, #tpu.memory_space<vmem>>, vector<1x1x32x8xbf16>
    %51 = vector.shape_cast %50 : vector<1x1x32x8xbf16> to vector<32x8xbf16>
    %cst_47 = arith.constant dense<0.000000e+00> : vector<4x8xf32>
    %52 = tpu.matmul %9, %51, %cst_47 {dimension_numbers = #tpu.dot_dimension_numbers<[1], [0], [0], [1], [0, 0, 1, 1], [], []>} : vector<4x32xbf16>, vector<32x8xbf16>, vector<4x8xf32> -> vector<4x8xf32>
    %c0_48 = arith.constant 0 : index
    %c1_49 = arith.constant 1 : index
    %c0_50 = arith.constant 0 : index
    %c0_51 = arith.constant 0 : index
    %53 = vector.load %arg8[%c0_48, %c1_49, %c0_50, %c0_51] : memref<2x4x1x8xf32, #tpu.memory_space<vmem>>, vector<1x1x1x8xf32>
    %54 = vector.shape_cast %53 : vector<1x1x1x8xf32> to vector<1x8xf32>
    %55 = vector.broadcast %54 : vector<1x8xf32> to vector<4x8xf32>
    %56 = arith.addf %52, %55 : vector<4x8xf32>
    %57 = arith.truncf %49 : vector<4x8xf32> to vector<4x8xbf16>
    %58 = arith.truncf %56 : vector<4x8xf32> to vector<4x8xbf16>
    %cst_52 = arith.constant dense<0.000000e+00> : vector<4x4xf32>
    %59 = tpu.matmul %57, %58, %cst_52 {dimension_numbers = #tpu.dot_dimension_numbers<[1], [1], [0], [0], [0, 0, 1, 0], [], []>} : vector<4x8xbf16>, vector<4x8xbf16>, vector<4x4xf32> -> vector<4x4xf32>
    %cst_53 = arith.constant dense<0xFF800000> : vector<4xf32>
    %60 = vector.multi_reduction <maximumf>, %59, %cst_53 [1] : vector<4x4xf32> to vector<4xf32>
    %61 = vector.shape_cast %60 : vector<4xf32> to vector<4x1xf32>
    %62 = vector.broadcast %61 : vector<4x1xf32> to vector<4x4xf32>
    %63 = arith.subf %59, %62 : vector<4x4xf32>
    %64 = math.exp %63 : vector<4x4xf32>
    %cst_54 = arith.constant dense<0.000000e+00> : vector<4xf32>
    %65 = vector.multi_reduction <add>, %64, %cst_54 [1] : vector<4x4xf32> to vector<4xf32>
    %66 = vector.shape_cast %65 : vector<4xf32> to vector<4x1xf32>
    %67 = tpu.reciprocal %66 {approx = true} : vector<4x1xf32> -> vector<4x1xf32>
    %68 = vector.broadcast %67 : vector<4x1xf32> to vector<4x4xf32>
    %69 = arith.mulf %64, %68 : vector<4x4xf32>
    %c0_55 = arith.constant 0 : index
    %c1_56 = arith.constant 1 : index
    %c0_57 = arith.constant 0 : index
    %c0_58 = arith.constant 0 : index
    %70 = vector.load %arg9[%c0_55, %c1_56, %c0_57, %c0_58] : memref<2x4x32x32xbf16, #tpu.memory_space<vmem>>, vector<1x1x32x32xbf16>
    %71 = vector.shape_cast %70 : vector<1x1x32x32xbf16> to vector<32x32xbf16>
    %cst_59 = arith.constant dense<0.000000e+00> : vector<4x32xf32>
    %72 = tpu.matmul %9, %71, %cst_59 {dimension_numbers = #tpu.dot_dimension_numbers<[1], [0], [0], [1], [0, 0, 1, 1], [], []>} : vector<4x32xbf16>, vector<32x32xbf16>, vector<4x32xf32> -> vector<4x32xf32>
    %73 = arith.truncf %69 : vector<4x4xf32> to vector<4x4xbf16>
    %74 = arith.truncf %72 : vector<4x32xf32> to vector<4x32xbf16>
    %cst_60 = arith.constant dense<0.000000e+00> : vector<4x32xf32>
    %75 = tpu.matmul %73, %74, %cst_60 {dimension_numbers = #tpu.dot_dimension_numbers<[1], [0], [0], [1], [0, 0, 1, 1], [], []>} : vector<4x4xbf16>, vector<4x32xbf16>, vector<4x32xf32> -> vector<4x32xf32>
    %76 = arith.addf %42, %75 : vector<4x32xf32>
    %c0_61 = arith.constant 0 : index
    %c2 = arith.constant 2 : index
    %c0_62 = arith.constant 0 : index
    %c0_63 = arith.constant 0 : index
    %77 = vector.load %arg5[%c0_61, %c2, %c0_62, %c0_63] : memref<2x4x32x8xbf16, #tpu.memory_space<vmem>>, vector<1x1x32x8xbf16>
    %78 = vector.shape_cast %77 : vector<1x1x32x8xbf16> to vector<32x8xbf16>
    %cst_64 = arith.constant dense<0.000000e+00> : vector<4x8xf32>
    %79 = tpu.matmul %9, %78, %cst_64 {dimension_numbers = #tpu.dot_dimension_numbers<[1], [0], [0], [1], [0, 0, 1, 1], [], []>} : vector<4x32xbf16>, vector<32x8xbf16>, vector<4x8xf32> -> vector<4x8xf32>
    %c0_65 = arith.constant 0 : index
    %c2_66 = arith.constant 2 : index
    %c0_67 = arith.constant 0 : index
    %c0_68 = arith.constant 0 : index
    %80 = vector.load %arg6[%c0_65, %c2_66, %c0_67, %c0_68] : memref<2x4x1x8xf32, #tpu.memory_space<vmem>>, vector<1x1x1x8xf32>
    %81 = vector.shape_cast %80 : vector<1x1x1x8xf32> to vector<1x8xf32>
    %82 = vector.broadcast %81 : vector<1x8xf32> to vector<4x8xf32>
    %83 = arith.addf %79, %82 : vector<4x8xf32>
    %c0_69 = arith.constant 0 : index
    %c2_70 = arith.constant 2 : index
    %c0_71 = arith.constant 0 : index
    %c0_72 = arith.constant 0 : index
    %84 = vector.load %arg7[%c0_69, %c2_70, %c0_71, %c0_72] : memref<2x4x32x8xbf16, #tpu.memory_space<vmem>>, vector<1x1x32x8xbf16>
    %85 = vector.shape_cast %84 : vector<1x1x32x8xbf16> to vector<32x8xbf16>
    %cst_73 = arith.constant dense<0.000000e+00> : vector<4x8xf32>
    %86 = tpu.matmul %9, %85, %cst_73 {dimension_numbers = #tpu.dot_dimension_numbers<[1], [0], [0], [1], [0, 0, 1, 1], [], []>} : vector<4x32xbf16>, vector<32x8xbf16>, vector<4x8xf32> -> vector<4x8xf32>
    %c0_74 = arith.constant 0 : index
    %c2_75 = arith.constant 2 : index
    %c0_76 = arith.constant 0 : index
    %c0_77 = arith.constant 0 : index
    %87 = vector.load %arg8[%c0_74, %c2_75, %c0_76, %c0_77] : memref<2x4x1x8xf32, #tpu.memory_space<vmem>>, vector<1x1x1x8xf32>
    %88 = vector.shape_cast %87 : vector<1x1x1x8xf32> to vector<1x8xf32>
    %89 = vector.broadcast %88 : vector<1x8xf32> to vector<4x8xf32>
    %90 = arith.addf %86, %89 : vector<4x8xf32>
    %91 = arith.truncf %83 : vector<4x8xf32> to vector<4x8xbf16>
    %92 = arith.truncf %90 : vector<4x8xf32> to vector<4x8xbf16>
    %cst_78 = arith.constant dense<0.000000e+00> : vector<4x4xf32>
    %93 = tpu.matmul %91, %92, %cst_78 {dimension_numbers = #tpu.dot_dimension_numbers<[1], [1], [0], [0], [0, 0, 1, 0], [], []>} : vector<4x8xbf16>, vector<4x8xbf16>, vector<4x4xf32> -> vector<4x4xf32>
    %cst_79 = arith.constant dense<0xFF800000> : vector<4xf32>
    %94 = vector.multi_reduction <maximumf>, %93, %cst_79 [1] : vector<4x4xf32> to vector<4xf32>
    %95 = vector.shape_cast %94 : vector<4xf32> to vector<4x1xf32>
    %96 = vector.broadcast %95 : vector<4x1xf32> to vector<4x4xf32>
    %97 = arith.subf %93, %96 : vector<4x4xf32>
    %98 = math.exp %97 : vector<4x4xf32>
    %cst_80 = arith.constant dense<0.000000e+00> : vector<4xf32>
    %99 = vector.multi_reduction <add>, %98, %cst_80 [1] : vector<4x4xf32> to vector<4xf32>
    %100 = vector.shape_cast %99 : vector<4xf32> to vector<4x1xf32>
    %101 = tpu.reciprocal %100 {approx = true} : vector<4x1xf32> -> vector<4x1xf32>
    %102 = vector.broadcast %101 : vector<4x1xf32> to vector<4x4xf32>
    %103 = arith.mulf %98, %102 : vector<4x4xf32>
    %c0_81 = arith.constant 0 : index
    %c2_82 = arith.constant 2 : index
    %c0_83 = arith.constant 0 : index
    %c0_84 = arith.constant 0 : index
    %104 = vector.load %arg9[%c0_81, %c2_82, %c0_83, %c0_84] : memref<2x4x32x32xbf16, #tpu.memory_space<vmem>>, vector<1x1x32x32xbf16>
    %105 = vector.shape_cast %104 : vector<1x1x32x32xbf16> to vector<32x32xbf16>
    %cst_85 = arith.constant dense<0.000000e+00> : vector<4x32xf32>
    %106 = tpu.matmul %9, %105, %cst_85 {dimension_numbers = #tpu.dot_dimension_numbers<[1], [0], [0], [1], [0, 0, 1, 1], [], []>} : vector<4x32xbf16>, vector<32x32xbf16>, vector<4x32xf32> -> vector<4x32xf32>
    %107 = arith.truncf %103 : vector<4x4xf32> to vector<4x4xbf16>
    %108 = arith.truncf %106 : vector<4x32xf32> to vector<4x32xbf16>
    %cst_86 = arith.constant dense<0.000000e+00> : vector<4x32xf32>
    %109 = tpu.matmul %107, %108, %cst_86 {dimension_numbers = #tpu.dot_dimension_numbers<[1], [0], [0], [1], [0, 0, 1, 1], [], []>} : vector<4x4xbf16>, vector<4x32xbf16>, vector<4x32xf32> -> vector<4x32xf32>
    %110 = arith.addf %76, %109 : vector<4x32xf32>
    %c0_87 = arith.constant 0 : index
    %c3 = arith.constant 3 : index
    %c0_88 = arith.constant 0 : index
    %c0_89 = arith.constant 0 : index
    %111 = vector.load %arg5[%c0_87, %c3, %c0_88, %c0_89] : memref<2x4x32x8xbf16, #tpu.memory_space<vmem>>, vector<1x1x32x8xbf16>
    %112 = vector.shape_cast %111 : vector<1x1x32x8xbf16> to vector<32x8xbf16>
    %cst_90 = arith.constant dense<0.000000e+00> : vector<4x8xf32>
    %113 = tpu.matmul %9, %112, %cst_90 {dimension_numbers = #tpu.dot_dimension_numbers<[1], [0], [0], [1], [0, 0, 1, 1], [], []>} : vector<4x32xbf16>, vector<32x8xbf16>, vector<4x8xf32> -> vector<4x8xf32>
    %c0_91 = arith.constant 0 : index
    %c3_92 = arith.constant 3 : index
    %c0_93 = arith.constant 0 : index
    %c0_94 = arith.constant 0 : index
    %114 = vector.load %arg6[%c0_91, %c3_92, %c0_93, %c0_94] : memref<2x4x1x8xf32, #tpu.memory_space<vmem>>, vector<1x1x1x8xf32>
    %115 = vector.shape_cast %114 : vector<1x1x1x8xf32> to vector<1x8xf32>
    %116 = vector.broadcast %115 : vector<1x8xf32> to vector<4x8xf32>
    %117 = arith.addf %113, %116 : vector<4x8xf32>
    %c0_95 = arith.constant 0 : index
    %c3_96 = arith.constant 3 : index
    %c0_97 = arith.constant 0 : index
    %c0_98 = arith.constant 0 : index
    %118 = vector.load %arg7[%c0_95, %c3_96, %c0_97, %c0_98] : memref<2x4x32x8xbf16, #tpu.memory_space<vmem>>, vector<1x1x32x8xbf16>
    %119 = vector.shape_cast %118 : vector<1x1x32x8xbf16> to vector<32x8xbf16>
    %cst_99 = arith.constant dense<0.000000e+00> : vector<4x8xf32>
    %120 = tpu.matmul %9, %119, %cst_99 {dimension_numbers = #tpu.dot_dimension_numbers<[1], [0], [0], [1], [0, 0, 1, 1], [], []>} : vector<4x32xbf16>, vector<32x8xbf16>, vector<4x8xf32> -> vector<4x8xf32>
    %c0_100 = arith.constant 0 : index
    %c3_101 = arith.constant 3 : index
    %c0_102 = arith.constant 0 : index
    %c0_103 = arith.constant 0 : index
    %121 = vector.load %arg8[%c0_100, %c3_101, %c0_102, %c0_103] : memref<2x4x1x8xf32, #tpu.memory_space<vmem>>, vector<1x1x1x8xf32>
    %122 = vector.shape_cast %121 : vector<1x1x1x8xf32> to vector<1x8xf32>
    %123 = vector.broadcast %122 : vector<1x8xf32> to vector<4x8xf32>
    %124 = arith.addf %120, %123 : vector<4x8xf32>
    %125 = arith.truncf %117 : vector<4x8xf32> to vector<4x8xbf16>
    %126 = arith.truncf %124 : vector<4x8xf32> to vector<4x8xbf16>
    %cst_104 = arith.constant dense<0.000000e+00> : vector<4x4xf32>
    %127 = tpu.matmul %125, %126, %cst_104 {dimension_numbers = #tpu.dot_dimension_numbers<[1], [1], [0], [0], [0, 0, 1, 0], [], []>} : vector<4x8xbf16>, vector<4x8xbf16>, vector<4x4xf32> -> vector<4x4xf32>
    %cst_105 = arith.constant dense<0xFF800000> : vector<4xf32>
    %128 = vector.multi_reduction <maximumf>, %127, %cst_105 [1] : vector<4x4xf32> to vector<4xf32>
    %129 = vector.shape_cast %128 : vector<4xf32> to vector<4x1xf32>
    %130 = vector.broadcast %129 : vector<4x1xf32> to vector<4x4xf32>
    %131 = arith.subf %127, %130 : vector<4x4xf32>
    %132 = math.exp %131 : vector<4x4xf32>
    %cst_106 = arith.constant dense<0.000000e+00> : vector<4xf32>
    %133 = vector.multi_reduction <add>, %132, %cst_106 [1] : vector<4x4xf32> to vector<4xf32>
    %134 = vector.shape_cast %133 : vector<4xf32> to vector<4x1xf32>
    %135 = tpu.reciprocal %134 {approx = true} : vector<4x1xf32> -> vector<4x1xf32>
    %136 = vector.broadcast %135 : vector<4x1xf32> to vector<4x4xf32>
    %137 = arith.mulf %132, %136 : vector<4x4xf32>
    %c0_107 = arith.constant 0 : index
    %c3_108 = arith.constant 3 : index
    %c0_109 = arith.constant 0 : index
    %c0_110 = arith.constant 0 : index
    %138 = vector.load %arg9[%c0_107, %c3_108, %c0_109, %c0_110] : memref<2x4x32x32xbf16, #tpu.memory_space<vmem>>, vector<1x1x32x32xbf16>
    %139 = vector.shape_cast %138 : vector<1x1x32x32xbf16> to vector<32x32xbf16>
    %cst_111 = arith.constant dense<0.000000e+00> : vector<4x32xf32>
    %140 = tpu.matmul %9, %139, %cst_111 {dimension_numbers = #tpu.dot_dimension_numbers<[1], [0], [0], [1], [0, 0, 1, 1], [], []>} : vector<4x32xbf16>, vector<32x32xbf16>, vector<4x32xf32> -> vector<4x32xf32>
    %141 = arith.truncf %137 : vector<4x4xf32> to vector<4x4xbf16>
    %142 = arith.truncf %140 : vector<4x32xf32> to vector<4x32xbf16>
    %cst_112 = arith.constant dense<0.000000e+00> : vector<4x32xf32>
    %143 = tpu.matmul %141, %142, %cst_112 {dimension_numbers = #tpu.dot_dimension_numbers<[1], [0], [0], [1], [0, 0, 1, 1], [], []>} : vector<4x4xbf16>, vector<4x32xbf16>, vector<4x32xf32> -> vector<4x32xf32>
    %144 = arith.addf %110, %143 : vector<4x32xf32>
    %145 = arith.addf %8, %144 : vector<4x32xf32>
    %c0_113 = arith.constant 0 : index
    %c0_114 = arith.constant 0 : index
    %c0_115 = arith.constant 0 : index
    %146 = vector.load %arg10[%c0_113, %c0_114, %c0_115] : memref<2x1x32xf32, #tpu.memory_space<vmem>>, vector<1x1x32xf32>
    %147 = vector.shape_cast %146 : vector<1x1x32xf32> to vector<1x32xf32>
    %148 = vector.broadcast %147 : vector<1x32xf32> to vector<4x32xf32>
    %149 = arith.addf %145, %148 : vector<4x32xf32>
    %c0_116 = arith.constant 0 : index
    %c0_117 = arith.constant 0 : index
    %c0_118 = arith.constant 0 : index
    %150 = vector.load %arg11[%c0_116, %c0_117, %c0_118] : memref<2x1x32xf32, #tpu.memory_space<vmem>>, vector<1x1x32xf32>
    %151 = vector.shape_cast %150 : vector<1x1x32xf32> to vector<1x32xf32>
    %c0_119 = arith.constant 0 : index
    %c0_120 = arith.constant 0 : index
    %c0_121 = arith.constant 0 : index
    %152 = vector.load %arg12[%c0_119, %c0_120, %c0_121] : memref<2x1x32xf32, #tpu.memory_space<vmem>>, vector<1x1x32xf32>
    %153 = vector.shape_cast %152 : vector<1x1x32xf32> to vector<1x32xf32>
    %cst_122 = arith.constant dense<0.000000e+00> : vector<4xf32>
    %154 = vector.multi_reduction <add>, %149, %cst_122 [1] : vector<4x32xf32> to vector<4xf32>
    %155 = vector.shape_cast %154 : vector<4xf32> to vector<4x1xf32>
    %cst_123 = arith.constant 3.200000e+01 : f32
    %156 = vector.broadcast %cst_123 : f32 to vector<4x1xf32>
    %157 = arith.divf %155, %156 : vector<4x1xf32>
    %158 = vector.broadcast %157 : vector<4x1xf32> to vector<4x32xf32>
    %159 = arith.subf %149, %158 : vector<4x32xf32>
    %160 = arith.mulf %159, %159 : vector<4x32xf32>
    %cst_124 = arith.constant dense<0.000000e+00> : vector<4xf32>
    %161 = vector.multi_reduction <add>, %160, %cst_124 [1] : vector<4x32xf32> to vector<4xf32>
    %162 = vector.shape_cast %161 : vector<4xf32> to vector<4x1xf32>
    %cst_125 = arith.constant 3.200000e+01 : f32
    %163 = vector.broadcast %cst_125 : f32 to vector<4x1xf32>
    %164 = arith.divf %162, %163 : vector<4x1xf32>
    %165 = vector.broadcast %157 : vector<4x1xf32> to vector<4x32xf32>
    %166 = arith.subf %149, %165 : vector<4x32xf32>
    %cst_126 = arith.constant 9.99999974E-6 : f32
    %167 = vector.broadcast %cst_126 : f32 to vector<4x1xf32>
    %168 = arith.addf %164, %167 : vector<4x1xf32>
    %169 = math.rsqrt %168 : vector<4x1xf32>
    %170 = vector.broadcast %169 : vector<4x1xf32> to vector<4x32xf32>
    %171 = arith.mulf %166, %170 : vector<4x32xf32>
    %172 = vector.broadcast %151 : vector<1x32xf32> to vector<4x32xf32>
    %173 = arith.mulf %171, %172 : vector<4x32xf32>
    %174 = vector.broadcast %153 : vector<1x32xf32> to vector<4x32xf32>
    %175 = arith.addf %173, %174 : vector<4x32xf32>
    %176 = arith.truncf %175 : vector<4x32xf32> to vector<4x32xbf16>
    %c0_127 = arith.constant 0 : index
    %c0_128 = arith.constant 0 : index
    %c0_129 = arith.constant 0 : index
    %177 = vector.load %arg13[%c0_127, %c0_128, %c0_129] : memref<2x32x128xbf16, #tpu.memory_space<vmem>>, vector<1x32x128xbf16>
    %178 = vector.shape_cast %177 : vector<1x32x128xbf16> to vector<32x128xbf16>
    %cst_130 = arith.constant dense<0.000000e+00> : vector<4x128xf32>
    %179 = tpu.matmul %176, %178, %cst_130 {dimension_numbers = #tpu.dot_dimension_numbers<[1], [0], [0], [1], [0, 0, 1, 1], [], []>} : vector<4x32xbf16>, vector<32x128xbf16>, vector<4x128xf32> -> vector<4x128xf32>
    %c0_131 = arith.constant 0 : index
    %c0_132 = arith.constant 0 : index
    %c0_133 = arith.constant 0 : index
    %180 = vector.load %arg14[%c0_131, %c0_132, %c0_133] : memref<2x1x128xf32, #tpu.memory_space<vmem>>, vector<1x1x128xf32>
    %181 = vector.shape_cast %180 : vector<1x1x128xf32> to vector<1x128xf32>
    %182 = vector.broadcast %181 : vector<1x128xf32> to vector<4x128xf32>
    %183 = arith.addf %179, %182 : vector<4x128xf32>
    %cst_134 = arith.constant 5.000000e-01 : f32
    %184 = vector.broadcast %cst_134 : f32 to vector<4x128xf32>
    %185 = arith.mulf %184, %183 : vector<4x128xf32>
    %cst_135 = arith.constant 0.707106769 : f32
    %186 = vector.broadcast %cst_135 : f32 to vector<4x128xf32>
    %187 = arith.mulf %183, %186 : vector<4x128xf32>
    %188 = math.erf %187 : vector<4x128xf32>
    %cst_136 = arith.constant 1.000000e+00 : f32
    %189 = vector.broadcast %cst_136 : f32 to vector<4x128xf32>
    %190 = arith.addf %189, %188 : vector<4x128xf32>
    %191 = arith.mulf %185, %190 : vector<4x128xf32>
    %192 = arith.truncf %191 : vector<4x128xf32> to vector<4x128xbf16>
    %c0_137 = arith.constant 0 : index
    %c0_138 = arith.constant 0 : index
    %c0_139 = arith.constant 0 : index
    %193 = vector.load %arg15[%c0_137, %c0_138, %c0_139] : memref<2x128x32xbf16, #tpu.memory_space<vmem>>, vector<1x128x32xbf16>
    %194 = vector.shape_cast %193 : vector<1x128x32xbf16> to vector<128x32xbf16>
    %cst_140 = arith.constant dense<0.000000e+00> : vector<4x32xf32>
    %195 = tpu.matmul %192, %194, %cst_140 {dimension_numbers = #tpu.dot_dimension_numbers<[1], [0], [0], [1], [0, 0, 1, 1], [], []>} : vector<4x128xbf16>, vector<128x32xbf16>, vector<4x32xf32> -> vector<4x32xf32>
    %c0_141 = arith.constant 0 : index
    %c0_142 = arith.constant 0 : index
    %c0_143 = arith.constant 0 : index
    %196 = vector.load %arg16[%c0_141, %c0_142, %c0_143] : memref<2x1x32xf32, #tpu.memory_space<vmem>>, vector<1x1x32xf32>
    %197 = vector.shape_cast %196 : vector<1x1x32xf32> to vector<1x32xf32>
    %198 = vector.broadcast %197 : vector<1x32xf32> to vector<4x32xf32>
    %199 = arith.addf %195, %198 : vector<4x32xf32>
    %200 = arith.addf %175, %199 : vector<4x32xf32>
    %c0_144 = arith.constant 0 : index
    %c0_145 = arith.constant 0 : index
    %c0_146 = arith.constant 0 : index
    %201 = vector.load %arg17[%c0_144, %c0_145, %c0_146] : memref<2x1x32xf32, #tpu.memory_space<vmem>>, vector<1x1x32xf32>
    %202 = vector.shape_cast %201 : vector<1x1x32xf32> to vector<1x32xf32>
    %c0_147 = arith.constant 0 : index
    %c0_148 = arith.constant 0 : index
    %c0_149 = arith.constant 0 : index
    %203 = vector.load %arg18[%c0_147, %c0_148, %c0_149] : memref<2x1x32xf32, #tpu.memory_space<vmem>>, vector<1x1x32xf32>
    %204 = vector.shape_cast %203 : vector<1x1x32xf32> to vector<1x32xf32>
    %cst_150 = arith.constant dense<0.000000e+00> : vector<4xf32>
    %205 = vector.multi_reduction <add>, %200, %cst_150 [1] : vector<4x32xf32> to vector<4xf32>
    %206 = vector.shape_cast %205 : vector<4xf32> to vector<4x1xf32>
    %cst_151 = arith.constant 3.200000e+01 : f32
    %207 = vector.broadcast %cst_151 : f32 to vector<4x1xf32>
    %208 = arith.divf %206, %207 : vector<4x1xf32>
    %209 = vector.broadcast %208 : vector<4x1xf32> to vector<4x32xf32>
    %210 = arith.subf %200, %209 : vector<4x32xf32>
    %211 = arith.mulf %210, %210 : vector<4x32xf32>
    %cst_152 = arith.constant dense<0.000000e+00> : vector<4xf32>
    %212 = vector.multi_reduction <add>, %211, %cst_152 [1] : vector<4x32xf32> to vector<4xf32>
    %213 = vector.shape_cast %212 : vector<4xf32> to vector<4x1xf32>
    %cst_153 = arith.constant 3.200000e+01 : f32
    %214 = vector.broadcast %cst_153 : f32 to vector<4x1xf32>
    %215 = arith.divf %213, %214 : vector<4x1xf32>
    %216 = vector.broadcast %208 : vector<4x1xf32> to vector<4x32xf32>
    %217 = arith.subf %200, %216 : vector<4x32xf32>
    %cst_154 = arith.constant 9.99999974E-6 : f32
    %218 = vector.broadcast %cst_154 : f32 to vector<4x1xf32>
    %219 = arith.addf %215, %218 : vector<4x1xf32>
    %220 = math.rsqrt %219 : vector<4x1xf32>
    %221 = vector.broadcast %220 : vector<4x1xf32> to vector<4x32xf32>
    %222 = arith.mulf %217, %221 : vector<4x32xf32>
    %223 = vector.broadcast %202 : vector<1x32xf32> to vector<4x32xf32>
    %224 = arith.mulf %222, %223 : vector<4x32xf32>
    %225 = vector.broadcast %204 : vector<1x32xf32> to vector<4x32xf32>
    %226 = arith.addf %224, %225 : vector<4x32xf32>
    %227 = arith.truncf %226 : vector<4x32xf32> to vector<4x32xbf16>
    %c1_155 = arith.constant 1 : index
    %c0_156 = arith.constant 0 : index
    %c0_157 = arith.constant 0 : index
    %c0_158 = arith.constant 0 : index
    %228 = vector.load %arg5[%c1_155, %c0_156, %c0_157, %c0_158] : memref<2x4x32x8xbf16, #tpu.memory_space<vmem>>, vector<1x1x32x8xbf16>
    %229 = vector.shape_cast %228 : vector<1x1x32x8xbf16> to vector<32x8xbf16>
    %cst_159 = arith.constant dense<0.000000e+00> : vector<4x8xf32>
    %230 = tpu.matmul %227, %229, %cst_159 {dimension_numbers = #tpu.dot_dimension_numbers<[1], [0], [0], [1], [0, 0, 1, 1], [], []>} : vector<4x32xbf16>, vector<32x8xbf16>, vector<4x8xf32> -> vector<4x8xf32>
    %c1_160 = arith.constant 1 : index
    %c0_161 = arith.constant 0 : index
    %c0_162 = arith.constant 0 : index
    %c0_163 = arith.constant 0 : index
    %231 = vector.load %arg6[%c1_160, %c0_161, %c0_162, %c0_163] : memref<2x4x1x8xf32, #tpu.memory_space<vmem>>, vector<1x1x1x8xf32>
    %232 = vector.shape_cast %231 : vector<1x1x1x8xf32> to vector<1x8xf32>
    %233 = vector.broadcast %232 : vector<1x8xf32> to vector<4x8xf32>
    %234 = arith.addf %230, %233 : vector<4x8xf32>
    %c1_164 = arith.constant 1 : index
    %c0_165 = arith.constant 0 : index
    %c0_166 = arith.constant 0 : index
    %c0_167 = arith.constant 0 : index
    %235 = vector.load %arg7[%c1_164, %c0_165, %c0_166, %c0_167] : memref<2x4x32x8xbf16, #tpu.memory_space<vmem>>, vector<1x1x32x8xbf16>
    %236 = vector.shape_cast %235 : vector<1x1x32x8xbf16> to vector<32x8xbf16>
    %cst_168 = arith.constant dense<0.000000e+00> : vector<4x8xf32>
    %237 = tpu.matmul %227, %236, %cst_168 {dimension_numbers = #tpu.dot_dimension_numbers<[1], [0], [0], [1], [0, 0, 1, 1], [], []>} : vector<4x32xbf16>, vector<32x8xbf16>, vector<4x8xf32> -> vector<4x8xf32>
    %c1_169 = arith.constant 1 : index
    %c0_170 = arith.constant 0 : index
    %c0_171 = arith.constant 0 : index
    %c0_172 = arith.constant 0 : index
    %238 = vector.load %arg8[%c1_169, %c0_170, %c0_171, %c0_172] : memref<2x4x1x8xf32, #tpu.memory_space<vmem>>, vector<1x1x1x8xf32>
    %239 = vector.shape_cast %238 : vector<1x1x1x8xf32> to vector<1x8xf32>
    %240 = vector.broadcast %239 : vector<1x8xf32> to vector<4x8xf32>
    %241 = arith.addf %237, %240 : vector<4x8xf32>
    %242 = arith.truncf %234 : vector<4x8xf32> to vector<4x8xbf16>
    %243 = arith.truncf %241 : vector<4x8xf32> to vector<4x8xbf16>
    %cst_173 = arith.constant dense<0.000000e+00> : vector<4x4xf32>
    %244 = tpu.matmul %242, %243, %cst_173 {dimension_numbers = #tpu.dot_dimension_numbers<[1], [1], [0], [0], [0, 0, 1, 0], [], []>} : vector<4x8xbf16>, vector<4x8xbf16>, vector<4x4xf32> -> vector<4x4xf32>
    %cst_174 = arith.constant dense<0xFF800000> : vector<4xf32>
    %245 = vector.multi_reduction <maximumf>, %244, %cst_174 [1] : vector<4x4xf32> to vector<4xf32>
    %246 = vector.shape_cast %245 : vector<4xf32> to vector<4x1xf32>
    %247 = vector.broadcast %246 : vector<4x1xf32> to vector<4x4xf32>
    %248 = arith.subf %244, %247 : vector<4x4xf32>
    %249 = math.exp %248 : vector<4x4xf32>
    %cst_175 = arith.constant dense<0.000000e+00> : vector<4xf32>
    %250 = vector.multi_reduction <add>, %249, %cst_175 [1] : vector<4x4xf32> to vector<4xf32>
    %251 = vector.shape_cast %250 : vector<4xf32> to vector<4x1xf32>
    %252 = tpu.reciprocal %251 {approx = true} : vector<4x1xf32> -> vector<4x1xf32>
    %253 = vector.broadcast %252 : vector<4x1xf32> to vector<4x4xf32>
    %254 = arith.mulf %249, %253 : vector<4x4xf32>
    %c1_176 = arith.constant 1 : index
    %c0_177 = arith.constant 0 : index
    %c0_178 = arith.constant 0 : index
    %c0_179 = arith.constant 0 : index
    %255 = vector.load %arg9[%c1_176, %c0_177, %c0_178, %c0_179] : memref<2x4x32x32xbf16, #tpu.memory_space<vmem>>, vector<1x1x32x32xbf16>
    %256 = vector.shape_cast %255 : vector<1x1x32x32xbf16> to vector<32x32xbf16>
    %cst_180 = arith.constant dense<0.000000e+00> : vector<4x32xf32>
    %257 = tpu.matmul %227, %256, %cst_180 {dimension_numbers = #tpu.dot_dimension_numbers<[1], [0], [0], [1], [0, 0, 1, 1], [], []>} : vector<4x32xbf16>, vector<32x32xbf16>, vector<4x32xf32> -> vector<4x32xf32>
    %258 = arith.truncf %254 : vector<4x4xf32> to vector<4x4xbf16>
    %259 = arith.truncf %257 : vector<4x32xf32> to vector<4x32xbf16>
    %cst_181 = arith.constant dense<0.000000e+00> : vector<4x32xf32>
    %260 = tpu.matmul %258, %259, %cst_181 {dimension_numbers = #tpu.dot_dimension_numbers<[1], [0], [0], [1], [0, 0, 1, 1], [], []>} : vector<4x4xbf16>, vector<4x32xbf16>, vector<4x32xf32> -> vector<4x32xf32>
    %c1_182 = arith.constant 1 : index
    %c1_183 = arith.constant 1 : index
    %c0_184 = arith.constant 0 : index
    %c0_185 = arith.constant 0 : index
    %261 = vector.load %arg5[%c1_182, %c1_183, %c0_184, %c0_185] : memref<2x4x32x8xbf16, #tpu.memory_space<vmem>>, vector<1x1x32x8xbf16>
    %262 = vector.shape_cast %261 : vector<1x1x32x8xbf16> to vector<32x8xbf16>
    %cst_186 = arith.constant dense<0.000000e+00> : vector<4x8xf32>
    %263 = tpu.matmul %227, %262, %cst_186 {dimension_numbers = #tpu.dot_dimension_numbers<[1], [0], [0], [1], [0, 0, 1, 1], [], []>} : vector<4x32xbf16>, vector<32x8xbf16>, vector<4x8xf32> -> vector<4x8xf32>
    %c1_187 = arith.constant 1 : index
    %c1_188 = arith.constant 1 : index
    %c0_189 = arith.constant 0 : index
    %c0_190 = arith.constant 0 : index
    %264 = vector.load %arg6[%c1_187, %c1_188, %c0_189, %c0_190] : memref<2x4x1x8xf32, #tpu.memory_space<vmem>>, vector<1x1x1x8xf32>
    %265 = vector.shape_cast %264 : vector<1x1x1x8xf32> to vector<1x8xf32>
    %266 = vector.broadcast %265 : vector<1x8xf32> to vector<4x8xf32>
    %267 = arith.addf %263, %266 : vector<4x8xf32>
    %c1_191 = arith.constant 1 : index
    %c1_192 = arith.constant 1 : index
    %c0_193 = arith.constant 0 : index
    %c0_194 = arith.constant 0 : index
    %268 = vector.load %arg7[%c1_191, %c1_192, %c0_193, %c0_194] : memref<2x4x32x8xbf16, #tpu.memory_space<vmem>>, vector<1x1x32x8xbf16>
    %269 = vector.shape_cast %268 : vector<1x1x32x8xbf16> to vector<32x8xbf16>
    %cst_195 = arith.constant dense<0.000000e+00> : vector<4x8xf32>
    %270 = tpu.matmul %227, %269, %cst_195 {dimension_numbers = #tpu.dot_dimension_numbers<[1], [0], [0], [1], [0, 0, 1, 1], [], []>} : vector<4x32xbf16>, vector<32x8xbf16>, vector<4x8xf32> -> vector<4x8xf32>
    %c1_196 = arith.constant 1 : index
    %c1_197 = arith.constant 1 : index
    %c0_198 = arith.constant 0 : index
    %c0_199 = arith.constant 0 : index
    %271 = vector.load %arg8[%c1_196, %c1_197, %c0_198, %c0_199] : memref<2x4x1x8xf32, #tpu.memory_space<vmem>>, vector<1x1x1x8xf32>
    %272 = vector.shape_cast %271 : vector<1x1x1x8xf32> to vector<1x8xf32>
    %273 = vector.broadcast %272 : vector<1x8xf32> to vector<4x8xf32>
    %274 = arith.addf %270, %273 : vector<4x8xf32>
    %275 = arith.truncf %267 : vector<4x8xf32> to vector<4x8xbf16>
    %276 = arith.truncf %274 : vector<4x8xf32> to vector<4x8xbf16>
    %cst_200 = arith.constant dense<0.000000e+00> : vector<4x4xf32>
    %277 = tpu.matmul %275, %276, %cst_200 {dimension_numbers = #tpu.dot_dimension_numbers<[1], [1], [0], [0], [0, 0, 1, 0], [], []>} : vector<4x8xbf16>, vector<4x8xbf16>, vector<4x4xf32> -> vector<4x4xf32>
    %cst_201 = arith.constant dense<0xFF800000> : vector<4xf32>
    %278 = vector.multi_reduction <maximumf>, %277, %cst_201 [1] : vector<4x4xf32> to vector<4xf32>
    %279 = vector.shape_cast %278 : vector<4xf32> to vector<4x1xf32>
    %280 = vector.broadcast %279 : vector<4x1xf32> to vector<4x4xf32>
    %281 = arith.subf %277, %280 : vector<4x4xf32>
    %282 = math.exp %281 : vector<4x4xf32>
    %cst_202 = arith.constant dense<0.000000e+00> : vector<4xf32>
    %283 = vector.multi_reduction <add>, %282, %cst_202 [1] : vector<4x4xf32> to vector<4xf32>
    %284 = vector.shape_cast %283 : vector<4xf32> to vector<4x1xf32>
    %285 = tpu.reciprocal %284 {approx = true} : vector<4x1xf32> -> vector<4x1xf32>
    %286 = vector.broadcast %285 : vector<4x1xf32> to vector<4x4xf32>
    %287 = arith.mulf %282, %286 : vector<4x4xf32>
    %c1_203 = arith.constant 1 : index
    %c1_204 = arith.constant 1 : index
    %c0_205 = arith.constant 0 : index
    %c0_206 = arith.constant 0 : index
    %288 = vector.load %arg9[%c1_203, %c1_204, %c0_205, %c0_206] : memref<2x4x32x32xbf16, #tpu.memory_space<vmem>>, vector<1x1x32x32xbf16>
    %289 = vector.shape_cast %288 : vector<1x1x32x32xbf16> to vector<32x32xbf16>
    %cst_207 = arith.constant dense<0.000000e+00> : vector<4x32xf32>
    %290 = tpu.matmul %227, %289, %cst_207 {dimension_numbers = #tpu.dot_dimension_numbers<[1], [0], [0], [1], [0, 0, 1, 1], [], []>} : vector<4x32xbf16>, vector<32x32xbf16>, vector<4x32xf32> -> vector<4x32xf32>
    %291 = arith.truncf %287 : vector<4x4xf32> to vector<4x4xbf16>
    %292 = arith.truncf %290 : vector<4x32xf32> to vector<4x32xbf16>
    %cst_208 = arith.constant dense<0.000000e+00> : vector<4x32xf32>
    %293 = tpu.matmul %291, %292, %cst_208 {dimension_numbers = #tpu.dot_dimension_numbers<[1], [0], [0], [1], [0, 0, 1, 1], [], []>} : vector<4x4xbf16>, vector<4x32xbf16>, vector<4x32xf32> -> vector<4x32xf32>
    %294 = arith.addf %260, %293 : vector<4x32xf32>
    %c1_209 = arith.constant 1 : index
    %c2_210 = arith.constant 2 : index
    %c0_211 = arith.constant 0 : index
    %c0_212 = arith.constant 0 : index
    %295 = vector.load %arg5[%c1_209, %c2_210, %c0_211, %c0_212] : memref<2x4x32x8xbf16, #tpu.memory_space<vmem>>, vector<1x1x32x8xbf16>
    %296 = vector.shape_cast %295 : vector<1x1x32x8xbf16> to vector<32x8xbf16>
    %cst_213 = arith.constant dense<0.000000e+00> : vector<4x8xf32>
    %297 = tpu.matmul %227, %296, %cst_213 {dimension_numbers = #tpu.dot_dimension_numbers<[1], [0], [0], [1], [0, 0, 1, 1], [], []>} : vector<4x32xbf16>, vector<32x8xbf16>, vector<4x8xf32> -> vector<4x8xf32>
    %c1_214 = arith.constant 1 : index
    %c2_215 = arith.constant 2 : index
    %c0_216 = arith.constant 0 : index
    %c0_217 = arith.constant 0 : index
    %298 = vector.load %arg6[%c1_214, %c2_215, %c0_216, %c0_217] : memref<2x4x1x8xf32, #tpu.memory_space<vmem>>, vector<1x1x1x8xf32>
    %299 = vector.shape_cast %298 : vector<1x1x1x8xf32> to vector<1x8xf32>
    %300 = vector.broadcast %299 : vector<1x8xf32> to vector<4x8xf32>
    %301 = arith.addf %297, %300 : vector<4x8xf32>
    %c1_218 = arith.constant 1 : index
    %c2_219 = arith.constant 2 : index
    %c0_220 = arith.constant 0 : index
    %c0_221 = arith.constant 0 : index
    %302 = vector.load %arg7[%c1_218, %c2_219, %c0_220, %c0_221] : memref<2x4x32x8xbf16, #tpu.memory_space<vmem>>, vector<1x1x32x8xbf16>
    %303 = vector.shape_cast %302 : vector<1x1x32x8xbf16> to vector<32x8xbf16>
    %cst_222 = arith.constant dense<0.000000e+00> : vector<4x8xf32>
    %304 = tpu.matmul %227, %303, %cst_222 {dimension_numbers = #tpu.dot_dimension_numbers<[1], [0], [0], [1], [0, 0, 1, 1], [], []>} : vector<4x32xbf16>, vector<32x8xbf16>, vector<4x8xf32> -> vector<4x8xf32>
    %c1_223 = arith.constant 1 : index
    %c2_224 = arith.constant 2 : index
    %c0_225 = arith.constant 0 : index
    %c0_226 = arith.constant 0 : index
    %305 = vector.load %arg8[%c1_223, %c2_224, %c0_225, %c0_226] : memref<2x4x1x8xf32, #tpu.memory_space<vmem>>, vector<1x1x1x8xf32>
    %306 = vector.shape_cast %305 : vector<1x1x1x8xf32> to vector<1x8xf32>
    %307 = vector.broadcast %306 : vector<1x8xf32> to vector<4x8xf32>
    %308 = arith.addf %304, %307 : vector<4x8xf32>
    %309 = arith.truncf %301 : vector<4x8xf32> to vector<4x8xbf16>
    %310 = arith.truncf %308 : vector<4x8xf32> to vector<4x8xbf16>
    %cst_227 = arith.constant dense<0.000000e+00> : vector<4x4xf32>
    %311 = tpu.matmul %309, %310, %cst_227 {dimension_numbers = #tpu.dot_dimension_numbers<[1], [1], [0], [0], [0, 0, 1, 0], [], []>} : vector<4x8xbf16>, vector<4x8xbf16>, vector<4x4xf32> -> vector<4x4xf32>
    %cst_228 = arith.constant dense<0xFF800000> : vector<4xf32>
    %312 = vector.multi_reduction <maximumf>, %311, %cst_228 [1] : vector<4x4xf32> to vector<4xf32>
    %313 = vector.shape_cast %312 : vector<4xf32> to vector<4x1xf32>
    %314 = vector.broadcast %313 : vector<4x1xf32> to vector<4x4xf32>
    %315 = arith.subf %311, %314 : vector<4x4xf32>
    %316 = math.exp %315 : vector<4x4xf32>
    %cst_229 = arith.constant dense<0.000000e+00> : vector<4xf32>
    %317 = vector.multi_reduction <add>, %316, %cst_229 [1] : vector<4x4xf32> to vector<4xf32>
    %318 = vector.shape_cast %317 : vector<4xf32> to vector<4x1xf32>
    %319 = tpu.reciprocal %318 {approx = true} : vector<4x1xf32> -> vector<4x1xf32>
    %320 = vector.broadcast %319 : vector<4x1xf32> to vector<4x4xf32>
    %321 = arith.mulf %316, %320 : vector<4x4xf32>
    %c1_230 = arith.constant 1 : index
    %c2_231 = arith.constant 2 : index
    %c0_232 = arith.constant 0 : index
    %c0_233 = arith.constant 0 : index
    %322 = vector.load %arg9[%c1_230, %c2_231, %c0_232, %c0_233] : memref<2x4x32x32xbf16, #tpu.memory_space<vmem>>, vector<1x1x32x32xbf16>
    %323 = vector.shape_cast %322 : vector<1x1x32x32xbf16> to vector<32x32xbf16>
    %cst_234 = arith.constant dense<0.000000e+00> : vector<4x32xf32>
    %324 = tpu.matmul %227, %323, %cst_234 {dimension_numbers = #tpu.dot_dimension_numbers<[1], [0], [0], [1], [0, 0, 1, 1], [], []>} : vector<4x32xbf16>, vector<32x32xbf16>, vector<4x32xf32> -> vector<4x32xf32>
    %325 = arith.truncf %321 : vector<4x4xf32> to vector<4x4xbf16>
    %326 = arith.truncf %324 : vector<4x32xf32> to vector<4x32xbf16>
    %cst_235 = arith.constant dense<0.000000e+00> : vector<4x32xf32>
    %327 = tpu.matmul %325, %326, %cst_235 {dimension_numbers = #tpu.dot_dimension_numbers<[1], [0], [0], [1], [0, 0, 1, 1], [], []>} : vector<4x4xbf16>, vector<4x32xbf16>, vector<4x32xf32> -> vector<4x32xf32>
    %328 = arith.addf %294, %327 : vector<4x32xf32>
    %c1_236 = arith.constant 1 : index
    %c3_237 = arith.constant 3 : index
    %c0_238 = arith.constant 0 : index
    %c0_239 = arith.constant 0 : index
    %329 = vector.load %arg5[%c1_236, %c3_237, %c0_238, %c0_239] : memref<2x4x32x8xbf16, #tpu.memory_space<vmem>>, vector<1x1x32x8xbf16>
    %330 = vector.shape_cast %329 : vector<1x1x32x8xbf16> to vector<32x8xbf16>
    %cst_240 = arith.constant dense<0.000000e+00> : vector<4x8xf32>
    %331 = tpu.matmul %227, %330, %cst_240 {dimension_numbers = #tpu.dot_dimension_numbers<[1], [0], [0], [1], [0, 0, 1, 1], [], []>} : vector<4x32xbf16>, vector<32x8xbf16>, vector<4x8xf32> -> vector<4x8xf32>
    %c1_241 = arith.constant 1 : index
    %c3_242 = arith.constant 3 : index
    %c0_243 = arith.constant 0 : index
    %c0_244 = arith.constant 0 : index
    %332 = vector.load %arg6[%c1_241, %c3_242, %c0_243, %c0_244] : memref<2x4x1x8xf32, #tpu.memory_space<vmem>>, vector<1x1x1x8xf32>
    %333 = vector.shape_cast %332 : vector<1x1x1x8xf32> to vector<1x8xf32>
    %334 = vector.broadcast %333 : vector<1x8xf32> to vector<4x8xf32>
    %335 = arith.addf %331, %334 : vector<4x8xf32>
    %c1_245 = arith.constant 1 : index
    %c3_246 = arith.constant 3 : index
    %c0_247 = arith.constant 0 : index
    %c0_248 = arith.constant 0 : index
    %336 = vector.load %arg7[%c1_245, %c3_246, %c0_247, %c0_248] : memref<2x4x32x8xbf16, #tpu.memory_space<vmem>>, vector<1x1x32x8xbf16>
    %337 = vector.shape_cast %336 : vector<1x1x32x8xbf16> to vector<32x8xbf16>
    %cst_249 = arith.constant dense<0.000000e+00> : vector<4x8xf32>
    %338 = tpu.matmul %227, %337, %cst_249 {dimension_numbers = #tpu.dot_dimension_numbers<[1], [0], [0], [1], [0, 0, 1, 1], [], []>} : vector<4x32xbf16>, vector<32x8xbf16>, vector<4x8xf32> -> vector<4x8xf32>
    %c1_250 = arith.constant 1 : index
    %c3_251 = arith.constant 3 : index
    %c0_252 = arith.constant 0 : index
    %c0_253 = arith.constant 0 : index
    %339 = vector.load %arg8[%c1_250, %c3_251, %c0_252, %c0_253] : memref<2x4x1x8xf32, #tpu.memory_space<vmem>>, vector<1x1x1x8xf32>
    %340 = vector.shape_cast %339 : vector<1x1x1x8xf32> to vector<1x8xf32>
    %341 = vector.broadcast %340 : vector<1x8xf32> to vector<4x8xf32>
    %342 = arith.addf %338, %341 : vector<4x8xf32>
    %343 = arith.truncf %335 : vector<4x8xf32> to vector<4x8xbf16>
    %344 = arith.truncf %342 : vector<4x8xf32> to vector<4x8xbf16>
    %cst_254 = arith.constant dense<0.000000e+00> : vector<4x4xf32>
    %345 = tpu.matmul %343, %344, %cst_254 {dimension_numbers = #tpu.dot_dimension_numbers<[1], [1], [0], [0], [0, 0, 1, 0], [], []>} : vector<4x8xbf16>, vector<4x8xbf16>, vector<4x4xf32> -> vector<4x4xf32>
    %cst_255 = arith.constant dense<0xFF800000> : vector<4xf32>
    %346 = vector.multi_reduction <maximumf>, %345, %cst_255 [1] : vector<4x4xf32> to vector<4xf32>
    %347 = vector.shape_cast %346 : vector<4xf32> to vector<4x1xf32>
    %348 = vector.broadcast %347 : vector<4x1xf32> to vector<4x4xf32>
    %349 = arith.subf %345, %348 : vector<4x4xf32>
    %350 = math.exp %349 : vector<4x4xf32>
    %cst_256 = arith.constant dense<0.000000e+00> : vector<4xf32>
    %351 = vector.multi_reduction <add>, %350, %cst_256 [1] : vector<4x4xf32> to vector<4xf32>
    %352 = vector.shape_cast %351 : vector<4xf32> to vector<4x1xf32>
    %353 = tpu.reciprocal %352 {approx = true} : vector<4x1xf32> -> vector<4x1xf32>
    %354 = vector.broadcast %353 : vector<4x1xf32> to vector<4x4xf32>
    %355 = arith.mulf %350, %354 : vector<4x4xf32>
    %c1_257 = arith.constant 1 : index
    %c3_258 = arith.constant 3 : index
    %c0_259 = arith.constant 0 : index
    %c0_260 = arith.constant 0 : index
    %356 = vector.load %arg9[%c1_257, %c3_258, %c0_259, %c0_260] : memref<2x4x32x32xbf16, #tpu.memory_space<vmem>>, vector<1x1x32x32xbf16>
    %357 = vector.shape_cast %356 : vector<1x1x32x32xbf16> to vector<32x32xbf16>
    %cst_261 = arith.constant dense<0.000000e+00> : vector<4x32xf32>
    %358 = tpu.matmul %227, %357, %cst_261 {dimension_numbers = #tpu.dot_dimension_numbers<[1], [0], [0], [1], [0, 0, 1, 1], [], []>} : vector<4x32xbf16>, vector<32x32xbf16>, vector<4x32xf32> -> vector<4x32xf32>
    %359 = arith.truncf %355 : vector<4x4xf32> to vector<4x4xbf16>
    %360 = arith.truncf %358 : vector<4x32xf32> to vector<4x32xbf16>
    %cst_262 = arith.constant dense<0.000000e+00> : vector<4x32xf32>
    %361 = tpu.matmul %359, %360, %cst_262 {dimension_numbers = #tpu.dot_dimension_numbers<[1], [0], [0], [1], [0, 0, 1, 1], [], []>} : vector<4x4xbf16>, vector<4x32xbf16>, vector<4x32xf32> -> vector<4x32xf32>
    %362 = arith.addf %328, %361 : vector<4x32xf32>
    %363 = arith.addf %226, %362 : vector<4x32xf32>
    %c1_263 = arith.constant 1 : index
    %c0_264 = arith.constant 0 : index
    %c0_265 = arith.constant 0 : index
    %364 = vector.load %arg10[%c1_263, %c0_264, %c0_265] : memref<2x1x32xf32, #tpu.memory_space<vmem>>, vector<1x1x32xf32>
    %365 = vector.shape_cast %364 : vector<1x1x32xf32> to vector<1x32xf32>
    %366 = vector.broadcast %365 : vector<1x32xf32> to vector<4x32xf32>
    %367 = arith.addf %363, %366 : vector<4x32xf32>
    %c1_266 = arith.constant 1 : index
    %c0_267 = arith.constant 0 : index
    %c0_268 = arith.constant 0 : index
    %368 = vector.load %arg11[%c1_266, %c0_267, %c0_268] : memref<2x1x32xf32, #tpu.memory_space<vmem>>, vector<1x1x32xf32>
    %369 = vector.shape_cast %368 : vector<1x1x32xf32> to vector<1x32xf32>
    %c1_269 = arith.constant 1 : index
    %c0_270 = arith.constant 0 : index
    %c0_271 = arith.constant 0 : index
    %370 = vector.load %arg12[%c1_269, %c0_270, %c0_271] : memref<2x1x32xf32, #tpu.memory_space<vmem>>, vector<1x1x32xf32>
    %371 = vector.shape_cast %370 : vector<1x1x32xf32> to vector<1x32xf32>
    %cst_272 = arith.constant dense<0.000000e+00> : vector<4xf32>
    %372 = vector.multi_reduction <add>, %367, %cst_272 [1] : vector<4x32xf32> to vector<4xf32>
    %373 = vector.shape_cast %372 : vector<4xf32> to vector<4x1xf32>
    %cst_273 = arith.constant 3.200000e+01 : f32
    %374 = vector.broadcast %cst_273 : f32 to vector<4x1xf32>
    %375 = arith.divf %373, %374 : vector<4x1xf32>
    %376 = vector.broadcast %375 : vector<4x1xf32> to vector<4x32xf32>
    %377 = arith.subf %367, %376 : vector<4x32xf32>
    %378 = arith.mulf %377, %377 : vector<4x32xf32>
    %cst_274 = arith.constant dense<0.000000e+00> : vector<4xf32>
    %379 = vector.multi_reduction <add>, %378, %cst_274 [1] : vector<4x32xf32> to vector<4xf32>
    %380 = vector.shape_cast %379 : vector<4xf32> to vector<4x1xf32>
    %cst_275 = arith.constant 3.200000e+01 : f32
    %381 = vector.broadcast %cst_275 : f32 to vector<4x1xf32>
    %382 = arith.divf %380, %381 : vector<4x1xf32>
    %383 = vector.broadcast %375 : vector<4x1xf32> to vector<4x32xf32>
    %384 = arith.subf %367, %383 : vector<4x32xf32>
    %cst_276 = arith.constant 9.99999974E-6 : f32
    %385 = vector.broadcast %cst_276 : f32 to vector<4x1xf32>
    %386 = arith.addf %382, %385 : vector<4x1xf32>
    %387 = math.rsqrt %386 : vector<4x1xf32>
    %388 = vector.broadcast %387 : vector<4x1xf32> to vector<4x32xf32>
    %389 = arith.mulf %384, %388 : vector<4x32xf32>
    %390 = vector.broadcast %369 : vector<1x32xf32> to vector<4x32xf32>
    %391 = arith.mulf %389, %390 : vector<4x32xf32>
    %392 = vector.broadcast %371 : vector<1x32xf32> to vector<4x32xf32>
    %393 = arith.addf %391, %392 : vector<4x32xf32>
    %394 = arith.truncf %393 : vector<4x32xf32> to vector<4x32xbf16>
    %c1_277 = arith.constant 1 : index
    %c0_278 = arith.constant 0 : index
    %c0_279 = arith.constant 0 : index
    %395 = vector.load %arg13[%c1_277, %c0_278, %c0_279] : memref<2x32x128xbf16, #tpu.memory_space<vmem>>, vector<1x32x128xbf16>
    %396 = vector.shape_cast %395 : vector<1x32x128xbf16> to vector<32x128xbf16>
    %cst_280 = arith.constant dense<0.000000e+00> : vector<4x128xf32>
    %397 = tpu.matmul %394, %396, %cst_280 {dimension_numbers = #tpu.dot_dimension_numbers<[1], [0], [0], [1], [0, 0, 1, 1], [], []>} : vector<4x32xbf16>, vector<32x128xbf16>, vector<4x128xf32> -> vector<4x128xf32>
    %c1_281 = arith.constant 1 : index
    %c0_282 = arith.constant 0 : index
    %c0_283 = arith.constant 0 : index
    %398 = vector.load %arg14[%c1_281, %c0_282, %c0_283] : memref<2x1x128xf32, #tpu.memory_space<vmem>>, vector<1x1x128xf32>
    %399 = vector.shape_cast %398 : vector<1x1x128xf32> to vector<1x128xf32>
    %400 = vector.broadcast %399 : vector<1x128xf32> to vector<4x128xf32>
    %401 = arith.addf %397, %400 : vector<4x128xf32>
    %cst_284 = arith.constant 5.000000e-01 : f32
    %402 = vector.broadcast %cst_284 : f32 to vector<4x128xf32>
    %403 = arith.mulf %402, %401 : vector<4x128xf32>
    %cst_285 = arith.constant 0.707106769 : f32
    %404 = vector.broadcast %cst_285 : f32 to vector<4x128xf32>
    %405 = arith.mulf %401, %404 : vector<4x128xf32>
    %406 = math.erf %405 : vector<4x128xf32>
    %cst_286 = arith.constant 1.000000e+00 : f32
    %407 = vector.broadcast %cst_286 : f32 to vector<4x128xf32>
    %408 = arith.addf %407, %406 : vector<4x128xf32>
    %409 = arith.mulf %403, %408 : vector<4x128xf32>
    %410 = arith.truncf %409 : vector<4x128xf32> to vector<4x128xbf16>
    %c1_287 = arith.constant 1 : index
    %c0_288 = arith.constant 0 : index
    %c0_289 = arith.constant 0 : index
    %411 = vector.load %arg15[%c1_287, %c0_288, %c0_289] : memref<2x128x32xbf16, #tpu.memory_space<vmem>>, vector<1x128x32xbf16>
    %412 = vector.shape_cast %411 : vector<1x128x32xbf16> to vector<128x32xbf16>
    %cst_290 = arith.constant dense<0.000000e+00> : vector<4x32xf32>
    %413 = tpu.matmul %410, %412, %cst_290 {dimension_numbers = #tpu.dot_dimension_numbers<[1], [0], [0], [1], [0, 0, 1, 1], [], []>} : vector<4x128xbf16>, vector<128x32xbf16>, vector<4x32xf32> -> vector<4x32xf32>
    %c1_291 = arith.constant 1 : index
    %c0_292 = arith.constant 0 : index
    %c0_293 = arith.constant 0 : index
    %414 = vector.load %arg16[%c1_291, %c0_292, %c0_293] : memref<2x1x32xf32, #tpu.memory_space<vmem>>, vector<1x1x32xf32>
    %415 = vector.shape_cast %414 : vector<1x1x32xf32> to vector<1x32xf32>
    %416 = vector.broadcast %415 : vector<1x32xf32> to vector<4x32xf32>
    %417 = arith.addf %413, %416 : vector<4x32xf32>
    %418 = arith.addf %393, %417 : vector<4x32xf32>
    %c1_294 = arith.constant 1 : index
    %c0_295 = arith.constant 0 : index
    %c0_296 = arith.constant 0 : index
    %419 = vector.load %arg17[%c1_294, %c0_295, %c0_296] : memref<2x1x32xf32, #tpu.memory_space<vmem>>, vector<1x1x32xf32>
    %420 = vector.shape_cast %419 : vector<1x1x32xf32> to vector<1x32xf32>
    %c1_297 = arith.constant 1 : index
    %c0_298 = arith.constant 0 : index
    %c0_299 = arith.constant 0 : index
    %421 = vector.load %arg18[%c1_297, %c0_298, %c0_299] : memref<2x1x32xf32, #tpu.memory_space<vmem>>, vector<1x1x32xf32>
    %422 = vector.shape_cast %421 : vector<1x1x32xf32> to vector<1x32xf32>
    %cst_300 = arith.constant dense<0.000000e+00> : vector<4xf32>
    %423 = vector.multi_reduction <add>, %418, %cst_300 [1] : vector<4x32xf32> to vector<4xf32>
    %424 = vector.shape_cast %423 : vector<4xf32> to vector<4x1xf32>
    %cst_301 = arith.constant 3.200000e+01 : f32
    %425 = vector.broadcast %cst_301 : f32 to vector<4x1xf32>
    %426 = arith.divf %424, %425 : vector<4x1xf32>
    %427 = vector.broadcast %426 : vector<4x1xf32> to vector<4x32xf32>
    %428 = arith.subf %418, %427 : vector<4x32xf32>
    %429 = arith.mulf %428, %428 : vector<4x32xf32>
    %cst_302 = arith.constant dense<0.000000e+00> : vector<4xf32>
    %430 = vector.multi_reduction <add>, %429, %cst_302 [1] : vector<4x32xf32> to vector<4xf32>
    %431 = vector.shape_cast %430 : vector<4xf32> to vector<4x1xf32>
    %cst_303 = arith.constant 3.200000e+01 : f32
    %432 = vector.broadcast %cst_303 : f32 to vector<4x1xf32>
    %433 = arith.divf %431, %432 : vector<4x1xf32>
    %434 = vector.broadcast %426 : vector<4x1xf32> to vector<4x32xf32>
    %435 = arith.subf %418, %434 : vector<4x32xf32>
    %cst_304 = arith.constant 9.99999974E-6 : f32
    %436 = vector.broadcast %cst_304 : f32 to vector<4x1xf32>
    %437 = arith.addf %433, %436 : vector<4x1xf32>
    %438 = math.rsqrt %437 : vector<4x1xf32>
    %439 = vector.broadcast %438 : vector<4x1xf32> to vector<4x32xf32>
    %440 = arith.mulf %435, %439 : vector<4x32xf32>
    %441 = vector.broadcast %420 : vector<1x32xf32> to vector<4x32xf32>
    %442 = arith.mulf %440, %441 : vector<4x32xf32>
    %443 = vector.broadcast %422 : vector<1x32xf32> to vector<4x32xf32>
    %444 = arith.addf %442, %443 : vector<4x32xf32>
    %cst_305 = arith.constant dense<0.000000e+00> : vector<32xf32>
    %445 = vector.multi_reduction <add>, %444, %cst_305 [0] : vector<4x32xf32> to vector<32xf32>
    %446 = vector.shape_cast %445 : vector<32xf32> to vector<1x32xf32>
    %cst_306 = arith.constant 2.500000e-01 : f32
    %447 = vector.broadcast %cst_306 : f32 to vector<1x32xf32>
    %448 = arith.mulf %446, %447 : vector<1x32xf32>
    %c0_307 = arith.constant 0 : index
    %c0_308 = arith.constant 0 : index
    %449 = vector.load %arg19[%c0_307, %c0_308] : memref<1x32xf32, #tpu.memory_space<vmem>>, vector<1x32xf32>
    %c0_309 = arith.constant 0 : index
    %c0_310 = arith.constant 0 : index
    %450 = vector.load %arg20[%c0_309, %c0_310] : memref<1x32xf32, #tpu.memory_space<vmem>>, vector<1x32xf32>
    %cst_311 = arith.constant dense<0.000000e+00> : vector<1xf32>
    %451 = vector.multi_reduction <add>, %448, %cst_311 [1] : vector<1x32xf32> to vector<1xf32>
    %452 = vector.shape_cast %451 : vector<1xf32> to vector<1x1xf32>
    %cst_312 = arith.constant 3.200000e+01 : f32
    %453 = vector.broadcast %cst_312 : f32 to vector<1x1xf32>
    %454 = arith.divf %452, %453 : vector<1x1xf32>
    %455 = vector.broadcast %454 : vector<1x1xf32> to vector<1x32xf32>
    %456 = arith.subf %448, %455 : vector<1x32xf32>
    %457 = arith.mulf %456, %456 : vector<1x32xf32>
    %cst_313 = arith.constant dense<0.000000e+00> : vector<1xf32>
    %458 = vector.multi_reduction <add>, %457, %cst_313 [1] : vector<1x32xf32> to vector<1xf32>
    %459 = vector.shape_cast %458 : vector<1xf32> to vector<1x1xf32>
    %cst_314 = arith.constant 3.200000e+01 : f32
    %460 = vector.broadcast %cst_314 : f32 to vector<1x1xf32>
    %461 = arith.divf %459, %460 : vector<1x1xf32>
    %462 = vector.broadcast %454 : vector<1x1xf32> to vector<1x32xf32>
    %463 = arith.subf %448, %462 : vector<1x32xf32>
    %cst_315 = arith.constant 9.99999974E-6 : f32
    %464 = vector.broadcast %cst_315 : f32 to vector<1x1xf32>
    %465 = arith.addf %461, %464 : vector<1x1xf32>
    %466 = math.rsqrt %465 : vector<1x1xf32>
    %467 = vector.broadcast %466 : vector<1x1xf32> to vector<1x32xf32>
    %468 = arith.mulf %463, %467 : vector<1x32xf32>
    %469 = arith.mulf %468, %449 : vector<1x32xf32>
    %470 = arith.addf %469, %450 : vector<1x32xf32>
    %471 = arith.truncf %470 : vector<1x32xf32> to vector<1x32xbf16>
    %c0_316 = arith.constant 0 : index
    %c0_317 = arith.constant 0 : index
    %472 = vector.load %arg21[%c0_316, %c0_317] : memref<32x32xbf16, #tpu.memory_space<vmem>>, vector<32x32xbf16>
    %cst_318 = arith.constant dense<0.000000e+00> : vector<1x32xf32>
    %473 = tpu.matmul %471, %472, %cst_318 {dimension_numbers = #tpu.dot_dimension_numbers<[1], [0], [0], [1], [0, 0, 1, 1], [], []>} : vector<1x32xbf16>, vector<32x32xbf16>, vector<1x32xf32> -> vector<1x32xf32>
    %c0_319 = arith.constant 0 : index
    %c0_320 = arith.constant 0 : index
    %474 = vector.load %arg22[%c0_319, %c0_320] : memref<1x32xf32, #tpu.memory_space<vmem>>, vector<1x32xf32>
    %475 = arith.addf %473, %474 : vector<1x32xf32>
    %cst_321 = arith.constant 5.000000e-01 : f32
    %476 = vector.broadcast %cst_321 : f32 to vector<1x32xf32>
    %477 = arith.mulf %476, %475 : vector<1x32xf32>
    %cst_322 = arith.constant 0.707106769 : f32
    %478 = vector.broadcast %cst_322 : f32 to vector<1x32xf32>
    %479 = arith.mulf %475, %478 : vector<1x32xf32>
    %480 = math.erf %479 : vector<1x32xf32>
    %cst_323 = arith.constant 1.000000e+00 : f32
    %481 = vector.broadcast %cst_323 : f32 to vector<1x32xf32>
    %482 = arith.addf %481, %480 : vector<1x32xf32>
    %483 = arith.mulf %477, %482 : vector<1x32xf32>
    %484 = arith.truncf %483 : vector<1x32xf32> to vector<1x32xbf16>
    %c0_324 = arith.constant 0 : index
    %c0_325 = arith.constant 0 : index
    %485 = vector.load %arg23[%c0_324, %c0_325] : memref<32x128xbf16, #tpu.memory_space<vmem>>, vector<32x128xbf16>
    %cst_326 = arith.constant dense<0.000000e+00> : vector<1x128xf32>
    %486 = tpu.matmul %484, %485, %cst_326 {dimension_numbers = #tpu.dot_dimension_numbers<[1], [0], [0], [1], [0, 0, 1, 1], [], []>} : vector<1x32xbf16>, vector<32x128xbf16>, vector<1x128xf32> -> vector<1x128xf32>
    %c0_327 = arith.constant 0 : index
    %c0_328 = arith.constant 0 : index
    %487 = vector.load %arg24[%c0_327, %c0_328] : memref<1x128xf32, #tpu.memory_space<vmem>>, vector<1x128xf32>
    %488 = arith.addf %486, %487 : vector<1x128xf32>
    %c0_329 = arith.constant 0 : index
    %c0_330 = arith.constant 0 : index
    %c0_331 = arith.constant 0 : index
    %489 = vector.load %arg25[%c0_329, %c0_330, %c0_331] : memref<1x1x128xf32, #tpu.memory_space<vmem>>, vector<1x1x128xf32>
    %490 = vector.shape_cast %489 : vector<1x1x128xf32> to vector<1x128xf32>
    %491 = vector.shape_cast %488 : vector<1x128xf32> to vector<1x1x128xf32>
    tpu.vector_store %arg25[%c0_329, %c0_330, %c0_331], %491 {strides = array<i32>} : memref<1x1x128xf32, #tpu.memory_space<vmem>>, vector<1x1x128xf32>,
    return
  }
  func.func @transform_0(%arg0: i32) -> (i32, i32, i32) {
    %c0_i32 = arith.constant 0 : i32
    %c0_i32_0 = arith.constant 0 : i32
    %c0_i32_1 = arith.constant 0 : i32
    return %arg0, %c0_i32, %c0_i32_0 : i32, i32, i32
  }
  func.func @transform_1(%arg0: i32) -> (i32, i32) {
    %c0_i32 = arith.constant 0 : i32
    %c0_i32_0 = arith.constant 0 : i32
    %c0_i32_1 = arith.constant 0 : i32
    return %c0_i32, %c0_i32_0 : i32, i32
  }
  func.func @transform_2(%arg0: i32) -> (i32, i32) {
    %c0_i32 = arith.constant 0 : i32
    %c0_i32_0 = arith.constant 0 : i32
    %c0_i32_1 = arith.constant 0 : i32
    return %c0_i32, %c0_i32_0 : i32, i32
  }
  func.func @transform_3(%arg0: i32) -> (i32, i32) {
    %c0_i32 = arith.constant 0 : i32
    %c0_i32_0 = arith.constant 0 : i32
    %c0_i32_1 = arith.constant 0 : i32
    return %c0_i32, %c0_i32_0 : i32, i32
  }
  func.func @transform_4(%arg0: i32) -> (i32, i32, i32, i32) {
    %c0_i32 = arith.constant 0 : i32
    %c0_i32_0 = arith.constant 0 : i32
    %c0_i32_1 = arith.constant 0 : i32
    %c0_i32_2 = arith.constant 0 : i32
    %c0_i32_3 = arith.constant 0 : i32
    return %c0_i32, %c0_i32_0, %c0_i32_1, %c0_i32_2 : i32, i32, i32, i32
  }
  func.func @transform_5(%arg0: i32) -> (i32, i32, i32, i32) {
    %c0_i32 = arith.constant 0 : i32
    %c0_i32_0 = arith.constant 0 : i32
    %c0_i32_1 = arith.constant 0 : i32
    %c0_i32_2 = arith.constant 0 : i32
    %c0_i32_3 = arith.constant 0 : i32
    return %c0_i32, %c0_i32_0, %c0_i32_1, %c0_i32_2 : i32, i32, i32, i32
  }
  func.func @transform_6(%arg0: i32) -> (i32, i32, i32, i32) {
    %c0_i32 = arith.constant 0 : i32
    %c0_i32_0 = arith.constant 0 : i32
    %c0_i32_1 = arith.constant 0 : i32
    %c0_i32_2 = arith.constant 0 : i32
    %c0_i32_3 = arith.constant 0 : i32
    return %c0_i32, %c0_i32_0, %c0_i32_1, %c0_i32_2 : i32, i32, i32, i32
  }
  func.func @transform_7(%arg0: i32) -> (i32, i32, i32, i32) {
    %c0_i32 = arith.constant 0 : i32
    %c0_i32_0 = arith.constant 0 : i32
    %c0_i32_1 = arith.constant 0 : i32
    %c0_i32_2 = arith.constant 0 : i32
    %c0_i32_3 = arith.constant 0 : i32
    return %c0_i32, %c0_i32_0, %c0_i32_1, %c0_i32_2 : i32, i32, i32, i32
  }
  func.func @transform_8(%arg0: i32) -> (i32, i32, i32, i32) {
    %c0_i32 = arith.constant 0 : i32
    %c0_i32_0 = arith.constant 0 : i32
    %c0_i32_1 = arith.constant 0 : i32
    %c0_i32_2 = arith.constant 0 : i32
    %c0_i32_3 = arith.constant 0 : i32
    return %c0_i32, %c0_i32_0, %c0_i32_1, %c0_i32_2 : i32, i32, i32, i32
  }
  func.func @transform_9(%arg0: i32) -> (i32, i32, i32) {
    %c0_i32 = arith.constant 0 : i32
    %c0_i32_0 = arith.constant 0 : i32
    %c0_i32_1 = arith.constant 0 : i32
    %c0_i32_2 = arith.constant 0 : i32
    return %c0_i32, %c0_i32_0, %c0_i32_1 : i32, i32, i32
  }
  func.func @transform_10(%arg0: i32) -> (i32, i32, i32) {
    %c0_i32 = arith.constant 0 : i32
    %c0_i32_0 = arith.constant 0 : i32
    %c0_i32_1 = arith.constant 0 : i32
    %c0_i32_2 = arith.constant 0 : i32
    return %c0_i32, %c0_i32_0, %c0_i32_1 : i32, i32, i32
  }
  func.func @transform_11(%arg0: i32) -> (i32, i32, i32) {
    %c0_i32 = arith.constant 0 : i32
    %c0_i32_0 = arith.constant 0 : i32
    %c0_i32_1 = arith.constant 0 : i32
    %c0_i32_2 = arith.constant 0 : i32
    return %c0_i32, %c0_i32_0, %c0_i32_1 : i32, i32, i32
  }
  func.func @transform_12(%arg0: i32) -> (i32, i32, i32) {
    %c0_i32 = arith.constant 0 : i32
    %c0_i32_0 = arith.constant 0 : i32
    %c0_i32_1 = arith.constant 0 : i32
    %c0_i32_2 = arith.constant 0 : i32
    return %c0_i32, %c0_i32_0, %c0_i32_1 : i32, i32, i32
  }
  func.func @transform_13(%arg0: i32) -> (i32, i32, i32) {
    %c0_i32 = arith.constant 0 : i32
    %c0_i32_0 = arith.constant 0 : i32
    %c0_i32_1 = arith.constant 0 : i32
    %c0_i32_2 = arith.constant 0 : i32
    return %c0_i32, %c0_i32_0, %c0_i32_1 : i32, i32, i32
  }
  func.func @transform_14(%arg0: i32) -> (i32, i32, i32) {
    %c0_i32 = arith.constant 0 : i32
    %c0_i32_0 = arith.constant 0 : i32
    %c0_i32_1 = arith.constant 0 : i32
    %c0_i32_2 = arith.constant 0 : i32
    return %c0_i32, %c0_i32_0, %c0_i32_1 : i32, i32, i32
  }
  func.func @transform_15(%arg0: i32) -> (i32, i32, i32) {
    %c0_i32 = arith.constant 0 : i32
    %c0_i32_0 = arith.constant 0 : i32
    %c0_i32_1 = arith.constant 0 : i32
    %c0_i32_2 = arith.constant 0 : i32
    return %c0_i32, %c0_i32_0, %c0_i32_1 : i32, i32, i32
  }
  func.func @transform_16(%arg0: i32) -> (i32, i32, i32) {
    %c0_i32 = arith.constant 0 : i32
    %c0_i32_0 = arith.constant 0 : i32
    %c0_i32_1 = arith.constant 0 : i32
    %c0_i32_2 = arith.constant 0 : i32
    return %c0_i32, %c0_i32_0, %c0_i32_1 : i32, i32, i32
  }
  func.func @transform_17(%arg0: i32) -> (i32, i32, i32) {
    %c0_i32 = arith.constant 0 : i32
    %c0_i32_0 = arith.constant 0 : i32
    %c0_i32_1 = arith.constant 0 : i32
    %c0_i32_2 = arith.constant 0 : i32
    return %c0_i32, %c0_i32_0, %c0_i32_1 : i32, i32, i32
  }
  func.func @transform_18(%arg0: i32) -> (i32, i32) {
    %c0_i32 = arith.constant 0 : i32
    %c0_i32_0 = arith.constant 0 : i32
    %c0_i32_1 = arith.constant 0 : i32
    return %c0_i32, %c0_i32_0 : i32, i32
  }
  func.func @transform_19(%arg0: i32) -> (i32, i32) {
    %c0_i32 = arith.constant 0 : i32
    %c0_i32_0 = arith.constant 0 : i32
    %c0_i32_1 = arith.constant 0 : i32
    return %c0_i32, %c0_i32_0 : i32, i32
  }
  func.func @transform_20(%arg0: i32) -> (i32, i32) {
    %c0_i32 = arith.constant 0 : i32
    %c0_i32_0 = arith.constant 0 : i32
    %c0_i32_1 = arith.constant 0 : i32
    return %c0_i32, %c0_i32_0 : i32, i32
  }
  func.func @transform_21(%arg0: i32) -> (i32, i32) {
    %c0_i32 = arith.constant 0 : i32
    %c0_i32_0 = arith.constant 0 : i32
    %c0_i32_1 = arith.constant 0 : i32
    return %c0_i32, %c0_i32_0 : i32, i32
  }
  func.func @transform_22(%arg0: i32) -> (i32, i32) {
    %c0_i32 = arith.constant 0 : i32
    %c0_i32_0 = arith.constant 0 : i32
    %c0_i32_1 = arith.constant 0 : i32
    return %c0_i32, %c0_i32_0 : i32, i32
  }
  func.func @transform_23(%arg0: i32) -> (i32, i32) {
    %c0_i32 = arith.constant 0 : i32
    %c0_i32_0 = arith.constant 0 : i32
    %c0_i32_1 = arith.constant 0 : i32
    return %c0_i32, %c0_i32_0 : i32, i32
  }
  func.func @transform_24(%arg0: i32) -> (i32, i32, i32) {
    %c0_i32 = arith.constant 0 : i32
    %c0_i32_0 = arith.constant 0 : i32
    %c0_i32_1 = arith.constant 0 : i32
    return %arg0, %c0_i32, %c0_i32_0 : i32, i32, i32
  }
}

</mosaic_0001>

<llo_original>
// kernel: tpu_custom_call.1
$region0: #{tpu_custom_call.1}
  #allocation0 [shape = 'u32[]', space=smem, size = 0x4, offset = 0x4, fixed_abs, tag = 'smem constant byte address 0x4 - core index']
  #allocation1 [shape = 'u32[72,128]{1,0:T(1,128)}', space=vmem, size = 0x9000, scoped, tag = 'internal scratch']
  %s0 = inlined_call_operand.vmem [shape: bf16[2,4,4], index: 0, kind: input, shape index: {}]
  %s1 = inlined_call_operand.vmem [shape: f32[4,32], index: 1, kind: input, shape index: {}]
  %s2 = inlined_call_operand.vmem [shape: bf16[4,32], index: 2, kind: input, shape index: {}]
  %s3 = inlined_call_operand.vmem [shape: f32[1,32], index: 3, kind: input, shape index: {}]
  %s4 = inlined_call_operand.vmem [shape: bf16[2,4,32,8], index: 4, kind: input, shape index: {}]
  %s5 = inlined_call_operand.vmem [shape: f32[2,4,1,8], index: 5, kind: input, shape index: {}]
  %s6 = inlined_call_operand.vmem [shape: bf16[2,4,32,8], index: 6, kind: input, shape index: {}]
  %s7 = inlined_call_operand.vmem [shape: f32[2,4,1,8], index: 7, kind: input, shape index: {}]
  %s8 = inlined_call_operand.vmem [shape: bf16[2,4,32,32], index: 8, kind: input, shape index: {}]
  %s9 = inlined_call_operand.vmem [shape: f32[2,1,32], index: 9, kind: input, shape index: {}]
  %s10 = inlined_call_operand.vmem [shape: f32[2,1,32], index: 10, kind: input, shape index: {}]
  %s11 = inlined_call_operand.vmem [shape: f32[2,1,32], index: 11, kind: input, shape index: {}]
  %s12 = inlined_call_operand.vmem [shape: bf16[2,32,128], index: 12, kind: input, shape index: {}]
  %s13 = inlined_call_operand.vmem [shape: f32[2,1,128], index: 13, kind: input, shape index: {}]
  %s14 = inlined_call_operand.vmem [shape: bf16[2,128,32], index: 14, kind: input, shape index: {}]
  %s15 = inlined_call_operand.vmem [shape: f32[2,1,32], index: 15, kind: input, shape index: {}]
  %s16 = inlined_call_operand.vmem [shape: f32[2,1,32], index: 16, kind: input, shape index: {}]
  %s17 = inlined_call_operand.vmem [shape: f32[2,1,32], index: 17, kind: input, shape index: {}]
  %s18 = inlined_call_operand.vmem [shape: f32[1,32], index: 18, kind: input, shape index: {}]
  %s19 = inlined_call_operand.vmem [shape: f32[1,32], index: 19, kind: input, shape index: {}]
  %s20 = inlined_call_operand.vmem [shape: bf16[32,32], index: 20, kind: input, shape index: {}]
  %s21 = inlined_call_operand.vmem [shape: f32[1,32], index: 21, kind: input, shape index: {}]
  %s22 = inlined_call_operand.vmem [shape: bf16[32,128], index: 22, kind: input, shape index: {}]
  %s23 = inlined_call_operand.vmem [shape: f32[1,128], index: 23, kind: input, shape index: {}]
  %s24 = inlined_call_operand.hbm [shape: f32[2,1,128], index: 24, kind: output, shape index: {}]
  %s25 = sld [smem:[#allocation0]]
  $region129: #{tpu_custom_call.1} parent=0
    _
  %s27 = ssub.s32 1, %s25
  %s28 = scalar_select 0, %s27, %s25
  $region1: #{tpu_custom_call.1} parent=0
    #allocation2 [shape = 'u8[1024]{0}', space=vmem, size = 0x400, scoped, tag = 'output window, operand 0']
    #allocation3 [shape = 's32[2]{0}', space=sflag, size = 0x8, scoped, tag = 'scoped memory for tpu_custom_call.1']
    %29 = vsyncpa [#allocation3], 0
    %s30 = scalar_lea.sflag [#allocation3], 1
    %31 = vsyncpa %s30, 0
    loop: start=0, step=1, limit=4
    $region2: #{tpu_custom_call.1} parent=1 // loop_pre_header
      _
    $region3: #{tpu_custom_call.1} parent=1 // loop_header
      %s33 = sphi 0, %s37
      %p34 = scmp.ge.s32.totalorder %s33, 4
      %s43 = sphi 0, %s45
      %s46 = sphi 0, %s43
      %s47 = sphi 0, %s46
      %s63 = sphi 0, %s47
      %s67 = sphi 0, %s67
      %s69 = sphi 0, %s67
      %s70 = sphi 0, %s69
      %s84 = sphi 0, %s70
      %s88 = sphi 0, %s88
      %s90 = sphi 0, %s88
      %s91 = sphi 0, %s90
      %s105 = sphi 0, %s91
      %s109 = sphi 0, %s109
      %s111 = sphi 0, %s109
      %s112 = sphi 0, %s111
      %s126 = sphi 0, %s112
      %s130 = sphi 0, %s130
      %s132 = sphi 0, %s130
      %s133 = sphi 0, %s132
      %s147 = sphi 0, %s133
      %s151 = sphi 0, %s151
      %s153 = sphi 0, %s151
      %s154 = sphi 0, %s153
      %s168 = sphi 0, %s154
      %s172 = sphi 0, %s172
      %s174 = sphi 0, %s172
      %s175 = sphi 0, %s174
      %s189 = sphi 0, %s175
      %s193 = sphi 0, %s193
      %s195 = sphi 0, %s193
      %s196 = sphi 0, %s195
      %s210 = sphi 0, %s196
      %s214 = sphi 0, %s214
      %s216 = sphi 0, %s214
      %s217 = sphi 0, %s216
      %s231 = sphi 0, %s217
      %s235 = sphi 0, %s235
      %s237 = sphi 0, %s235
      %s238 = sphi 0, %s237
      %s252 = sphi 0, %s238
      %s256 = sphi 0, %s256
      %s258 = sphi 0, %s256
      %s259 = sphi 0, %s258
      %s273 = sphi 0, %s259
      %s277 = sphi 0, %s277
      %s279 = sphi 0, %s277
      %s280 = sphi 0, %s279
      %s294 = sphi 0, %s280
      %s298 = sphi 0, %s298
      %s300 = sphi 0, %s298
      %s301 = sphi 0, %s300
      %s315 = sphi 0, %s301
      %s319 = sphi 0, %s319
      %s321 = sphi 0, %s319
      %s322 = sphi 0, %s321
      %s336 = sphi 0, %s322
      %s340 = sphi 0, %s340
      %s342 = sphi 0, %s340
      %s343 = sphi 0, %s342
      %s357 = sphi 0, %s343
      %s361 = sphi 0, %s361
      %s363 = sphi 0, %s361
      %s364 = sphi 0, %s363
      %s378 = sphi 0, %s364
      %s382 = sphi 0, %s382
      %s384 = sphi 0, %s382
      %s385 = sphi 0, %s384
      %s399 = sphi 0, %s385
      %s403 = sphi 0, %s403
      %s405 = sphi 0, %s403
      %s406 = sphi 0, %s405
      %s420 = sphi 0, %s406
      %s424 = sphi 0, %s424
      %s426 = sphi 0, %s424
      %s427 = sphi 0, %s426
      %s441 = sphi 0, %s427
      %s445 = sphi 0, %s445
      %s447 = sphi 0, %s445
      %s448 = sphi 0, %s447
      %s462 = sphi 0, %s448
      %s466 = sphi 0, %s466
      %s468 = sphi 0, %s466
      %s469 = sphi 0, %s468
      %s483 = sphi 0, %s469
      %s487 = sphi 0, %s487
      %s489 = sphi 0, %s487
      %s490 = sphi 0, %s489
      %s504 = sphi 0, %s490
      %s508 = sphi 0, %s508
      %s510 = sphi 0, %s508
      %s511 = sphi 0, %s510
      %s525 = sphi 0, %s511
      %s529 = sphi 0, %s529
      %s531 = sphi 0, %s529
      %s532 = sphi 0, %s531
      %s546 = sphi 0, %s532
      %s552 = sphi 0, %s554
      %s555 = sphi 0, %s552
      %s556 = sphi 0, %s555
      %s572 = sphi 0, %s556
    $region4: #{tpu_custom_call.1} parent=1 // loop_header_branch
      %36 = sbr.rel (%p34) target = $region8
    $region5: #{tpu_custom_call.1} parent=1 // loop_body
      %s38 = ssub.s32 %s33, 1
      %s39 = ssub.s32 %s33, 2
      %s40 = sadd.s32 %s33, 1
      %s41 = ssub.s32 %s33, %s40
      %p42 = scmp.eq.s32.totalorder %s41, 0
      %s44 = sadd.s32 %s43, 1
      %s45 = scalar_select %p42, %s43, %s44
      %p48 = pneg %p42
      %p49 = scmp.eq.s32.totalorder %s33, 1
      %p50 = por %p48, %p49
      %p51 = scmp.ne.s32.totalorder %s43, %s46
      %p52 = scmp.eq.s32.totalorder %s33, 0
      %p53 = por %p51, %p52
      %p54 = scmp.ne.s32.totalorder %s43, %s46
      %p55 = scmp.eq.s32.totalorder %s38, 1
      %p56 = por %p54, %p55
      %p57 = scmp.ne.s32.totalorder %s46, %s47
      %p58 = scmp.eq.s32.totalorder %s38, 0
      %p59 = por %p57, %p58
      %p60 = scmp.ne.s32.totalorder %s46, %s47
      %p61 = scmp.eq.s32.totalorder %s39, 1
      %p62 = por %p60, %p61
      %p64 = scmp.ne.s32.totalorder %s47, %s63
      %p65 = scmp.eq.s32.totalorder %s39, 0
      %p66 = por %p64, %p65
      %s68 = sadd.s32 %s67, 1
      %p71 = scmp.eq.s32.totalorder %s33, 1
      %p72 = scmp.ne.s32.totalorder %s67, %s69
      %p73 = scmp.eq.s32.totalorder %s33, 0
      %p74 = por %p72, %p73
      %p75 = scmp.ne.s32.totalorder %s67, %s69
      %p76 = scmp.eq.s32.totalorder %s38, 1
      %p77 = por %p75, %p76
      %p78 = scmp.ne.s32.totalorder %s69, %s70
      %p79 = scmp.eq.s32.totalorder %s38, 0
      %p80 = por %p78, %p79
      %p81 = scmp.ne.s32.totalorder %s69, %s70
      %p82 = scmp.eq.s32.totalorder %s39, 1
      %p83 = por %p81, %p82
      %p85 = scmp.ne.s32.totalorder %s70, %s84
      %p86 = scmp.eq.s32.totalorder %s39, 0
      %p87 = por %p85, %p86
      %s89 = sadd.s32 %s88, 1
      %p92 = scmp.eq.s32.totalorder %s33, 1
      %p93 = scmp.ne.s32.totalorder %s88, %s90
      %p94 = scmp.eq.s32.totalorder %s33, 0
      %p95 = por %p93, %p94
      %p96 = scmp.ne.s32.totalorder %s88, %s90
      %p97 = scmp.eq.s32.totalorder %s38, 1
      %p98 = por %p96, %p97
      %p99 = scmp.ne.s32.totalorder %s90, %s91
      %p100 = scmp.eq.s32.totalorder %s38, 0
      %p101 = por %p99, %p100
      %p102 = scmp.ne.s32.totalorder %s90, %s91
      %p103 = scmp.eq.s32.totalorder %s39, 1
      %p104 = por %p102, %p103
      %p106 = scmp.ne.s32.totalorder %s91, %s105
      %p107 = scmp.eq.s32.totalorder %s39, 0
      %p108 = por %p106, %p107
      %s110 = sadd.s32 %s109, 1
      %p113 = scmp.eq.s32.totalorder %s33, 1
      %p114 = scmp.ne.s32.totalorder %s109, %s111
      %p115 = scmp.eq.s32.totalorder %s33, 0
      %p116 = por %p114, %p115
      %p117 = scmp.ne.s32.totalorder %s109, %s111
      %p118 = scmp.eq.s32.totalorder %s38, 1
      %p119 = por %p117, %p118
      %p120 = scmp.ne.s32.totalorder %s111, %s112
      %p121 = scmp.eq.s32.totalorder %s38, 0
      %p122 = por %p120, %p121
      %p123 = scmp.ne.s32.totalorder %s111, %s112
      %p124 = scmp.eq.s32.totalorder %s39, 1
      %p125 = por %p123, %p124
      %p127 = scmp.ne.s32.totalorder %s112, %s126
      %p128 = scmp.eq.s32.totalorder %s39, 0
      %p129 = por %p127, %p128
      %s131 = sadd.s32 %s130, 1
      %p134 = scmp.eq.s32.totalorder %s33, 1
      %p135 = scmp.ne.s32.totalorder %s130, %s132
      %p136 = scmp.eq.s32.totalorder %s33, 0
      %p137 = por %p135, %p136
      %p138 = scmp.ne.s32.totalorder %s130, %s132
      %p139 = scmp.eq.s32.totalorder %s38, 1
      %p140 = por %p138, %p139
      %p141 = scmp.ne.s32.totalorder %s132, %s133
      %p142 = scmp.eq.s32.totalorder %s38, 0
      %p143 = por %p141, %p142
      %p144 = scmp.ne.s32.totalorder %s132, %s133
      %p145 = scmp.eq.s32.totalorder %s39, 1
      %p146 = por %p144, %p145
      %p148 = scmp.ne.s32.totalorder %s133, %s147
      %p149 = scmp.eq.s32.totalorder %s39, 0
      %p150 = por %p148, %p149
      %s152 = sadd.s32 %s151, 1
      %p155 = scmp.eq.s32.totalorder %s33, 1
      %p156 = scmp.ne.s32.totalorder %s151, %s153
      %p157 = scmp.eq.s32.totalorder %s33, 0
      %p158 = por %p156, %p157
      %p159 = scmp.ne.s32.totalorder %s151, %s153
      %p160 = scmp.eq.s32.totalorder %s38, 1
      %p161 = por %p159, %p160
      %p162 = scmp.ne.s32.totalorder %s153, %s154
      %p163 = scmp.eq.s32.totalorder %s38, 0
      %p164 = por %p162, %p163
      %p165 = scmp.ne.s32.totalorder %s153, %s154
      %p166 = scmp.eq.s32.totalorder %s39, 1
      %p167 = por %p165, %p166
      %p169 = scmp.ne.s32.totalorder %s154, %s168
      %p170 = scmp.eq.s32.totalorder %s39, 0
      %p171 = por %p169, %p170
      %s173 = sadd.s32 %s172, 1
      %p176 = scmp.eq.s32.totalorder %s33, 1
      %p177 = scmp.ne.s32.totalorder %s172, %s174
      %p178 = scmp.eq.s32.totalorder %s33, 0
      %p179 = por %p177, %p178
      %p180 = scmp.ne.s32.totalorder %s172, %s174
      %p181 = scmp.eq.s32.totalorder %s38, 1
      %p182 = por %p180, %p181
      %p183 = scmp.ne.s32.totalorder %s174, %s175
      %p184 = scmp.eq.s32.totalorder %s38, 0
      %p185 = por %p183, %p184
      %p186 = scmp.ne.s32.totalorder %s174, %s175
      %p187 = scmp.eq.s32.totalorder %s39, 1
      %p188 = por %p186, %p187
      %p190 = scmp.ne.s32.totalorder %s175, %s189
      %p191 = scmp.eq.s32.totalorder %s39, 0
      %p192 = por %p190, %p191
      %s194 = sadd.s32 %s193, 1
      %p197 = scmp.eq.s32.totalorder %s33, 1
      %p198 = scmp.ne.s32.totalorder %s193, %s195
      %p199 = scmp.eq.s32.totalorder %s33, 0
      %p200 = por %p198, %p199
      %p201 = scmp.ne.s32.totalorder %s193, %s195
      %p202 = scmp.eq.s32.totalorder %s38, 1
      %p203 = por %p201, %p202
      %p204 = scmp.ne.s32.totalorder %s195, %s196
      %p205 = scmp.eq.s32.totalorder %s38, 0
      %p206 = por %p204, %p205
      %p207 = scmp.ne.s32.totalorder %s195, %s196
      %p208 = scmp.eq.s32.totalorder %s39, 1
      %p209 = por %p207, %p208
      %p211 = scmp.ne.s32.totalorder %s196, %s210
      %p212 = scmp.eq.s32.totalorder %s39, 0
      %p213 = por %p211, %p212
      %s215 = sadd.s32 %s214, 1
      %p218 = scmp.eq.s32.totalorder %s33, 1
      %p219 = scmp.ne.s32.totalorder %s214, %s216
      %p220 = scmp.eq.s32.totalorder %s33, 0
      %p221 = por %p219, %p220
      %p222 = scmp.ne.s32.totalorder %s214, %s216
      %p223 = scmp.eq.s32.totalorder %s38, 1
      %p224 = por %p222, %p223
      %p225 = scmp.ne.s32.totalorder %s216, %s217
      %p226 = scmp.eq.s32.totalorder %s38, 0
      %p227 = por %p225, %p226
      %p228 = scmp.ne.s32.totalorder %s216, %s217
      %p229 = scmp.eq.s32.totalorder %s39, 1
      %p230 = por %p228, %p229
      %p232 = scmp.ne.s32.totalorder %s217, %s231
      %p233 = scmp.eq.s32.totalorder %s39, 0
      %p234 = por %p232, %p233
      %s236 = sadd.s32 %s235, 1
      %p239 = scmp.eq.s32.totalorder %s33, 1
      %p240 = scmp.ne.s32.totalorder %s235, %s237
      %p241 = scmp.eq.s32.totalorder %s33, 0
      %p242 = por %p240, %p241
      %p243 = scmp.ne.s32.totalorder %s235, %s237
      %p244 = scmp.eq.s32.totalorder %s38, 1
      %p245 = por %p243, %p244
      %p246 = scmp.ne.s32.totalorder %s237, %s238
      %p247 = scmp.eq.s32.totalorder %s38, 0
      %p248 = por %p246, %p247
      %p249 = scmp.ne.s32.totalorder %s237, %s238
      %p250 = scmp.eq.s32.totalorder %s39, 1
      %p251 = por %p249, %p250
      %p253 = scmp.ne.s32.totalorder %s238, %s252
      %p254 = scmp.eq.s32.totalorder %s39, 0
      %p255 = por %p253, %p254
      %s257 = sadd.s32 %s256, 1
      %p260 = scmp.eq.s32.totalorder %s33, 1
      %p261 = scmp.ne.s32.totalorder %s256, %s258
      %p262 = scmp.eq.s32.totalorder %s33, 0
      %p263 = por %p261, %p262
      %p264 = scmp.ne.s32.totalorder %s256, %s258
      %p265 = scmp.eq.s32.totalorder %s38, 1
      %p266 = por %p264, %p265
      %p267 = scmp.ne.s32.totalorder %s258, %s259
      %p268 = scmp.eq.s32.totalorder %s38, 0
      %p269 = por %p267, %p268
      %p270 = scmp.ne.s32.totalorder %s258, %s259
      %p271 = scmp.eq.s32.totalorder %s39, 1
      %p272 = por %p270, %p271
      %p274 = scmp.ne.s32.totalorder %s259, %s273
      %p275 = scmp.eq.s32.totalorder %s39, 0
      %p276 = por %p274, %p275
      %s278 = sadd.s32 %s277, 1
      %p281 = scmp.eq.s32.totalorder %s33, 1
      %p282 = scmp.ne.s32.totalorder %s277, %s279
      %p283 = scmp.eq.s32.totalorder %s33, 0
      %p284 = por %p282, %p283
      %p285 = scmp.ne.s32.totalorder %s277, %s279
      %p286 = scmp.eq.s32.totalorder %s38, 1
      %p287 = por %p285, %p286
      %p288 = scmp.ne.s32.totalorder %s279, %s280
      %p289 = scmp.eq.s32.totalorder %s38, 0
      %p290 = por %p288, %p289
      %p291 = scmp.ne.s32.totalorder %s279, %s280
      %p292 = scmp.eq.s32.totalorder %s39, 1
      %p293 = por %p291, %p292
      %p295 = scmp.ne.s32.totalorder %s280, %s294
      %p296 = scmp.eq.s32.totalorder %s39, 0
      %p297 = por %p295, %p296
      %s299 = sadd.s32 %s298, 1
      %p302 = scmp.eq.s32.totalorder %s33, 1
      %p303 = scmp.ne.s32.totalorder %s298, %s300
      %p304 = scmp.eq.s32.totalorder %s33, 0
      %p305 = por %p303, %p304
      %p306 = scmp.ne.s32.totalorder %s298, %s300
      %p307 = scmp.eq.s32.totalorder %s38, 1
      %p308 = por %p306, %p307
      %p309 = scmp.ne.s32.totalorder %s300, %s301
      %p310 = scmp.eq.s32.totalorder %s38, 0
      %p311 = por %p309, %p310
      %p312 = scmp.ne.s32.totalorder %s300, %s301
      %p313 = scmp.eq.s32.totalorder %s39, 1
      %p314 = por %p312, %p313
      %p316 = scmp.ne.s32.totalorder %s301, %s315
      %p317 = scmp.eq.s32.totalorder %s39, 0
      %p318 = por %p316, %p317
      %s320 = sadd.s32 %s319, 1
      %p323 = scmp.eq.s32.totalorder %s33, 1
      %p324 = scmp.ne.s32.totalorder %s319, %s321
      %p325 = scmp.eq.s32.totalorder %s33, 0
      %p326 = por %p324, %p325
      %p327 = scmp.ne.s32.totalorder %s319, %s321
      %p328 = scmp.eq.s32.totalorder %s38, 1
      %p329 = por %p327, %p328
      %p330 = scmp.ne.s32.totalorder %s321, %s322
      %p331 = scmp.eq.s32.totalorder %s38, 0
      %p332 = por %p330, %p331
      %p333 = scmp.ne.s32.totalorder %s321, %s322
      %p334 = scmp.eq.s32.totalorder %s39, 1
      %p335 = por %p333, %p334
      %p337 = scmp.ne.s32.totalorder %s322, %s336
      %p338 = scmp.eq.s32.totalorder %s39, 0
      %p339 = por %p337, %p338
      %s341 = sadd.s32 %s340, 1
      %p344 = scmp.eq.s32.totalorder %s33, 1
      %p345 = scmp.ne.s32.totalorder %s340, %s342
      %p346 = scmp.eq.s32.totalorder %s33, 0
      %p347 = por %p345, %p346
      %p348 = scmp.ne.s32.totalorder %s340, %s342
      %p349 = scmp.eq.s32.totalorder %s38, 1
      %p350 = por %p348, %p349
      %p351 = scmp.ne.s32.totalorder %s342, %s343
      %p352 = scmp.eq.s32.totalorder %s38, 0
      %p353 = por %p351, %p352
      %p354 = scmp.ne.s32.totalorder %s342, %s343
      %p355 = scmp.eq.s32.totalorder %s39, 1
      %p356 = por %p354, %p355
      %p358 = scmp.ne.s32.totalorder %s343, %s357
      %p359 = scmp.eq.s32.totalorder %s39, 0
      %p360 = por %p358, %p359
      %s362 = sadd.s32 %s361, 1
      %p365 = scmp.eq.s32.totalorder %s33, 1
      %p366 = scmp.ne.s32.totalorder %s361, %s363
      %p367 = scmp.eq.s32.totalorder %s33, 0
      %p368 = por %p366, %p367
      %p369 = scmp.ne.s32.totalorder %s361, %s363
      %p370 = scmp.eq.s32.totalorder %s38, 1
      %p371 = por %p369, %p370
      %p372 = scmp.ne.s32.totalorder %s363, %s364
      %p373 = scmp.eq.s32.totalorder %s38, 0
      %p374 = por %p372, %p373
      %p375 = scmp.ne.s32.totalorder %s363, %s364
      %p376 = scmp.eq.s32.totalorder %s39, 1
      %p377 = por %p375, %p376
      %p379 = scmp.ne.s32.totalorder %s364, %s378
      %p380 = scmp.eq.s32.totalorder %s39, 0
      %p381 = por %p379, %p380
      %s383 = sadd.s32 %s382, 1
      %p386 = scmp.eq.s32.totalorder %s33, 1
      %p387 = scmp.ne.s32.totalorder %s382, %s384
      %p388 = scmp.eq.s32.totalorder %s33, 0
      %p389 = por %p387, %p388
      %p390 = scmp.ne.s32.totalorder %s382, %s384
      %p391 = scmp.eq.s32.totalorder %s38, 1
      %p392 = por %p390, %p391
      %p393 = scmp.ne.s32.totalorder %s384, %s385
      %p394 = scmp.eq.s32.totalorder %s38, 0
      %p395 = por %p393, %p394
      %p396 = scmp.ne.s32.totalorder %s384, %s385
      %p397 = scmp.eq.s32.totalorder %s39, 1
      %p398 = por %p396, %p397
      %p400 = scmp.ne.s32.totalorder %s385, %s399
      %p401 = scmp.eq.s32.totalorder %s39, 0
      %p402 = por %p400, %p401
      %s404 = sadd.s32 %s403, 1
      %p407 = scmp.eq.s32.totalorder %s33, 1
      %p408 = scmp.ne.s32.totalorder %s403, %s405
      %p409 = scmp.eq.s32.totalorder %s33, 0
      %p410 = por %p408, %p409
      %p411 = scmp.ne.s32.totalorder %s403, %s405
      %p412 = scmp.eq.s32.totalorder %s38, 1
      %p413 = por %p411, %p412
      %p414 = scmp.ne.s32.totalorder %s405, %s406
      %p415 = scmp.eq.s32.totalorder %s38, 0
      %p416 = por %p414, %p415
      %p417 = scmp.ne.s32.totalorder %s405, %s406
      %p418 = scmp.eq.s32.totalorder %s39, 1
      %p419 = por %p417, %p418
      %p421 = scmp.ne.s32.totalorder %s406, %s420
      %p422 = scmp.eq.s32.totalorder %s39, 0
      %p423 = por %p421, %p422
      %s425 = sadd.s32 %s424, 1
      %p428 = scmp.eq.s32.totalorder %s33, 1
      %p429 = scmp.ne.s32.totalorder %s424, %s426
      %p430 = scmp.eq.s32.totalorder %s33, 0
      %p431 = por %p429, %p430
      %p432 = scmp.ne.s32.totalorder %s424, %s426
      %p433 = scmp.eq.s32.totalorder %s38, 1
      %p434 = por %p432, %p433
      %p435 = scmp.ne.s32.totalorder %s426, %s427
      %p436 = scmp.eq.s32.totalorder %s38, 0
      %p437 = por %p435, %p436
      %p438 = scmp.ne.s32.totalorder %s426, %s427
      %p439 = scmp.eq.s32.totalorder %s39, 1
      %p440 = por %p438, %p439
      %p442 = scmp.ne.s32.totalorder %s427, %s441
      %p443 = scmp.eq.s32.totalorder %s39, 0
      %p444 = por %p442, %p443
      %s446 = sadd.s32 %s445, 1
      %p449 = scmp.eq.s32.totalorder %s33, 1
      %p450 = scmp.ne.s32.totalorder %s445, %s447
      %p451 = scmp.eq.s32.totalorder %s33, 0
      %p452 = por %p450, %p451
      %p453 = scmp.ne.s32.totalorder %s445, %s447
      %p454 = scmp.eq.s32.totalorder %s38, 1
      %p455 = por %p453, %p454
      %p456 = scmp.ne.s32.totalorder %s447, %s448
      %p457 = scmp.eq.s32.totalorder %s38, 0
      %p458 = por %p456, %p457
      %p459 = scmp.ne.s32.totalorder %s447, %s448
      %p460 = scmp.eq.s32.totalorder %s39, 1
      %p461 = por %p459, %p460
      %p463 = scmp.ne.s32.totalorder %s448, %s462
      %p464 = scmp.eq.s32.totalorder %s39, 0
      %p465 = por %p463, %p464
      %s467 = sadd.s32 %s466, 1
      %p470 = scmp.eq.s32.totalorder %s33, 1
      %p471 = scmp.ne.s32.totalorder %s466, %s468
      %p472 = scmp.eq.s32.totalorder %s33, 0
      %p473 = por %p471, %p472
      %p474 = scmp.ne.s32.totalorder %s466, %s468
      %p475 = scmp.eq.s32.totalorder %s38, 1
      %p476 = por %p474, %p475
      %p477 = scmp.ne.s32.totalorder %s468, %s469
      %p478 = scmp.eq.s32.totalorder %s38, 0
      %p479 = por %p477, %p478
      %p480 = scmp.ne.s32.totalorder %s468, %s469
      %p481 = scmp.eq.s32.totalorder %s39, 1
      %p482 = por %p480, %p481
      %p484 = scmp.ne.s32.totalorder %s469, %s483
      %p485 = scmp.eq.s32.totalorder %s39, 0
      %p486 = por %p484, %p485
      %s488 = sadd.s32 %s487, 1
      %p491 = scmp.eq.s32.totalorder %s33, 1
      %p492 = scmp.ne.s32.totalorder %s487, %s489
      %p493 = scmp.eq.s32.totalorder %s33, 0
      %p494 = por %p492, %p493
      %p495 = scmp.ne.s32.totalorder %s487, %s489
      %p496 = scmp.eq.s32.totalorder %s38, 1
      %p497 = por %p495, %p496
      %p498 = scmp.ne.s32.totalorder %s489, %s490
      %p499 = scmp.eq.s32.totalorder %s38, 0
      %p500 = por %p498, %p499
      %p501 = scmp.ne.s32.totalorder %s489, %s490
      %p502 = scmp.eq.s32.totalorder %s39, 1
      %p503 = por %p501, %p502
      %p505 = scmp.ne.s32.totalorder %s490, %s504
      %p506 = scmp.eq.s32.totalorder %s39, 0
      %p507 = por %p505, %p506
      %s509 = sadd.s32 %s508, 1
      %p512 = scmp.eq.s32.totalorder %s33, 1
      %p513 = scmp.ne.s32.totalorder %s508, %s510
      %p514 = scmp.eq.s32.totalorder %s33, 0
      %p515 = por %p513, %p514
      %p516 = scmp.ne.s32.totalorder %s508, %s510
      %p517 = scmp.eq.s32.totalorder %s38, 1
      %p518 = por %p516, %p517
      %p519 = scmp.ne.s32.totalorder %s510, %s511
      %p520 = scmp.eq.s32.totalorder %s38, 0
      %p521 = por %p519, %p520
      %p522 = scmp.ne.s32.totalorder %s510, %s511
      %p523 = scmp.eq.s32.totalorder %s39, 1
      %p524 = por %p522, %p523
      %p526 = scmp.ne.s32.totalorder %s511, %s525
      %p527 = scmp.eq.s32.totalorder %s39, 0
      %p528 = por %p526, %p527
      %s530 = sadd.s32 %s529, 1
      %p533 = scmp.eq.s32.totalorder %s33, 1
      %p534 = scmp.ne.s32.totalorder %s529, %s531
      %p535 = scmp.eq.s32.totalorder %s33, 0
      %p536 = por %p534, %p535
      %p537 = scmp.ne.s32.totalorder %s529, %s531
      %p538 = scmp.eq.s32.totalorder %s38, 1
      %p539 = por %p537, %p538
      %p540 = scmp.ne.s32.totalorder %s531, %s532
      %p541 = scmp.eq.s32.totalorder %s38, 0
      %p542 = por %p540, %p541
      %p543 = scmp.ne.s32.totalorder %s531, %s532
      %p544 = scmp.eq.s32.totalorder %s39, 1
      %p545 = por %p543, %p544
      %p547 = scmp.ne.s32.totalorder %s532, %s546
      %p548 = scmp.eq.s32.totalorder %s39, 0
      %p549 = por %p547, %p548
      %s550 = ssub.s32 %s33, %s40
      %p551 = scmp.eq.s32.totalorder %s550, 0
      %s553 = sadd.s32 %s552, 1
      %s554 = scalar_select %p551, %s552, %s553
      %p557 = pneg %p551
      %p558 = scmp.eq.s32.totalorder %s33, 1
      %p559 = por %p557, %p558
      %p560 = scmp.ne.s32.totalorder %s552, %s555
      %p561 = scmp.eq.s32.totalorder %s33, 0
      %p562 = por %p560, %p561
      %p563 = scmp.ne.s32.totalorder %s552, %s555
      %p564 = scmp.eq.s32.totalorder %s38, 1
      %p565 = por %p563, %p564
      %p566 = scmp.ne.s32.totalorder %s555, %s556
      %p567 = scmp.eq.s32.totalorder %s38, 0
      %p568 = por %p566, %p567
      %p569 = scmp.ne.s32.totalorder %s555, %s556
      %p570 = scmp.eq.s32.totalorder %s39, 1
      %p571 = por %p569, %p570
      %p573 = scmp.ne.s32.totalorder %s556, %s572
      %p574 = scmp.eq.s32.totalorder %s39, 0
      %p575 = por %p573, %p574
      %p576 = scmp.le.s32.totalorder 1, %s33
      %p577 = scmp.lt.s32.totalorder %s33, 3
      %p578 = pnand %p576, %p577
      %p579 = pneg %p578
      // Predicated region
      $region9: #{tpu_custom_call.1} parent=5 // pred_check
        _
      $region10: #{tpu_custom_call.1} parent=5 // pred_check_branch
        %581 = sbr.rel (%p578) target = $region12
      $region11: #{tpu_custom_call.1} parent=5 // pred_region
        %s582 = ssub.s32 %s33, 1
        // Predicated region
        $region13: #{tpu_custom_call.1} parent=11 // pred_check
          %p583 = pneg %p80
        $region14: #{tpu_custom_call.1} parent=11 // pred_check_branch
          %585 = sbr.rel (%p583) target = $region16
        $region15: #{tpu_custom_call.1} parent=11 // pred_region
          _
        $region16: #{tpu_custom_call.1} parent=11 // pred_fallthru
          _
        // Predicated region
        $region17: #{tpu_custom_call.1} parent=11 // pred_check
          %p586 = pneg %p101
        $region18: #{tpu_custom_call.1} parent=11 // pred_check_branch
          %588 = sbr.rel (%p586) target = $region20
        $region19: #{tpu_custom_call.1} parent=11 // pred_region
          _
        $region20: #{tpu_custom_call.1} parent=11 // pred_fallthru
          _
        // Predicated region
        $region21: #{tpu_custom_call.1} parent=11 // pred_check
          %p589 = pneg %p122
        $region22: #{tpu_custom_call.1} parent=11 // pred_check_branch
          %591 = sbr.rel (%p589) target = $region24
        $region23: #{tpu_custom_call.1} parent=11 // pred_region
          _
        $region24: #{tpu_custom_call.1} parent=11 // pred_fallthru
          _
        // Predicated region
        $region25: #{tpu_custom_call.1} parent=11 // pred_check
          %p592 = pneg %p143
        $region26: #{tpu_custom_call.1} parent=11 // pred_check_branch
          %594 = sbr.rel (%p592) target = $region28
        $region27: #{tpu_custom_call.1} parent=11 // pred_region
          _
        $region28: #{tpu_custom_call.1} parent=11 // pred_fallthru
          _
        // Predicated region
        $region29: #{tpu_custom_call.1} parent=11 // pred_check
          %p595 = pneg %p164
        $region30: #{tpu_custom_call.1} parent=11 // pred_check_branch
          %597 = sbr.rel (%p595) target = $region32
        $region31: #{tpu_custom_call.1} parent=11 // pred_region
          _
        $region32: #{tpu_custom_call.1} parent=11 // pred_fallthru
          _
        // Predicated region
        $region33: #{tpu_custom_call.1} parent=11 // pred_check
          %p598 = pneg %p185
        $region34: #{tpu_custom_call.1} parent=11 // pred_check_branch
          %600 = sbr.rel (%p598) target = $region36
        $region35: #{tpu_custom_call.1} parent=11 // pred_region
          _
        $region36: #{tpu_custom_call.1} parent=11 // pred_fallthru
          _
        // Predicated region
        $region37: #{tpu_custom_call.1} parent=11 // pred_check
          %p601 = pneg %p206
        $region38: #{tpu_custom_call.1} parent=11 // pred_check_branch
          %603 = sbr.rel (%p601) target = $region40
        $region39: #{tpu_custom_call.1} parent=11 // pred_region
          _
        $region40: #{tpu_custom_call.1} parent=11 // pred_fallthru
          _
        // Predicated region
        $region41: #{tpu_custom_call.1} parent=11 // pred_check
          %p604 = pneg %p227
        $region42: #{tpu_custom_call.1} parent=11 // pred_check_branch
          %606 = sbr.rel (%p604) target = $region44
        $region43: #{tpu_custom_call.1} parent=11 // pred_region
          _
        $region44: #{tpu_custom_call.1} parent=11 // pred_fallthru
          _
        // Predicated region
        $region45: #{tpu_custom_call.1} parent=11 // pred_check
          %p607 = pneg %p248
        $region46: #{tpu_custom_call.1} parent=11 // pred_check_branch
          %609 = sbr.rel (%p607) target = $region48
        $region47: #{tpu_custom_call.1} parent=11 // pred_region
          _
        $region48: #{tpu_custom_call.1} parent=11 // pred_fallthru
          _
        // Predicated region
        $region49: #{tpu_custom_call.1} parent=11 // pred_check
          %p610 = pneg %p269
        $region50: #{tpu_custom_call.1} parent=11 // pred_check_branch
          %612 = sbr.rel (%p610) target = $region52
        $region51: #{tpu_custom_call.1} parent=11 // pred_region
          _
        $region52: #{tpu_custom_call.1} parent=11 // pred_fallthru
          _
        // Predicated region
        $region53: #{tpu_custom_call.1} parent=11 // pred_check
          %p613 = pneg %p290
        $region54: #{tpu_custom_call.1} parent=11 // pred_check_branch
          %615 = sbr.rel (%p613) target = $region56
        $region55: #{tpu_custom_call.1} parent=11 // pred_region
          _
        $region56: #{tpu_custom_call.1} parent=11 // pred_fallthru
          _
        // Predicated region
        $region57: #{tpu_custom_call.1} parent=11 // pred_check
          %p616 = pneg %p311
        $region58: #{tpu_custom_call.1} parent=11 // pred_check_branch
          %618 = sbr.rel (%p616) target = $region60
        $region59: #{tpu_custom_call.1} parent=11 // pred_region
          _
        $region60: #{tpu_custom_call.1} parent=11 // pred_fallthru
          _
        // Predicated region
        $region61: #{tpu_custom_call.1} parent=11 // pred_check
          %p619 = pneg %p332
        $region62: #{tpu_custom_call.1} parent=11 // pred_check_branch
          %621 = sbr.rel (%p619) target = $region64
        $region63: #{tpu_custom_call.1} parent=11 // pred_region
          _
        $region64: #{tpu_custom_call.1} parent=11 // pred_fallthru
          _
        // Predicated region
        $region65: #{tpu_custom_call.1} parent=11 // pred_check
          %p622 = pneg %p353
        $region66: #{tpu_custom_call.1} parent=11 // pred_check_branch
          %624 = sbr.rel (%p622) target = $region68
        $region67: #{tpu_custom_call.1} parent=11 // pred_region
          _
        $region68: #{tpu_custom_call.1} parent=11 // pred_fallthru
          _
        // Predicated region
        $region69: #{tpu_custom_call.1} parent=11 // pred_check
          %p625 = pneg %p374
        $region70: #{tpu_custom_call.1} parent=11 // pred_check_branch
          %627 = sbr.rel (%p625) target = $region72
        $region71: #{tpu_custom_call.1} parent=11 // pred_region
          _
        $region72: #{tpu_custom_call.1} parent=11 // pred_fallthru
          _
        // Predicated region
        $region73: #{tpu_custom_call.1} parent=11 // pred_check
          %p628 = pneg %p395
        $region74: #{tpu_custom_call.1} parent=11 // pred_check_branch
          %630 = sbr.rel (%p628) target = $region76
        $region75: #{tpu_custom_call.1} parent=11 // pred_region
          _
        $region76: #{tpu_custom_call.1} parent=11 // pred_fallthru
          _
        // Predicated region
        $region77: #{tpu_custom_call.1} parent=11 // pred_check
          %p631 = pneg %p416
        $region78: #{tpu_custom_call.1} parent=11 // pred_check_branch
          %633 = sbr.rel (%p631) target = $region80
        $region79: #{tpu_custom_call.1} parent=11 // pred_region
          _
        $region80: #{tpu_custom_call.1} parent=11 // pred_fallthru
          _
        // Predicated region
        $region81: #{tpu_custom_call.1} parent=11 // pred_check
          %p634 = pneg %p437
        $region82: #{tpu_custom_call.1} parent=11 // pred_check_branch
          %636 = sbr.rel (%p634) target = $region84
        $region83: #{tpu_custom_call.1} parent=11 // pred_region
          _
        $region84: #{tpu_custom_call.1} parent=11 // pred_fallthru
          _
        // Predicated region
        $region85: #{tpu_custom_call.1} parent=11 // pred_check
          %p637 = pneg %p458
        $region86: #{tpu_custom_call.1} parent=11 // pred_check_branch
          %639 = sbr.rel (%p637) target = $region88
        $region87: #{tpu_custom_call.1} parent=11 // pred_region
          _
        $region88: #{tpu_custom_call.1} parent=11 // pred_fallthru
          _
        // Predicated region
        $region89: #{tpu_custom_call.1} parent=11 // pred_check
          %p640 = pneg %p479
        $region90: #{tpu_custom_call.1} parent=11 // pred_check_branch
          %642 = sbr.rel (%p640) target = $region92
        $region91: #{tpu_custom_call.1} parent=11 // pred_region
          _
        $region92: #{tpu_custom_call.1} parent=11 // pred_fallthru
          _
        // Predicated region
        $region93: #{tpu_custom_call.1} parent=11 // pred_check
          %p643 = pneg %p500
        $region94: #{tpu_custom_call.1} parent=11 // pred_check_branch
          %645 = sbr.rel (%p643) target = $region96
        $region95: #{tpu_custom_call.1} parent=11 // pred_region
          _
        $region96: #{tpu_custom_call.1} parent=11 // pred_fallthru
          _
        // Predicated region
        $region97: #{tpu_custom_call.1} parent=11 // pred_check
          %p646 = pneg %p521
        $region98: #{tpu_custom_call.1} parent=11 // pred_check_branch
          %648 = sbr.rel (%p646) target = $region100
        $region99: #{tpu_custom_call.1} parent=11 // pred_region
          _
        $region100: #{tpu_custom_call.1} parent=11 // pred_fallthru
          _
        // Predicated region
        $region101: #{tpu_custom_call.1} parent=11 // pred_check
          %p649 = pneg %p542
        $region102: #{tpu_custom_call.1} parent=11 // pred_check_branch
          %651 = sbr.rel (%p649) target = $region104
        $region103: #{tpu_custom_call.1} parent=11 // pred_region
          _
        $region104: #{tpu_custom_call.1} parent=11 // pred_fallthru
          _
      $region12: #{tpu_custom_call.1} parent=5 // pred_fallthru
        _
      %p652 = scmp.lt.s32.totalorder %s33, 2
      // Predicated region
      $region105: #{tpu_custom_call.1} parent=5 // pred_check
        %p653 = pneg %p652
      $region106: #{tpu_custom_call.1} parent=5 // pred_check_branch
        %655 = sbr.rel (%p653) target = $region108
      $region107: #{tpu_custom_call.1} parent=5 // pred_region
        // Predicated region
        $region109: #{tpu_custom_call.1} parent=107 // pred_check
          %p656 = pneg %p53
        $region110: #{tpu_custom_call.1} parent=107 // pred_check_branch
          %658 = sbr.rel (%p656) target = $region112
        $region111: #{tpu_custom_call.1} parent=107 // pred_region
          %p659 = scmp.lt.s32.totalorder %s33, 1
          %s660 = scalar_select %p659, %s33, 1
          %s661 = smul.addr %s660, 2
          %s662 = scalar_lea.vmem %s0, %s661
        $region112: #{tpu_custom_call.1} parent=107 // pred_fallthru
          _
      $region108: #{tpu_custom_call.1} parent=5 // pred_fallthru
        _
      %p663 = scmp.le.s32.totalorder 1, %s33
      %p664 = scmp.lt.s32.totalorder %s33, 3
      %p665 = pnand %p663, %p664
      %p666 = pneg %p665
      // Predicated region
      $region113: #{tpu_custom_call.1} parent=5 // pred_check
        _
      $region114: #{tpu_custom_call.1} parent=5 // pred_check_branch
        %668 = sbr.rel (%p665) target = $region116
      $region115: #{tpu_custom_call.1} parent=5 // pred_region
        %s669 = ssub.s32 %s33, 1
        %p670 = scmp.lt.s32.totalorder %s38, 1
        %s671 = scalar_select %p670, %s38, 1
        %s672 = smul.addr %s671, 2
        %s673 = scalar_lea.vmem %s0, %s672
        %p674 = pneg %p59
        %p675 = pneg %p56
        %p676 = pneg %p80
        %p677 = pneg %p77
        %p678 = pneg %p101
        %p679 = pneg %p98
        %p680 = pneg %p122
        %p681 = pneg %p119
        %p682 = pneg %p143
        %p683 = pneg %p140
        %p684 = pneg %p164
        %p685 = pneg %p161
        %p686 = pneg %p185
        %p687 = pneg %p182
        %p688 = pneg %p206
        %p689 = pneg %p203
        %p690 = pneg %p227
        %p691 = pneg %p224
        %p692 = pneg %p248
        %p693 = pneg %p245
        %p694 = pneg %p269
        %p695 = pneg %p266
        %p696 = pneg %p290
        %p697 = pneg %p287
        %p698 = pneg %p311
        %p699 = pneg %p308
        %p700 = pneg %p332
        %p701 = pneg %p329
        %p702 = pneg %p353
        %p703 = pneg %p350
        %p704 = pneg %p374
        %p705 = pneg %p371
        %p706 = pneg %p395
        %p707 = pneg %p392
        %p708 = pneg %p416
        %p709 = pneg %p413
        %p710 = pneg %p437
        %p711 = pneg %p434
        %p712 = pneg %p458
        %p713 = pneg %p455
        %p714 = pneg %p479
        %p715 = pneg %p476
        %p716 = pneg %p500
        %p717 = pneg %p497
        %p718 = pneg %p521
        %p719 = pneg %p518
        %p720 = pneg %p542
        %p721 = pneg %p539
        %p722 = pneg %p568
        %p723 = pneg %p565
        %s724 = sand.u32 %s555, 1
        %s725 = scalar_lea.sflag [#allocation3], %s724
        %s726 = sand.u32 %s555, 1
        %s727 = scalar_lea.vmem [#allocation2], %s726
        %p728 = scmp.lt.s32.totalorder %s38, 1
        %s729 = scalar_select %p728, %s38, 1
        %s730 = smul.addr %s729, 2
        %s731 = scalar_lea.vmem %s0, %s730
        %v733 = vld [vmem:[%s731] sm:$0x3]
        %v734 = vld [vmem:[%s2] sm:$0x3]
        %v735 = vld [vmem:[%s3] sm:$0x1]
        %v737 = vperm.slane %v735, 0
        %vm739 = vcmask 31744
        %v741 = vsel %vm739, %v733, 0
        %vm743 = vcmask 1041408
        %v745 = vsel %vm743, %v734, 0
        %747 = vmatpush.bf16.msra.mxu0 0
        %748 = vmatpush.bf16.msra.mxu0 0
        %749 = vmatpush.bf16.msra.mxu0 0
        %750 = vmatpush.bf16.msra.mxu0 0
        %751 = vmatpush.bf16.msra.mxu0 0
        %752 = vmatpush.bf16.msra.mxu0 0
        %753 = vmatpush.bf16.msra.mxu0 0
        %754 = vmatpush.bf16.msra.mxu0 %v745
        %755 = vmatmul.bf16.gmra.mxu0 %v741
        %v756 = vpop.f32.mrf.mxu0
        %v757 = vadd.f32 %v737, %v756
        %v758 = vpop.f32.mrf.mxu0
        %759 = vdwg.mxu0
        %v760 = vld [vmem:[%s1] sm:$0xf]
        %v761 = vadd.f32 %v757, %v760
        %v762 = vpack.c.bf16 %v761, %v761
        %v763 = vld [vmem:[%s4] sm:$0xf]
        %v764 = vld [vmem:[%s4 + $0x4] sm:$0xf]
        %v765 = vld [vmem:[%s4 + $0x8] sm:$0xf]
        %v766 = vld [vmem:[%s4 + $0xc] sm:$0xf]
        %v767 = vld [vmem:[%s5] sm:$0x1]
        %v769 = vperm.slane %v767, 0
        %v775 = vunpack.c.l.b16 %v763
        %v776 = vunpack.c.l.b16 %v764
        %v777 = vunpack.c.l.b16 %v765
        %v778 = vunpack.c.l.b16 %v766
        %v779 = vpack.c.b16 %v776, %v775
        %v780 = vpack.c.b16 %v778, %v777
        %vm783 = vcmask 261120
        %v785 = vsel %vm783, %v762, 0
        %787 = vmatpush.bf16.msra.mxu0 0
        %788 = vmatpush.bf16.msra.mxu0 0
        %789 = vmatpush.bf16.msra.mxu0 0
        %790 = vmatpush.bf16.msra.mxu0 0
        %791 = vmatpush.bf16.msra.mxu0 0
        %792 = vmatpush.bf16.msra.mxu0 0
        %793 = vmatpush.bf16.msra.mxu0 %v780
        %794 = vmatpush.bf16.msra.mxu0 %v779
        %795 = vmatmul.bf16.gmra.mxu0 %v785
        %v796 = vpop.f32.mrf.mxu0
        %v797 = vadd.f32 %v769, %v796
        %v798 = vpop.f32.mrf.mxu0
        %799 = vdwg.mxu0
        %v800 = vld [vmem:[%s6] sm:$0xf]
        %v801 = vld [vmem:[%s6 + $0x4] sm:$0xf]
        %v802 = vld [vmem:[%s6 + $0x8] sm:$0xf]
        %v803 = vld [vmem:[%s6 + $0xc] sm:$0xf]
        %v804 = vld [vmem:[%s7] sm:$0x1]
        %v806 = vperm.slane %v804, 0
        %v812 = vunpack.c.l.b16 %v800
        %v813 = vunpack.c.l.b16 %v801
        %v814 = vunpack.c.l.b16 %v802
        %v815 = vunpack.c.l.b16 %v803
        %v816 = vpack.c.b16 %v813, %v812
        %v817 = vpack.c.b16 %v815, %v814
        %820 = vmatpush.bf16.msra.mxu0 0
        %821 = vmatpush.bf16.msra.mxu0 0
        %822 = vmatpush.bf16.msra.mxu0 0
        %823 = vmatpush.bf16.msra.mxu0 0
        %824 = vmatpush.bf16.msra.mxu0 0
        %825 = vmatpush.bf16.msra.mxu0 0
        %826 = vmatpush.bf16.msra.mxu0 %v817
        %827 = vmatpush.bf16.msra.mxu0 %v816
        %828 = vmatmul.bf16.gmra.mxu0 %v785
        %v829 = vpop.f32.mrf.mxu0
        %v830 = vadd.f32 %v806, %v829
        %v831 = vpop.f32.mrf.mxu0
        %832 = vdwg.mxu0
        %v833 = vpack.c.bf16 %v797, %v797
        %v834 = vpack.c.bf16 %v830, %v830
        %vm835 = vcmask 64512
        %v837 = vsel %vm835, %v833, 0
        %v840 = vsel %vm835, %v834, 0
        %842 = vmatpush.bf16.xpose.msra.mxu0 0
        %843 = vmatpush.bf16.xpose.msra.mxu0 0
        %844 = vmatpush.bf16.xpose.msra.mxu0 0
        %845 = vmatpush.bf16.xpose.msra.mxu0 0
        %846 = vmatpush.bf16.xpose.msra.mxu0 0
        %847 = vmatpush.bf16.xpose.msra.mxu0 0
        %848 = vmatpush.bf16.xpose.msra.mxu0 0
        %849 = vmatpush.bf16.xpose.msra.mxu0 %v840
        %850 = vmatmul.bf16.gmra.mxu0 %v837
        %v851 = vpop.f32.mrf.mxu0
        %v852 = vadd.f32 0.0, %v851
        %v853 = vpop.f32.mrf.mxu0
        %854 = vdwg.mxu0
        %vm855 = vcmask 27648
        %v856 = vsel %vm855, %v852, -inf
        %857 = vmax.xlane.f32.xlu0 %v856
        %v858 = vpop.xlane.xlu0 %857
        %v859 = vsub.f32 %v852, %v858
        %v860 = vmul.f32 %v859, 1.442695
        %v861 = vpow.pop %v860
        %v862 = vsel %vm855, %v861, 0.0
        %863 = vadd.xlane.f32.xlu0 %v862
        %v864 = vpop.xlane.xlu0 %863
        %v865 = vrcp.pop %v864
        %v866 = vmul.f32 %v861, %v865
        %v867 = vld [vmem:[%s8] sm:$0xf]
        %v868 = vld [vmem:[%s8 + $0x4] sm:$0xf]
        %v869 = vld [vmem:[%s8 + $0x8] sm:$0xf]
        %v870 = vld [vmem:[%s8 + $0xc] sm:$0xf]
        %v875 = vunpack.c.l.b16 %v867
        %v876 = vunpack.c.l.b16 %v868
        %v877 = vunpack.c.l.b16 %v869
        %v878 = vunpack.c.l.b16 %v870
        %v879 = vpack.c.b16 %v876, %v875
        %v880 = vpack.c.b16 %v878, %v877
        %883 = vmatpush.bf16.msra.mxu0 0
        %884 = vmatpush.bf16.msra.mxu0 0
        %885 = vmatpush.bf16.msra.mxu0 0
        %886 = vmatpush.bf16.msra.mxu0 0
        %887 = vmatpush.bf16.msra.mxu0 0
        %888 = vmatpush.bf16.msra.mxu0 0
        %889 = vmatpush.bf16.msra.mxu0 %v880
        %890 = vmatpush.bf16.msra.mxu0 %v879
        %891 = vmatmul.bf16.gmra.mxu0 %v785
        %v892 = vpop.f32.mrf.mxu0
        %v893 = vadd.f32 0.0, %v892
        %v894 = vpop.f32.mrf.mxu0
        %895 = vdwg.mxu0
        %v896 = vpack.c.bf16 %v866, %v866
        %v897 = vpack.c.bf16 %v893, %v893
        %s898 = scalar_lea.vmem %s4, 16
        %v899 = vld [vmem:[%s898] sm:$0xf]
        %v900 = vld [vmem:[%s898 + $0x4] sm:$0xf]
        %v901 = vld [vmem:[%s898 + $0x8] sm:$0xf]
        %v902 = vld [vmem:[%s898 + $0xc] sm:$0xf]
        %s903 = scalar_lea.vmem %s5, 1
        %v904 = vld [vmem:[%s903] sm:$0x1]
        %v906 = vperm.slane %v904, 0
        %v912 = vunpack.c.l.b16 %v899
        %v913 = vunpack.c.l.b16 %v900
        %v914 = vunpack.c.l.b16 %v901
        %v915 = vunpack.c.l.b16 %v902
        %v916 = vpack.c.b16 %v913, %v912
        %v917 = vpack.c.b16 %v915, %v914
        %920 = vmatpush.bf16.msra.mxu0 0
        %921 = vmatpush.bf16.msra.mxu0 0
        %922 = vmatpush.bf16.msra.mxu0 0
        %923 = vmatpush.bf16.msra.mxu0 0
        %924 = vmatpush.bf16.msra.mxu0 0
        %925 = vmatpush.bf16.msra.mxu0 0
        %926 = vmatpush.bf16.msra.mxu0 %v917
        %927 = vmatpush.bf16.msra.mxu0 %v916
        %928 = vmatmul.bf16.gmra.mxu0 %v785
        %v929 = vpop.f32.mrf.mxu0
        %v930 = vadd.f32 %v906, %v929
        %v931 = vpop.f32.mrf.mxu0
        %932 = vdwg.mxu0
        %s933 = scalar_lea.vmem %s6, 16
        %v934 = vld [vmem:[%s933] sm:$0xf]
        %v935 = vld [vmem:[%s933 + $0x4] sm:$0xf]
        %v936 = vld [vmem:[%s933 + $0x8] sm:$0xf]
        %v937 = vld [vmem:[%s933 + $0xc] sm:$0xf]
        %s938 = scalar_lea.vmem %s7, 1
        %v939 = vld [vmem:[%s938] sm:$0x1]
        %v941 = vperm.slane %v939, 0
        %v947 = vunpack.c.l.b16 %v934
        %v948 = vunpack.c.l.b16 %v935
        %v949 = vunpack.c.l.b16 %v936
        %v950 = vunpack.c.l.b16 %v937
        %v951 = vpack.c.b16 %v948, %v947
        %v952 = vpack.c.b16 %v950, %v949
        %955 = vmatpush.bf16.msra.mxu0 0
        %956 = vmatpush.bf16.msra.mxu0 0
        %957 = vmatpush.bf16.msra.mxu0 0
        %958 = vmatpush.bf16.msra.mxu0 0
        %959 = vmatpush.bf16.msra.mxu0 0
        %960 = vmatpush.bf16.msra.mxu0 0
        %961 = vmatpush.bf16.msra.mxu0 %v952
        %962 = vmatpush.bf16.msra.mxu0 %v951
        %963 = vmatmul.bf16.gmra.mxu0 %v785
        %v964 = vpop.f32.mrf.mxu0
        %v965 = vadd.f32 %v941, %v964
        %v966 = vpop.f32.mrf.mxu0
        %967 = vdwg.mxu0
        %v968 = vpack.c.bf16 %v930, %v930
        %v969 = vpack.c.bf16 %v965, %v965
        %v971 = vsel %vm835, %v968, 0
        %v974 = vsel %vm835, %v969, 0
        %976 = vmatpush.bf16.xpose.msra.mxu0 0
        %977 = vmatpush.bf16.xpose.msra.mxu0 0
        %978 = vmatpush.bf16.xpose.msra.mxu0 0
        %979 = vmatpush.bf16.xpose.msra.mxu0 0
        %980 = vmatpush.bf16.xpose.msra.mxu0 0
        %981 = vmatpush.bf16.xpose.msra.mxu0 0
        %982 = vmatpush.bf16.xpose.msra.mxu0 0
        %983 = vmatpush.bf16.xpose.msra.mxu0 %v974
        %984 = vmatmul.bf16.gmra.mxu0 %v971
        %v985 = vpop.f32.mrf.mxu0
        %v986 = vadd.f32 0.0, %v985
        %v987 = vpop.f32.mrf.mxu0
        %988 = vdwg.mxu0
        %v989 = vsel %vm855, %v986, -inf
        %990 = vmax.xlane.f32.xlu0 %v989
        %v991 = vpop.xlane.xlu0 %990
        %v992 = vsub.f32 %v986, %v991
        %v993 = vmul.f32 %v992, 1.442695
        %v994 = vpow.pop %v993
        %v995 = vsel %vm855, %v994, 0.0
        %996 = vadd.xlane.f32.xlu0 %v995
        %v997 = vpop.xlane.xlu0 %996
        %v998 = vrcp.pop %v997
        %v999 = vmul.f32 %v994, %v998
        %s1000 = scalar_lea.vmem %s8, 16
        %v1001 = vld [vmem:[%s1000] sm:$0xf]
        %v1002 = vld [vmem:[%s1000 + $0x4] sm:$0xf]
        %v1003 = vld [vmem:[%s1000 + $0x8] sm:$0xf]
        %v1004 = vld [vmem:[%s1000 + $0xc] sm:$0xf]
        %v1009 = vunpack.c.l.b16 %v1001
        %v1010 = vunpack.c.l.b16 %v1002
        %v1011 = vunpack.c.l.b16 %v1003
        %v1012 = vunpack.c.l.b16 %v1004
        %v1013 = vpack.c.b16 %v1010, %v1009
        %v1014 = vpack.c.b16 %v1012, %v1011
        %1017 = vmatpush.bf16.msra.mxu0 0
        %1018 = vmatpush.bf16.msra.mxu0 0
        %1019 = vmatpush.bf16.msra.mxu0 0
        %1020 = vmatpush.bf16.msra.mxu0 0
        %1021 = vmatpush.bf16.msra.mxu0 0
        %1022 = vmatpush.bf16.msra.mxu0 0
        %1023 = vmatpush.bf16.msra.mxu0 %v1014
        %1024 = vmatpush.bf16.msra.mxu0 %v1013
        %1025 = vmatmul.bf16.gmra.mxu0 %v785
        %v1026 = vpop.f32.mrf.mxu0
        %v1027 = vadd.f32 0.0, %v1026
        %v1028 = vpop.f32.mrf.mxu0
        %1029 = vdwg.mxu0
        %v1030 = vpack.c.bf16 %v999, %v999
        %v1031 = vpack.c.bf16 %v1027, %v1027
        %v1033 = vsel %vm739, %v1030, 0
        %v1036 = vsel %vm743, %v1031, 0
        %1038 = vmatpush.bf16.msra.mxu0 0
        %1039 = vmatpush.bf16.msra.mxu0 0
        %1040 = vmatpush.bf16.msra.mxu0 0
        %1041 = vmatpush.bf16.msra.mxu0 0
        %1042 = vmatpush.bf16.msra.mxu0 0
        %1043 = vmatpush.bf16.msra.mxu0 0
        %1044 = vmatpush.bf16.msra.mxu0 0
        %1045 = vmatpush.bf16.msra.mxu0 %v1036
        %1046 = vmatmul.bf16.gmra.mxu0 %v1033
        %v1047 = vpop.f32.mrf.mxu0
        %v1048 = vadd.f32 0.0, %v1047
        %v1049 = vpop.f32.mrf.mxu0
        %1050 = vdwg.mxu0
        %v1052 = vsel %vm739, %v896, 0
        %v1055 = vsel %vm743, %v897, 0
        %1057 = vmatpush.bf16.msra.mxu0 0
        %1058 = vmatpush.bf16.msra.mxu0 0
        %1059 = vmatpush.bf16.msra.mxu0 0
        %1060 = vmatpush.bf16.msra.mxu0 0
        %1061 = vmatpush.bf16.msra.mxu0 0
        %1062 = vmatpush.bf16.msra.mxu0 0
        %1063 = vmatpush.bf16.msra.mxu0 0
        %1064 = vmatpush.bf16.msra.mxu0 %v1055
        %1065 = vmatmul.bf16.gmra.mxu0 %v1052
        %v1066 = vpop.f32.mrf.mxu0
        %v1067 = vadd.f32 %v1048, %v1066
        %v1068 = vpop.f32.mrf.mxu0
        %1069 = vdwg.mxu0
        %s1070 = scalar_lea.vmem %s4, 32
        %v1071 = vld [vmem:[%s1070] sm:$0xf]
        %v1072 = vld [vmem:[%s1070 + $0x4] sm:$0xf]
        %v1073 = vld [vmem:[%s1070 + $0x8] sm:$0xf]
        %v1074 = vld [vmem:[%s1070 + $0xc] sm:$0xf]
        %s1075 = scalar_lea.vmem %s5, 2
        %v1076 = vld [vmem:[%s1075] sm:$0x1]
        %v1078 = vperm.slane %v1076, 0
        %v1084 = vunpack.c.l.b16 %v1071
        %v1085 = vunpack.c.l.b16 %v1072
        %v1086 = vunpack.c.l.b16 %v1073
        %v1087 = vunpack.c.l.b16 %v1074
        %v1088 = vpack.c.b16 %v1085, %v1084
        %v1089 = vpack.c.b16 %v1087, %v1086
        %1092 = vmatpush.bf16.msra.mxu0 0
        %1093 = vmatpush.bf16.msra.mxu0 0
        %1094 = vmatpush.bf16.msra.mxu0 0
        %1095 = vmatpush.bf16.msra.mxu0 0
        %1096 = vmatpush.bf16.msra.mxu0 0
        %1097 = vmatpush.bf16.msra.mxu0 0
        %1098 = vmatpush.bf16.msra.mxu0 %v1089
        %1099 = vmatpush.bf16.msra.mxu0 %v1088
        %1100 = vmatmul.bf16.gmra.mxu0 %v785
        %v1101 = vpop.f32.mrf.mxu0
        %v1102 = vadd.f32 %v1078, %v1101
        %v1103 = vpop.f32.mrf.mxu0
        %1104 = vdwg.mxu0
        %s1105 = scalar_lea.vmem %s6, 32
        %v1106 = vld [vmem:[%s1105] sm:$0xf]
        %v1107 = vld [vmem:[%s1105 + $0x4] sm:$0xf]
        %v1108 = vld [vmem:[%s1105 + $0x8] sm:$0xf]
        %v1109 = vld [vmem:[%s1105 + $0xc] sm:$0xf]
        %s1110 = scalar_lea.vmem %s7, 2
        %v1111 = vld [vmem:[%s1110] sm:$0x1]
        %v1113 = vperm.slane %v1111, 0
        %v1119 = vunpack.c.l.b16 %v1106
        %v1120 = vunpack.c.l.b16 %v1107
        %v1121 = vunpack.c.l.b16 %v1108
        %v1122 = vunpack.c.l.b16 %v1109
        %v1123 = vpack.c.b16 %v1120, %v1119
        %v1124 = vpack.c.b16 %v1122, %v1121
        %1127 = vmatpush.bf16.msra.mxu0 0
        %1128 = vmatpush.bf16.msra.mxu0 0
        %1129 = vmatpush.bf16.msra.mxu0 0
        %1130 = vmatpush.bf16.msra.mxu0 0
        %1131 = vmatpush.bf16.msra.mxu0 0
        %1132 = vmatpush.bf16.msra.mxu0 0
        %1133 = vmatpush.bf16.msra.mxu0 %v1124
        %1134 = vmatpush.bf16.msra.mxu0 %v1123
        %1135 = vmatmul.bf16.gmra.mxu0 %v785
        %v1136 = vpop.f32.mrf.mxu0
        %v1137 = vadd.f32 %v1113, %v1136
        %v1138 = vpop.f32.mrf.mxu0
        %1139 = vdwg.mxu0
        %v1140 = vpack.c.bf16 %v1102, %v1102
        %v1141 = vpack.c.bf16 %v1137, %v1137
        %v1143 = vsel %vm835, %v1140, 0
        %v1146 = vsel %vm835, %v1141, 0
        %1148 = vmatpush.bf16.xpose.msra.mxu0 0
        %1149 = vmatpush.bf16.xpose.msra.mxu0 0
        %1150 = vmatpush.bf16.xpose.msra.mxu0 0
        %1151 = vmatpush.bf16.xpose.msra.mxu0 0
        %1152 = vmatpush.bf16.xpose.msra.mxu0 0
        %1153 = vmatpush.bf16.xpose.msra.mxu0 0
        %1154 = vmatpush.bf16.xpose.msra.mxu0 0
        %1155 = vmatpush.bf16.xpose.msra.mxu0 %v1146
        %1156 = vmatmul.bf16.gmra.mxu0 %v1143
        %v1157 = vpop.f32.mrf.mxu0
        %v1158 = vadd.f32 0.0, %v1157
        %v1159 = vpop.f32.mrf.mxu0
        %1160 = vdwg.mxu0
        %v1161 = vsel %vm855, %v1158, -inf
        %1162 = vmax.xlane.f32.xlu0 %v1161
        %v1163 = vpop.xlane.xlu0 %1162
        %v1164 = vsub.f32 %v1158, %v1163
        %v1165 = vmul.f32 %v1164, 1.442695
        %v1166 = vpow.pop %v1165
        %v1167 = vsel %vm855, %v1166, 0.0
        %1168 = vadd.xlane.f32.xlu0 %v1167
        %v1169 = vpop.xlane.xlu0 %1168
        %v1170 = vrcp.pop %v1169
        %v1171 = vmul.f32 %v1166, %v1170
        %s1172 = scalar_lea.vmem %s8, 32
        %v1173 = vld [vmem:[%s1172] sm:$0xf]
        %v1174 = vld [vmem:[%s1172 + $0x4] sm:$0xf]
        %v1175 = vld [vmem:[%s1172 + $0x8] sm:$0xf]
        %v1176 = vld [vmem:[%s1172 + $0xc] sm:$0xf]
        %v1181 = vunpack.c.l.b16 %v1173
        %v1182 = vunpack.c.l.b16 %v1174
        %v1183 = vunpack.c.l.b16 %v1175
        %v1184 = vunpack.c.l.b16 %v1176
        %v1185 = vpack.c.b16 %v1182, %v1181
        %v1186 = vpack.c.b16 %v1184, %v1183
        %1189 = vmatpush.bf16.msra.mxu0 0
        %1190 = vmatpush.bf16.msra.mxu0 0
        %1191 = vmatpush.bf16.msra.mxu0 0
        %1192 = vmatpush.bf16.msra.mxu0 0
        %1193 = vmatpush.bf16.msra.mxu0 0
        %1194 = vmatpush.bf16.msra.mxu0 0
        %1195 = vmatpush.bf16.msra.mxu0 %v1186
        %1196 = vmatpush.bf16.msra.mxu0 %v1185
        %1197 = vmatmul.bf16.gmra.mxu0 %v785
        %v1198 = vpop.f32.mrf.mxu0
        %v1199 = vadd.f32 0.0, %v1198
        %v1200 = vpop.f32.mrf.mxu0
        %1201 = vdwg.mxu0
        %v1202 = vpack.c.bf16 %v1171, %v1171
        %v1203 = vpack.c.bf16 %v1199, %v1199
        %v1205 = vsel %vm739, %v1202, 0
        %v1208 = vsel %vm743, %v1203, 0
        %1210 = vmatpush.bf16.msra.mxu0 0
        %1211 = vmatpush.bf16.msra.mxu0 0
        %1212 = vmatpush.bf16.msra.mxu0 0
        %1213 = vmatpush.bf16.msra.mxu0 0
        %1214 = vmatpush.bf16.msra.mxu0 0
        %1215 = vmatpush.bf16.msra.mxu0 0
        %1216 = vmatpush.bf16.msra.mxu0 0
        %1217 = vmatpush.bf16.msra.mxu0 %v1208
        %1218 = vmatmul.bf16.gmra.mxu0 %v1205
        %v1219 = vpop.f32.mrf.mxu0
        %v1220 = vadd.f32 0.0, %v1219
        %v1221 = vpop.f32.mrf.mxu0
        %1222 = vdwg.mxu0
        %v1223 = vadd.f32 %v1067, %v1220
        %s1224 = scalar_lea.vmem %s4, 48
        %v1225 = vld [vmem:[%s1224] sm:$0xf]
        %v1226 = vld [vmem:[%s1224 + $0x4] sm:$0xf]
        %v1227 = vld [vmem:[%s1224 + $0x8] sm:$0xf]
        %v1228 = vld [vmem:[%s1224 + $0xc] sm:$0xf]
        %s1229 = scalar_lea.vmem %s5, 3
        %v1230 = vld [vmem:[%s1229] sm:$0x1]
        %v1232 = vperm.slane %v1230, 0
        %v1238 = vunpack.c.l.b16 %v1225
        %v1239 = vunpack.c.l.b16 %v1226
        %v1240 = vunpack.c.l.b16 %v1227
        %v1241 = vunpack.c.l.b16 %v1228
        %v1242 = vpack.c.b16 %v1239, %v1238
        %v1243 = vpack.c.b16 %v1241, %v1240
        %1246 = vmatpush.bf16.msra.mxu0 0
        %1247 = vmatpush.bf16.msra.mxu0 0
        %1248 = vmatpush.bf16.msra.mxu0 0
        %1249 = vmatpush.bf16.msra.mxu0 0
        %1250 = vmatpush.bf16.msra.mxu0 0
        %1251 = vmatpush.bf16.msra.mxu0 0
        %1252 = vmatpush.bf16.msra.mxu0 %v1243
        %1253 = vmatpush.bf16.msra.mxu0 %v1242
        %1254 = vmatmul.bf16.gmra.mxu0 %v785
        %v1255 = vpop.f32.mrf.mxu0
        %v1256 = vadd.f32 %v1232, %v1255
        %v1257 = vpop.f32.mrf.mxu0
        %1258 = vdwg.mxu0
        %s1259 = scalar_lea.vmem %s6, 48
        %v1260 = vld [vmem:[%s1259] sm:$0xf]
        %v1261 = vld [vmem:[%s1259 + $0x4] sm:$0xf]
        %v1262 = vld [vmem:[%s1259 + $0x8] sm:$0xf]
        %v1263 = vld [vmem:[%s1259 + $0xc] sm:$0xf]
        %s1264 = scalar_lea.vmem %s7, 3
        %v1265 = vld [vmem:[%s1264] sm:$0x1]
        %v1267 = vperm.slane %v1265, 0
        %v1273 = vunpack.c.l.b16 %v1260
        %v1274 = vunpack.c.l.b16 %v1261
        %v1275 = vunpack.c.l.b16 %v1262
        %v1276 = vunpack.c.l.b16 %v1263
        %v1277 = vpack.c.b16 %v1274, %v1273
        %v1278 = vpack.c.b16 %v1276, %v1275
        %1281 = vmatpush.bf16.msra.mxu0 0
        %1282 = vmatpush.bf16.msra.mxu0 0
        %1283 = vmatpush.bf16.msra.mxu0 0
        %1284 = vmatpush.bf16.msra.mxu0 0
        %1285 = vmatpush.bf16.msra.mxu0 0
        %1286 = vmatpush.bf16.msra.mxu0 0
        %1287 = vmatpush.bf16.msra.mxu0 %v1278
        %1288 = vmatpush.bf16.msra.mxu0 %v1277
        %1289 = vmatmul.bf16.gmra.mxu0 %v785
        %v1290 = vpop.f32.mrf.mxu0
        %v1291 = vadd.f32 %v1267, %v1290
        %v1292 = vpop.f32.mrf.mxu0
        %1293 = vdwg.mxu0
        %v1294 = vpack.c.bf16 %v1256, %v1256
        %v1295 = vpack.c.bf16 %v1291, %v1291
        %v1297 = vsel %vm835, %v1294, 0
        %v1300 = vsel %vm835, %v1295, 0
        %1302 = vmatpush.bf16.xpose.msra.mxu0 0
        %1303 = vmatpush.bf16.xpose.msra.mxu0 0
        %1304 = vmatpush.bf16.xpose.msra.mxu0 0
        %1305 = vmatpush.bf16.xpose.msra.mxu0 0
        %1306 = vmatpush.bf16.xpose.msra.mxu0 0
        %1307 = vmatpush.bf16.xpose.msra.mxu0 0
        %1308 = vmatpush.bf16.xpose.msra.mxu0 0
        %1309 = vmatpush.bf16.xpose.msra.mxu0 %v1300
        %1310 = vmatmul.bf16.gmra.mxu0 %v1297
        %v1311 = vpop.f32.mrf.mxu0
        %v1312 = vadd.f32 0.0, %v1311
        %v1313 = vpop.f32.mrf.mxu0
        %1314 = vdwg.mxu0
        %v1315 = vsel %vm855, %v1312, -inf
        %1316 = vmax.xlane.f32.xlu0 %v1315
        %v1317 = vpop.xlane.xlu0 %1316
        %v1318 = vsub.f32 %v1312, %v1317
        %v1319 = vmul.f32 %v1318, 1.442695
        %v1320 = vpow.pop %v1319
        %v1321 = vsel %vm855, %v1320, 0.0
        %1322 = vadd.xlane.f32.xlu0 %v1321
        %v1323 = vpop.xlane.xlu0 %1322
        %v1324 = vrcp.pop %v1323
        %v1325 = vmul.f32 %v1320, %v1324
        %s1326 = scalar_lea.vmem %s8, 48
        %v1327 = vld [vmem:[%s1326] sm:$0xf]
        %v1328 = vld [vmem:[%s1326 + $0x4] sm:$0xf]
        %v1329 = vld [vmem:[%s1326 + $0x8] sm:$0xf]
        %v1330 = vld [vmem:[%s1326 + $0xc] sm:$0xf]
        %v1335 = vunpack.c.l.b16 %v1327
        %v1336 = vunpack.c.l.b16 %v1328
        %v1337 = vunpack.c.l.b16 %v1329
        %v1338 = vunpack.c.l.b16 %v1330
        %v1339 = vpack.c.b16 %v1336, %v1335
        %v1340 = vpack.c.b16 %v1338, %v1337
        %1343 = vmatpush.bf16.msra.mxu0 0
        %1344 = vmatpush.bf16.msra.mxu0 0
        %1345 = vmatpush.bf16.msra.mxu0 0
        %1346 = vmatpush.bf16.msra.mxu0 0
        %1347 = vmatpush.bf16.msra.mxu0 0
        %1348 = vmatpush.bf16.msra.mxu0 0
        %1349 = vmatpush.bf16.msra.mxu0 %v1340
        %1350 = vmatpush.bf16.msra.mxu0 %v1339
        %1351 = vmatmul.bf16.gmra.mxu0 %v785
        %v1352 = vpop.f32.mrf.mxu0
        %v1353 = vadd.f32 0.0, %v1352
        %v1354 = vpop.f32.mrf.mxu0
        %1355 = vdwg.mxu0
        %v1356 = vpack.c.bf16 %v1325, %v1325
        %v1357 = vpack.c.bf16 %v1353, %v1353
        %v1359 = vsel %vm739, %v1356, 0
        %v1362 = vsel %vm743, %v1357, 0
        %1364 = vmatpush.bf16.msra.mxu0 0
        %1365 = vmatpush.bf16.msra.mxu0 0
        %1366 = vmatpush.bf16.msra.mxu0 0
        %1367 = vmatpush.bf16.msra.mxu0 0
        %1368 = vmatpush.bf16.msra.mxu0 0
        %1369 = vmatpush.bf16.msra.mxu0 0
        %1370 = vmatpush.bf16.msra.mxu0 0
        %1371 = vmatpush.bf16.msra.mxu0 %v1362
        %1372 = vmatmul.bf16.gmra.mxu0 %v1359
        %v1373 = vpop.f32.mrf.mxu0
        %v1374 = vadd.f32 0.0, %v1373
        %v1375 = vpop.f32.mrf.mxu0
        %1376 = vdwg.mxu0
        %v1377 = vadd.f32 %v1223, %v1374
        %v1378 = vadd.f32 %v761, %v1377
        %v1379 = vld [vmem:[%s9] sm:$0x1]
        %v1381 = vperm.slane %v1379, 0
        %v1383 = vadd.f32 %v1378, %v1381
        %v1384 = vld [vmem:[%s10] sm:$0x1]
        %v1385 = vld [vmem:[%s11] sm:$0x1]
        %vm1386 = vcmask 257024
        %v1387 = vsel %vm1386, %v1383, 0.0
        %1388 = vadd.xlane.f32.xlu0 %v1387
        %v1389 = vpop.xlane.xlu0 %1388
        %v1390 = vrcp.pop 32.0
        %v1391 = vmul.f32 32.0, %v1390
        %v1392 = vsub.f32 1.0, %v1391
        %v1393 = vmul.f32 %v1390, %v1392
        %v1394 = vadd.f32 %v1390, %v1393
        %vm1395 = vweird.f32 %v1390
        %v1396 = vsel %vm1395, %v1390, %v1394
        %v1397 = vmul.f32 %v1389, %v1396
        %v1398 = vsub.f32 %v1383, %v1397
        %v1399 = vmul.f32 %v1398, %v1398
        %v1400 = vsel %vm1386, %v1399, 0.0
        %1401 = vadd.xlane.f32.xlu0 %v1400
        %v1402 = vpop.xlane.xlu0 %1401
        %v1403 = vmul.f32 %v1402, %v1396
        %v1404 = vadd.f32 %v1403, 1e-05
        %v1405 = vrsqrt.pop %v1404
        %v1406 = vmul.f32 %v1405, %v1404
        %v1407 = vmul.f32 %v1406, %v1405
        %v1408 = vmul.f32 0.5, %v1407
        %v1409 = vsub.f32 1.5, %v1408
        %v1410 = vmul.f32 %v1405, %v1409
        %vm1411 = vweird.f32 %v1404
        %vm1412 = vweird.f32 %v1405
        %vm1413 = vmor %vm1411, %vm1412
        %v1414 = vsel %vm1413, %v1405, %v1410
        %v1415 = vmul.f32 %v1398, %v1414
        %v1417 = vperm.slane %v1384, 0
        %v1419 = vmul.f32 %v1415, %v1417
        %v1421 = vperm.slane %v1385, 0
        %v1423 = vadd.f32 %v1419, %v1421
        %v1424 = vpack.c.bf16 %v1423, %v1423
        %v1425 = vld [vmem:[%s12] sm:$0xf]
        %v1426 = vld [vmem:[%s12 + $0x4] sm:$0xf]
        %v1427 = vld [vmem:[%s12 + $0x8] sm:$0xf]
        %v1428 = vld [vmem:[%s12 + $0xc] sm:$0xf]
        %v1429 = vld [vmem:[%s13] sm:$0x1]
        %v1431 = vperm.slane %v1429, 0
        %v1437 = vunpack.c.l.b16 %v1425
        %v1438 = vunpack.c.l.b16 %v1426
        %v1439 = vunpack.c.l.b16 %v1427
        %v1440 = vunpack.c.l.b16 %v1428
        %v1441 = vpack.c.b16 %v1438, %v1437
        %v1442 = vpack.c.b16 %v1440, %v1439
        %v1446 = vsel %vm783, %v1424, 0
        %1448 = vmatpush.bf16.msra.mxu0 0
        %1449 = vmatpush.bf16.msra.mxu0 0
        %1450 = vmatpush.bf16.msra.mxu0 0
        %1451 = vmatpush.bf16.msra.mxu0 0
        %1452 = vmatpush.bf16.msra.mxu0 0
        %1453 = vmatpush.bf16.msra.mxu0 0
        %1454 = vmatpush.bf16.msra.mxu0 %v1442
        %1455 = vmatpush.bf16.msra.mxu0 %v1441
        %1456 = vmatmul.bf16.gmra.mxu0 %v1446
        %v1457 = vpop.f32.mrf.mxu0
        %v1458 = vadd.f32 %v1431, %v1457
        %v1459 = vpop.f32.mrf.mxu0
        %1460 = vdwg.mxu0
        %v1461 = vmul.f32 %v1458, 0.5
        %v1462 = vmul.f32 %v1458, 0.70710677
        %v1463 = vmul.f32 %v1462, %v1462
        %v1464 = vmin.f32 16.0, %v1463
        %v1465 = vmul.f32 %v1464, 2.1237322e-06
        %v1466 = vadd.f32 %v1465, 0.00028619796
        %v1467 = vmul.f32 %v1464, %v1466
        %v1468 = vadd.f32 %v1467, 0.0036580483
        %v1469 = vmul.f32 %v1464, %v1468
        %v1470 = vadd.f32 %v1469, 0.05243302
        %v1471 = vmul.f32 %v1464, %v1470
        %v1472 = vadd.f32 %v1471, 0.18741608
        %v1473 = vmul.f32 %v1464, %v1472
        %v1474 = vadd.f32 %v1473, 1.1283791
        %v1475 = vmul.f32 %v1462, %v1474
        %v1476 = vmul.f32 %v1464, 3.8918573e-05
        %v1477 = vadd.f32 %v1476, 0.001143296
        %v1478 = vmul.f32 %v1464, %v1477
        %v1479 = vadd.f32 %v1478, 0.014752088
        %v1480 = vmul.f32 %v1464, %v1479
        %v1481 = vadd.f32 %v1480, 0.112945676
        %v1482 = vmul.f32 %v1464, %v1481
        %v1483 = vadd.f32 %v1482, 0.4994258
        %v1484 = vmul.f32 %v1464, %v1483
        %v1485 = vadd.f32 %v1484, 1.0
        %v1486 = vrcp.pop %v1485
        %v1487 = vmul.f32 %v1485, %v1486
        %v1488 = vsub.f32 1.0, %v1487
        %v1489 = vmul.f32 %v1486, %v1488
        %v1490 = vadd.f32 %v1486, %v1489
        %vm1491 = vweird.f32 %v1485
        %vm1492 = vweird.f32 %v1486
        %vm1493 = vmor %vm1491, %vm1492
        %v1494 = vsel %vm1493, %v1486, %v1490
        %v1495 = vand.u32 2147483647, %v1485
        %vm1496 = vcmp.eq.f32.partialorder %v1495, 8.507059e+37
        %v1497 = vand.u32 %v1485, 2147483648
        %v1498 = vor.u32 1.1754944e-38, %v1497
        %v1499 = vsel %vm1496, %v1498, %v1494
        %v1500 = vmul.f32 %v1475, %v1499
        %v1501 = vmin.f32 %v1500, 1.0
        %v1502 = vmax.f32 %v1501, -1.0
        %v1503 = vadd.f32 %v1502, 1.0
        %v1504 = vmul.f32 %v1461, %v1503
        %v1505 = vpack.c.bf16 %v1504, %v1504
        %v1506 = vld [vmem:[%s14] sm:$0xf]
        %v1507 = vld [vmem:[%s14 + $0x4] sm:$0xf]
        %v1508 = vld [vmem:[%s14 + $0x8] sm:$0xf]
        %v1509 = vld [vmem:[%s14 + $0xc] sm:$0xf]
        %v1510 = vld [vmem:[%s14 + $0x10] sm:$0xf]
        %v1511 = vld [vmem:[%s14 + $0x14] sm:$0xf]
        %v1512 = vld [vmem:[%s14 + $0x18] sm:$0xf]
        %v1513 = vld [vmem:[%s14 + $0x1c] sm:$0xf]
        %v1514 = vld [vmem:[%s14 + $0x20] sm:$0xf]
        %v1515 = vld [vmem:[%s14 + $0x24] sm:$0xf]
        %v1516 = vld [vmem:[%s14 + $0x28] sm:$0xf]
        %v1517 = vld [vmem:[%s14 + $0x2c] sm:$0xf]
        %v1518 = vld [vmem:[%s14 + $0x30] sm:$0xf]
        %v1519 = vld [vmem:[%s14 + $0x34] sm:$0xf]
        %v1520 = vld [vmem:[%s14 + $0x38] sm:$0xf]
        %v1521 = vld [vmem:[%s14 + $0x3c] sm:$0xf]
        %v1522 = vld [vmem:[%s15] sm:$0x1]
        %v1524 = vperm.slane %v1522, 0
        %v1542 = vunpack.c.l.b16 %v1506
        %v1543 = vunpack.c.l.b16 %v1507
        %v1544 = vunpack.c.l.b16 %v1508
        %v1545 = vunpack.c.l.b16 %v1509
        %v1546 = vunpack.c.l.b16 %v1510
        %v1547 = vunpack.c.l.b16 %v1511
        %v1548 = vunpack.c.l.b16 %v1512
        %v1549 = vunpack.c.l.b16 %v1513
        %v1550 = vunpack.c.l.b16 %v1514
        %v1551 = vunpack.c.l.b16 %v1515
        %v1552 = vunpack.c.l.b16 %v1516
        %v1553 = vunpack.c.l.b16 %v1517
        %v1554 = vunpack.c.l.b16 %v1518
        %v1555 = vunpack.c.l.b16 %v1519
        %v1556 = vunpack.c.l.b16 %v1520
        %v1557 = vunpack.c.l.b16 %v1521
        %v1558 = vpack.c.b16 %v1543, %v1542
        %v1559 = vpack.c.b16 %v1545, %v1544
        %v1560 = vpack.c.b16 %v1547, %v1546
        %v1561 = vpack.c.b16 %v1549, %v1548
        %v1562 = vpack.c.b16 %v1551, %v1550
        %v1563 = vpack.c.b16 %v1553, %v1552
        %v1564 = vpack.c.b16 %v1555, %v1554
        %v1565 = vpack.c.b16 %v1557, %v1556
        %1574 = vmatpush.bf16.msra.mxu0 %v1565
        %1575 = vmatpush.bf16.msra.mxu0 %v1564
        %1576 = vmatpush.bf16.msra.mxu0 %v1563
        %1577 = vmatpush.bf16.msra.mxu0 %v1562
        %1578 = vmatpush.bf16.msra.mxu0 %v1561
        %1579 = vmatpush.bf16.msra.mxu0 %v1560
        %1580 = vmatpush.bf16.msra.mxu0 %v1559
        %1581 = vmatpush.bf16.msra.mxu0 %v1558
        %1582 = vmatmul.bf16.gmra.mxu0 %v1505
        %v1583 = vpop.f32.mrf.mxu0
        %v1584 = vadd.f32 %v1524, %v1583
        %v1585 = vpop.f32.mrf.mxu0
        %1586 = vdwg.mxu0
        %v1587 = vadd.f32 %v1423, %v1584
        %v1588 = vld [vmem:[%s16] sm:$0x1]
        %v1589 = vld [vmem:[%s17] sm:$0x1]
        %v1590 = vsel %vm1386, %v1587, 0.0
        %1591 = vadd.xlane.f32.xlu0 %v1590
        %v1592 = vpop.xlane.xlu0 %1591
        %v1593 = vmul.f32 %v1592, %v1396
        %v1594 = vsub.f32 %v1587, %v1593
        %v1595 = vmul.f32 %v1594, %v1594
        %v1596 = vsel %vm1386, %v1595, 0.0
        %1597 = vadd.xlane.f32.xlu0 %v1596
        %v1598 = vpop.xlane.xlu0 %1597
        %v1599 = vmul.f32 %v1598, %v1396
        %v1600 = vadd.f32 %v1599, 1e-05
        %v1601 = vrsqrt.pop %v1600
        %v1602 = vmul.f32 %v1601, %v1600
        %v1603 = vmul.f32 %v1602, %v1601
        %v1604 = vmul.f32 0.5, %v1603
        %v1605 = vsub.f32 1.5, %v1604
        %v1606 = vmul.f32 %v1601, %v1605
        %vm1607 = vweird.f32 %v1600
        %vm1608 = vweird.f32 %v1601
        %vm1609 = vmor %vm1607, %vm1608
        %v1610 = vsel %vm1609, %v1601, %v1606
        %v1611 = vmul.f32 %v1594, %v1610
        %v1613 = vperm.slane %v1588, 0
        %v1615 = vmul.f32 %v1611, %v1613
        %v1617 = vperm.slane %v1589, 0
        %v1619 = vadd.f32 %v1615, %v1617
        %v1620 = vpack.c.bf16 %v1619, %v1619
        %s1621 = scalar_lea.vmem %s4, 64
        %v1622 = vld [vmem:[%s1621] sm:$0xf]
        %v1623 = vld [vmem:[%s1621 + $0x4] sm:$0xf]
        %v1624 = vld [vmem:[%s1621 + $0x8] sm:$0xf]
        %v1625 = vld [vmem:[%s1621 + $0xc] sm:$0xf]
        %s1626 = scalar_lea.vmem %s5, 4
        %v1627 = vld [vmem:[%s1626] sm:$0x1]
        %v1629 = vperm.slane %v1627, 0
        %v1635 = vunpack.c.l.b16 %v1622
        %v1636 = vunpack.c.l.b16 %v1623
        %v1637 = vunpack.c.l.b16 %v1624
        %v1638 = vunpack.c.l.b16 %v1625
        %v1639 = vpack.c.b16 %v1636, %v1635
        %v1640 = vpack.c.b16 %v1638, %v1637
        %v1644 = vsel %vm783, %v1620, 0
        %1646 = vmatpush.bf16.msra.mxu0 0
        %1647 = vmatpush.bf16.msra.mxu0 0
        %1648 = vmatpush.bf16.msra.mxu0 0
        %1649 = vmatpush.bf16.msra.mxu0 0
        %1650 = vmatpush.bf16.msra.mxu0 0
        %1651 = vmatpush.bf16.msra.mxu0 0
        %1652 = vmatpush.bf16.msra.mxu0 %v1640
        %1653 = vmatpush.bf16.msra.mxu0 %v1639
        %1654 = vmatmul.bf16.gmra.mxu0 %v1644
        %v1655 = vpop.f32.mrf.mxu0
        %v1656 = vadd.f32 %v1629, %v1655
        %v1657 = vpop.f32.mrf.mxu0
        %1658 = vdwg.mxu0
        %s1659 = scalar_lea.vmem %s6, 64
        %v1660 = vld [vmem:[%s1659] sm:$0xf]
        %v1661 = vld [vmem:[%s1659 + $0x4] sm:$0xf]
        %v1662 = vld [vmem:[%s1659 + $0x8] sm:$0xf]
        %v1663 = vld [vmem:[%s1659 + $0xc] sm:$0xf]
        %s1664 = scalar_lea.vmem %s7, 4
        %v1665 = vld [vmem:[%s1664] sm:$0x1]
        %v1667 = vperm.slane %v1665, 0
        %v1673 = vunpack.c.l.b16 %v1660
        %v1674 = vunpack.c.l.b16 %v1661
        %v1675 = vunpack.c.l.b16 %v1662
        %v1676 = vunpack.c.l.b16 %v1663
        %v1677 = vpack.c.b16 %v1674, %v1673
        %v1678 = vpack.c.b16 %v1676, %v1675
        %1681 = vmatpush.bf16.msra.mxu0 0
        %1682 = vmatpush.bf16.msra.mxu0 0
        %1683 = vmatpush.bf16.msra.mxu0 0
        %1684 = vmatpush.bf16.msra.mxu0 0
        %1685 = vmatpush.bf16.msra.mxu0 0
        %1686 = vmatpush.bf16.msra.mxu0 0
        %1687 = vmatpush.bf16.msra.mxu0 %v1678
        %1688 = vmatpush.bf16.msra.mxu0 %v1677
        %1689 = vmatmul.bf16.gmra.mxu0 %v1644
        %v1690 = vpop.f32.mrf.mxu0
        %v1691 = vadd.f32 %v1667, %v1690
        %v1692 = vpop.f32.mrf.mxu0
        %1693 = vdwg.mxu0
        %v1694 = vpack.c.bf16 %v1656, %v1656
        %v1695 = vpack.c.bf16 %v1691, %v1691
        %v1697 = vsel %vm835, %v1694, 0
        %v1700 = vsel %vm835, %v1695, 0
        %1702 = vmatpush.bf16.xpose.msra.mxu0 0
        %1703 = vmatpush.bf16.xpose.msra.mxu0 0
        %1704 = vmatpush.bf16.xpose.msra.mxu0 0
        %1705 = vmatpush.bf16.xpose.msra.mxu0 0
        %1706 = vmatpush.bf16.xpose.msra.mxu0 0
        %1707 = vmatpush.bf16.xpose.msra.mxu0 0
        %1708 = vmatpush.bf16.xpose.msra.mxu0 0
        %1709 = vmatpush.bf16.xpose.msra.mxu0 %v1700
        %1710 = vmatmul.bf16.gmra.mxu0 %v1697
        %v1711 = vpop.f32.mrf.mxu0
        %v1712 = vadd.f32 0.0, %v1711
        %v1713 = vpop.f32.mrf.mxu0
        %1714 = vdwg.mxu0
        %v1715 = vsel %vm855, %v1712, -inf
        %1716 = vmax.xlane.f32.xlu0 %v1715
        %v1717 = vpop.xlane.xlu0 %1716
        %v1718 = vsub.f32 %v1712, %v1717
        %v1719 = vmul.f32 %v1718, 1.442695
        %v1720 = vpow.pop %v1719
        %v1721 = vsel %vm855, %v1720, 0.0
        %1722 = vadd.xlane.f32.xlu0 %v1721
        %v1723 = vpop.xlane.xlu0 %1722
        %v1724 = vrcp.pop %v1723
        %v1725 = vmul.f32 %v1720, %v1724
        %s1726 = scalar_lea.vmem %s8, 64
        %v1727 = vld [vmem:[%s1726] sm:$0xf]
        %v1728 = vld [vmem:[%s1726 + $0x4] sm:$0xf]
        %v1729 = vld [vmem:[%s1726 + $0x8] sm:$0xf]
        %v1730 = vld [vmem:[%s1726 + $0xc] sm:$0xf]
        %v1735 = vunpack.c.l.b16 %v1727
        %v1736 = vunpack.c.l.b16 %v1728
        %v1737 = vunpack.c.l.b16 %v1729
        %v1738 = vunpack.c.l.b16 %v1730
        %v1739 = vpack.c.b16 %v1736, %v1735
        %v1740 = vpack.c.b16 %v1738, %v1737
        %1743 = vmatpush.bf16.msra.mxu0 0
        %1744 = vmatpush.bf16.msra.mxu0 0
        %1745 = vmatpush.bf16.msra.mxu0 0
        %1746 = vmatpush.bf16.msra.mxu0 0
        %1747 = vmatpush.bf16.msra.mxu0 0
        %1748 = vmatpush.bf16.msra.mxu0 0
        %1749 = vmatpush.bf16.msra.mxu0 %v1740
        %1750 = vmatpush.bf16.msra.mxu0 %v1739
        %1751 = vmatmul.bf16.gmra.mxu0 %v1644
        %v1752 = vpop.f32.mrf.mxu0
        %v1753 = vadd.f32 0.0, %v1752
        %v1754 = vpop.f32.mrf.mxu0
        %1755 = vdwg.mxu0
        %v1756 = vpack.c.bf16 %v1725, %v1725
        %v1757 = vpack.c.bf16 %v1753, %v1753
        %s1758 = scalar_lea.vmem %s4, 80
        %v1759 = vld [vmem:[%s1758] sm:$0xf]
        %v1760 = vld [vmem:[%s1758 + $0x4] sm:$0xf]
        %v1761 = vld [vmem:[%s1758 + $0x8] sm:$0xf]
        %v1762 = vld [vmem:[%s1758 + $0xc] sm:$0xf]
        %s1763 = scalar_lea.vmem %s5, 5
        %v1764 = vld [vmem:[%s1763] sm:$0x1]
        %v1766 = vperm.slane %v1764, 0
        %v1772 = vunpack.c.l.b16 %v1759
        %v1773 = vunpack.c.l.b16 %v1760
        %v1774 = vunpack.c.l.b16 %v1761
        %v1775 = vunpack.c.l.b16 %v1762
        %v1776 = vpack.c.b16 %v1773, %v1772
        %v1777 = vpack.c.b16 %v1775, %v1774
        %1780 = vmatpush.bf16.msra.mxu0 0
        %1781 = vmatpush.bf16.msra.mxu0 0
        %1782 = vmatpush.bf16.msra.mxu0 0
        %1783 = vmatpush.bf16.msra.mxu0 0
        %1784 = vmatpush.bf16.msra.mxu0 0
        %1785 = vmatpush.bf16.msra.mxu0 0
        %1786 = vmatpush.bf16.msra.mxu0 %v1777
        %1787 = vmatpush.bf16.msra.mxu0 %v1776
        %1788 = vmatmul.bf16.gmra.mxu0 %v1644
        %v1789 = vpop.f32.mrf.mxu0
        %v1790 = vadd.f32 %v1766, %v1789
        %v1791 = vpop.f32.mrf.mxu0
        %1792 = vdwg.mxu0
        %s1793 = scalar_lea.vmem %s6, 80
        %v1794 = vld [vmem:[%s1793] sm:$0xf]
        %v1795 = vld [vmem:[%s1793 + $0x4] sm:$0xf]
        %v1796 = vld [vmem:[%s1793 + $0x8] sm:$0xf]
        %v1797 = vld [vmem:[%s1793 + $0xc] sm:$0xf]
        %s1798 = scalar_lea.vmem %s7, 5
        %v1799 = vld [vmem:[%s1798] sm:$0x1]
        %v1801 = vperm.slane %v1799, 0
        %v1807 = vunpack.c.l.b16 %v1794
        %v1808 = vunpack.c.l.b16 %v1795
        %v1809 = vunpack.c.l.b16 %v1796
        %v1810 = vunpack.c.l.b16 %v1797
        %v1811 = vpack.c.b16 %v1808, %v1807
        %v1812 = vpack.c.b16 %v1810, %v1809
        %1815 = vmatpush.bf16.msra.mxu0 0
        %1816 = vmatpush.bf16.msra.mxu0 0
        %1817 = vmatpush.bf16.msra.mxu0 0
        %1818 = vmatpush.bf16.msra.mxu0 0
        %1819 = vmatpush.bf16.msra.mxu0 0
        %1820 = vmatpush.bf16.msra.mxu0 0
        %1821 = vmatpush.bf16.msra.mxu0 %v1812
        %1822 = vmatpush.bf16.msra.mxu0 %v1811
        %1823 = vmatmul.bf16.gmra.mxu0 %v1644
        %v1824 = vpop.f32.mrf.mxu0
        %v1825 = vadd.f32 %v1801, %v1824
        %v1826 = vpop.f32.mrf.mxu0
        %1827 = vdwg.mxu0
        %v1828 = vpack.c.bf16 %v1790, %v1790
        %v1829 = vpack.c.bf16 %v1825, %v1825
        %v1831 = vsel %vm835, %v1828, 0
        %v1834 = vsel %vm835, %v1829, 0
        %1836 = vmatpush.bf16.xpose.msra.mxu0 0
        %1837 = vmatpush.bf16.xpose.msra.mxu0 0
        %1838 = vmatpush.bf16.xpose.msra.mxu0 0
        %1839 = vmatpush.bf16.xpose.msra.mxu0 0
        %1840 = vmatpush.bf16.xpose.msra.mxu0 0
        %1841 = vmatpush.bf16.xpose.msra.mxu0 0
        %1842 = vmatpush.bf16.xpose.msra.mxu0 0
        %1843 = vmatpush.bf16.xpose.msra.mxu0 %v1834
        %1844 = vmatmul.bf16.gmra.mxu0 %v1831
        %v1845 = vpop.f32.mrf.mxu0
        %v1846 = vadd.f32 0.0, %v1845
        %v1847 = vpop.f32.mrf.mxu0
        %1848 = vdwg.mxu0
        %v1849 = vsel %vm855, %v1846, -inf
        %1850 = vmax.xlane.f32.xlu0 %v1849
        %v1851 = vpop.xlane.xlu0 %1850
        %v1852 = vsub.f32 %v1846, %v1851
        %v1853 = vmul.f32 %v1852, 1.442695
        %v1854 = vpow.pop %v1853
        %v1855 = vsel %vm855, %v1854, 0.0
        %1856 = vadd.xlane.f32.xlu0 %v1855
        %v1857 = vpop.xlane.xlu0 %1856
        %v1858 = vrcp.pop %v1857
        %v1859 = vmul.f32 %v1854, %v1858
        %s1860 = scalar_lea.vmem %s8, 80
        %v1861 = vld [vmem:[%s1860] sm:$0xf]
        %v1862 = vld [vmem:[%s1860 + $0x4] sm:$0xf]
        %v1863 = vld [vmem:[%s1860 + $0x8] sm:$0xf]
        %v1864 = vld [vmem:[%s1860 + $0xc] sm:$0xf]
        %v1869 = vunpack.c.l.b16 %v1861
        %v1870 = vunpack.c.l.b16 %v1862
        %v1871 = vunpack.c.l.b16 %v1863
        %v1872 = vunpack.c.l.b16 %v1864
        %v1873 = vpack.c.b16 %v1870, %v1869
        %v1874 = vpack.c.b16 %v1872, %v1871
        %1877 = vmatpush.bf16.msra.mxu0 0
        %1878 = vmatpush.bf16.msra.mxu0 0
        %1879 = vmatpush.bf16.msra.mxu0 0
        %1880 = vmatpush.bf16.msra.mxu0 0
        %1881 = vmatpush.bf16.msra.mxu0 0
        %1882 = vmatpush.bf16.msra.mxu0 0
        %1883 = vmatpush.bf16.msra.mxu0 %v1874
        %1884 = vmatpush.bf16.msra.mxu0 %v1873
        %1885 = vmatmul.bf16.gmra.mxu0 %v1644
        %v1886 = vpop.f32.mrf.mxu0
        %v1887 = vadd.f32 0.0, %v1886
        %v1888 = vpop.f32.mrf.mxu0
        %1889 = vdwg.mxu0
        %v1890 = vpack.c.bf16 %v1859, %v1859
        %v1891 = vpack.c.bf16 %v1887, %v1887
        %v1893 = vsel %vm739, %v1890, 0
        %v1896 = vsel %vm743, %v1891, 0
        %1898 = vmatpush.bf16.msra.mxu0 0
        %1899 = vmatpush.bf16.msra.mxu0 0
        %1900 = vmatpush.bf16.msra.mxu0 0
        %1901 = vmatpush.bf16.msra.mxu0 0
        %1902 = vmatpush.bf16.msra.mxu0 0
        %1903 = vmatpush.bf16.msra.mxu0 0
        %1904 = vmatpush.bf16.msra.mxu0 0
        %1905 = vmatpush.bf16.msra.mxu0 %v1896
        %1906 = vmatmul.bf16.gmra.mxu0 %v1893
        %v1907 = vpop.f32.mrf.mxu0
        %v1908 = vadd.f32 0.0, %v1907
        %v1909 = vpop.f32.mrf.mxu0
        %1910 = vdwg.mxu0
        %v1912 = vsel %vm739, %v1756, 0
        %v1915 = vsel %vm743, %v1757, 0
        %1917 = vmatpush.bf16.msra.mxu0 0
        %1918 = vmatpush.bf16.msra.mxu0 0
        %1919 = vmatpush.bf16.msra.mxu0 0
        %1920 = vmatpush.bf16.msra.mxu0 0
        %1921 = vmatpush.bf16.msra.mxu0 0
        %1922 = vmatpush.bf16.msra.mxu0 0
        %1923 = vmatpush.bf16.msra.mxu0 0
        %1924 = vmatpush.bf16.msra.mxu0 %v1915
        %1925 = vmatmul.bf16.gmra.mxu0 %v1912
        %v1926 = vpop.f32.mrf.mxu0
        %v1927 = vadd.f32 %v1908, %v1926
        %v1928 = vpop.f32.mrf.mxu0
        %1929 = vdwg.mxu0
        %s1930 = scalar_lea.vmem %s4, 96
        %v1931 = vld [vmem:[%s1930] sm:$0xf]
        %v1932 = vld [vmem:[%s1930 + $0x4] sm:$0xf]
        %v1933 = vld [vmem:[%s1930 + $0x8] sm:$0xf]
        %v1934 = vld [vmem:[%s1930 + $0xc] sm:$0xf]
        %s1935 = scalar_lea.vmem %s5, 6
        %v1936 = vld [vmem:[%s1935] sm:$0x1]
        %v1938 = vperm.slane %v1936, 0
        %v1944 = vunpack.c.l.b16 %v1931
        %v1945 = vunpack.c.l.b16 %v1932
        %v1946 = vunpack.c.l.b16 %v1933
        %v1947 = vunpack.c.l.b16 %v1934
        %v1948 = vpack.c.b16 %v1945, %v1944
        %v1949 = vpack.c.b16 %v1947, %v1946
        %1952 = vmatpush.bf16.msra.mxu0 0
        %1953 = vmatpush.bf16.msra.mxu0 0
        %1954 = vmatpush.bf16.msra.mxu0 0
        %1955 = vmatpush.bf16.msra.mxu0 0
        %1956 = vmatpush.bf16.msra.mxu0 0
        %1957 = vmatpush.bf16.msra.mxu0 0
        %1958 = vmatpush.bf16.msra.mxu0 %v1949
        %1959 = vmatpush.bf16.msra.mxu0 %v1948
        %1960 = vmatmul.bf16.gmra.mxu0 %v1644
        %v1961 = vpop.f32.mrf.mxu0
        %v1962 = vadd.f32 %v1938, %v1961
        %v1963 = vpop.f32.mrf.mxu0
        %1964 = vdwg.mxu0
        %s1965 = scalar_lea.vmem %s6, 96
        %v1966 = vld [vmem:[%s1965] sm:$0xf]
        %v1967 = vld [vmem:[%s1965 + $0x4] sm:$0xf]
        %v1968 = vld [vmem:[%s1965 + $0x8] sm:$0xf]
        %v1969 = vld [vmem:[%s1965 + $0xc] sm:$0xf]
        %s1970 = scalar_lea.vmem %s7, 6
        %v1971 = vld [vmem:[%s1970] sm:$0x1]
        %v1973 = vperm.slane %v1971, 0
        %v1979 = vunpack.c.l.b16 %v1966
        %v1980 = vunpack.c.l.b16 %v1967
        %v1981 = vunpack.c.l.b16 %v1968
        %v1982 = vunpack.c.l.b16 %v1969
        %v1983 = vpack.c.b16 %v1980, %v1979
        %v1984 = vpack.c.b16 %v1982, %v1981
        %1987 = vmatpush.bf16.msra.mxu0 0
        %1988 = vmatpush.bf16.msra.mxu0 0
        %1989 = vmatpush.bf16.msra.mxu0 0
        %1990 = vmatpush.bf16.msra.mxu0 0
        %1991 = vmatpush.bf16.msra.mxu0 0
        %1992 = vmatpush.bf16.msra.mxu0 0
        %1993 = vmatpush.bf16.msra.mxu0 %v1984
        %1994 = vmatpush.bf16.msra.mxu0 %v1983
        %1995 = vmatmul.bf16.gmra.mxu0 %v1644
        %v1996 = vpop.f32.mrf.mxu0
        %v1997 = vadd.f32 %v1973, %v1996
        %v1998 = vpop.f32.mrf.mxu0
        %1999 = vdwg.mxu0
        %v2000 = vpack.c.bf16 %v1962, %v1962
        %v2001 = vpack.c.bf16 %v1997, %v1997
        %v2003 = vsel %vm835, %v2000, 0
        %v2006 = vsel %vm835, %v2001, 0
        %2008 = vmatpush.bf16.xpose.msra.mxu0 0
        %2009 = vmatpush.bf16.xpose.msra.mxu0 0
        %2010 = vmatpush.bf16.xpose.msra.mxu0 0
        %2011 = vmatpush.bf16.xpose.msra.mxu0 0
        %2012 = vmatpush.bf16.xpose.msra.mxu0 0
        %2013 = vmatpush.bf16.xpose.msra.mxu0 0
        %2014 = vmatpush.bf16.xpose.msra.mxu0 0
        %2015 = vmatpush.bf16.xpose.msra.mxu0 %v2006
        %2016 = vmatmul.bf16.gmra.mxu0 %v2003
        %v2017 = vpop.f32.mrf.mxu0
        %v2018 = vadd.f32 0.0, %v2017
        %v2019 = vpop.f32.mrf.mxu0
        %2020 = vdwg.mxu0
        %v2021 = vsel %vm855, %v2018, -inf
        %2022 = vmax.xlane.f32.xlu0 %v2021
        %v2023 = vpop.xlane.xlu0 %2022
        %v2024 = vsub.f32 %v2018, %v2023
        %v2025 = vmul.f32 %v2024, 1.442695
        %v2026 = vpow.pop %v2025
        %v2027 = vsel %vm855, %v2026, 0.0
        %2028 = vadd.xlane.f32.xlu0 %v2027
        %v2029 = vpop.xlane.xlu0 %2028
        %v2030 = vrcp.pop %v2029
        %v2031 = vmul.f32 %v2026, %v2030
        %s2032 = scalar_lea.vmem %s8, 96
        %v2033 = vld [vmem:[%s2032] sm:$0xf]
        %v2034 = vld [vmem:[%s2032 + $0x4] sm:$0xf]
        %v2035 = vld [vmem:[%s2032 + $0x8] sm:$0xf]
        %v2036 = vld [vmem:[%s2032 + $0xc] sm:$0xf]
        %v2041 = vunpack.c.l.b16 %v2033
        %v2042 = vunpack.c.l.b16 %v2034
        %v2043 = vunpack.c.l.b16 %v2035
        %v2044 = vunpack.c.l.b16 %v2036
        %v2045 = vpack.c.b16 %v2042, %v2041
        %v2046 = vpack.c.b16 %v2044, %v2043
        %2049 = vmatpush.bf16.msra.mxu0 0
        %2050 = vmatpush.bf16.msra.mxu0 0
        %2051 = vmatpush.bf16.msra.mxu0 0
        %2052 = vmatpush.bf16.msra.mxu0 0
        %2053 = vmatpush.bf16.msra.mxu0 0
        %2054 = vmatpush.bf16.msra.mxu0 0
        %2055 = vmatpush.bf16.msra.mxu0 %v2046
        %2056 = vmatpush.bf16.msra.mxu0 %v2045
        %2057 = vmatmul.bf16.gmra.mxu0 %v1644
        %v2058 = vpop.f32.mrf.mxu0
        %v2059 = vadd.f32 0.0, %v2058
        %v2060 = vpop.f32.mrf.mxu0
        %2061 = vdwg.mxu0
        %v2062 = vpack.c.bf16 %v2031, %v2031
        %v2063 = vpack.c.bf16 %v2059, %v2059
        %v2065 = vsel %vm739, %v2062, 0
        %v2068 = vsel %vm743, %v2063, 0
        %2070 = vmatpush.bf16.msra.mxu0 0
        %2071 = vmatpush.bf16.msra.mxu0 0
        %2072 = vmatpush.bf16.msra.mxu0 0
        %2073 = vmatpush.bf16.msra.mxu0 0
        %2074 = vmatpush.bf16.msra.mxu0 0
        %2075 = vmatpush.bf16.msra.mxu0 0
        %2076 = vmatpush.bf16.msra.mxu0 0
        %2077 = vmatpush.bf16.msra.mxu0 %v2068
        %2078 = vmatmul.bf16.gmra.mxu0 %v2065
        %v2079 = vpop.f32.mrf.mxu0
        %v2080 = vadd.f32 0.0, %v2079
        %v2081 = vpop.f32.mrf.mxu0
        %2082 = vdwg.mxu0
        %v2083 = vadd.f32 %v1927, %v2080
        %s2084 = scalar_lea.vmem %s4, 112
        %v2085 = vld [vmem:[%s2084] sm:$0xf]
        %v2086 = vld [vmem:[%s2084 + $0x4] sm:$0xf]
        %v2087 = vld [vmem:[%s2084 + $0x8] sm:$0xf]
        %v2088 = vld [vmem:[%s2084 + $0xc] sm:$0xf]
        %s2089 = scalar_lea.vmem %s5, 7
        %v2090 = vld [vmem:[%s2089] sm:$0x1]
        %v2092 = vperm.slane %v2090, 0
        %v2098 = vunpack.c.l.b16 %v2085
        %v2099 = vunpack.c.l.b16 %v2086
        %v2100 = vunpack.c.l.b16 %v2087
        %v2101 = vunpack.c.l.b16 %v2088
        %v2102 = vpack.c.b16 %v2099, %v2098
        %v2103 = vpack.c.b16 %v2101, %v2100
        %2106 = vmatpush.bf16.msra.mxu0 0
        %2107 = vmatpush.bf16.msra.mxu0 0
        %2108 = vmatpush.bf16.msra.mxu0 0
        %2109 = vmatpush.bf16.msra.mxu0 0
        %2110 = vmatpush.bf16.msra.mxu0 0
        %2111 = vmatpush.bf16.msra.mxu0 0
        %2112 = vmatpush.bf16.msra.mxu0 %v2103
        %2113 = vmatpush.bf16.msra.mxu0 %v2102
        %2114 = vmatmul.bf16.gmra.mxu0 %v1644
        %v2115 = vpop.f32.mrf.mxu0
        %v2116 = vadd.f32 %v2092, %v2115
        %v2117 = vpop.f32.mrf.mxu0
        %2118 = vdwg.mxu0
        %s2119 = scalar_lea.vmem %s6, 112
        %v2120 = vld [vmem:[%s2119] sm:$0xf]
        %v2121 = vld [vmem:[%s2119 + $0x4] sm:$0xf]
        %v2122 = vld [vmem:[%s2119 + $0x8] sm:$0xf]
        %v2123 = vld [vmem:[%s2119 + $0xc] sm:$0xf]
        %s2124 = scalar_lea.vmem %s7, 7
        %v2125 = vld [vmem:[%s2124] sm:$0x1]
        %v2127 = vperm.slane %v2125, 0
        %v2133 = vunpack.c.l.b16 %v2120
        %v2134 = vunpack.c.l.b16 %v2121
        %v2135 = vunpack.c.l.b16 %v2122
        %v2136 = vunpack.c.l.b16 %v2123
        %v2137 = vpack.c.b16 %v2134, %v2133
        %v2138 = vpack.c.b16 %v2136, %v2135
        %2141 = vmatpush.bf16.msra.mxu0 0
        %2142 = vmatpush.bf16.msra.mxu0 0
        %2143 = vmatpush.bf16.msra.mxu0 0
        %2144 = vmatpush.bf16.msra.mxu0 0
        %2145 = vmatpush.bf16.msra.mxu0 0
        %2146 = vmatpush.bf16.msra.mxu0 0
        %2147 = vmatpush.bf16.msra.mxu0 %v2138
        %2148 = vmatpush.bf16.msra.mxu0 %v2137
        %2149 = vmatmul.bf16.gmra.mxu0 %v1644
        %v2150 = vpop.f32.mrf.mxu0
        %v2151 = vadd.f32 %v2127, %v2150
        %v2152 = vpop.f32.mrf.mxu0
        %2153 = vdwg.mxu0
        %v2154 = vpack.c.bf16 %v2116, %v2116
        %v2155 = vpack.c.bf16 %v2151, %v2151
        %v2157 = vsel %vm835, %v2154, 0
        %v2160 = vsel %vm835, %v2155, 0
        %2162 = vmatpush.bf16.xpose.msra.mxu0 0
        %2163 = vmatpush.bf16.xpose.msra.mxu0 0
        %2164 = vmatpush.bf16.xpose.msra.mxu0 0
        %2165 = vmatpush.bf16.xpose.msra.mxu0 0
        %2166 = vmatpush.bf16.xpose.msra.mxu0 0
        %2167 = vmatpush.bf16.xpose.msra.mxu0 0
        %2168 = vmatpush.bf16.xpose.msra.mxu0 0
        %2169 = vmatpush.bf16.xpose.msra.mxu0 %v2160
        %2170 = vmatmul.bf16.gmra.mxu0 %v2157
        %v2171 = vpop.f32.mrf.mxu0
        %v2172 = vadd.f32 0.0, %v2171
        %v2173 = vpop.f32.mrf.mxu0
        %2174 = vdwg.mxu0
        %v2175 = vsel %vm855, %v2172, -inf
        %2176 = vmax.xlane.f32.xlu0 %v2175
        %v2177 = vpop.xlane.xlu0 %2176
        %v2178 = vsub.f32 %v2172, %v2177
        %v2179 = vmul.f32 %v2178, 1.442695
        %v2180 = vpow.pop %v2179
        %v2181 = vsel %vm855, %v2180, 0.0
        %2182 = vadd.xlane.f32.xlu0 %v2181
        %v2183 = vpop.xlane.xlu0 %2182
        %v2184 = vrcp.pop %v2183
        %v2185 = vmul.f32 %v2180, %v2184
        %s2186 = scalar_lea.vmem %s8, 112
        %v2187 = vld [vmem:[%s2186] sm:$0xf]
        %v2188 = vld [vmem:[%s2186 + $0x4] sm:$0xf]
        %v2189 = vld [vmem:[%s2186 + $0x8] sm:$0xf]
        %v2190 = vld [vmem:[%s2186 + $0xc] sm:$0xf]
        %v2195 = vunpack.c.l.b16 %v2187
        %v2196 = vunpack.c.l.b16 %v2188
        %v2197 = vunpack.c.l.b16 %v2189
        %v2198 = vunpack.c.l.b16 %v2190
        %v2199 = vpack.c.b16 %v2196, %v2195
        %v2200 = vpack.c.b16 %v2198, %v2197
        %2203 = vmatpush.bf16.msra.mxu0 0
        %2204 = vmatpush.bf16.msra.mxu0 0
        %2205 = vmatpush.bf16.msra.mxu0 0
        %2206 = vmatpush.bf16.msra.mxu0 0
        %2207 = vmatpush.bf16.msra.mxu0 0
        %2208 = vmatpush.bf16.msra.mxu0 0
        %2209 = vmatpush.bf16.msra.mxu0 %v2200
        %2210 = vmatpush.bf16.msra.mxu0 %v2199
        %2211 = vmatmul.bf16.gmra.mxu0 %v1644
        %v2212 = vpop.f32.mrf.mxu0
        %v2213 = vadd.f32 0.0, %v2212
        %v2214 = vpop.f32.mrf.mxu0
        %2215 = vdwg.mxu0
        %v2216 = vpack.c.bf16 %v2185, %v2185
        %v2217 = vpack.c.bf16 %v2213, %v2213
        %v2219 = vsel %vm739, %v2216, 0
        %v2222 = vsel %vm743, %v2217, 0
        %2224 = vmatpush.bf16.msra.mxu0 0
        %2225 = vmatpush.bf16.msra.mxu0 0
        %2226 = vmatpush.bf16.msra.mxu0 0
        %2227 = vmatpush.bf16.msra.mxu0 0
        %2228 = vmatpush.bf16.msra.mxu0 0
        %2229 = vmatpush.bf16.msra.mxu0 0
        %2230 = vmatpush.bf16.msra.mxu0 0
        %2231 = vmatpush.bf16.msra.mxu0 %v2222
        %2232 = vmatmul.bf16.gmra.mxu0 %v2219
        %v2233 = vpop.f32.mrf.mxu0
        %v2234 = vadd.f32 0.0, %v2233
        %v2235 = vpop.f32.mrf.mxu0
        %2236 = vdwg.mxu0
        %v2237 = vadd.f32 %v2083, %v2234
        %v2238 = vadd.f32 %v1619, %v2237
        %s2239 = scalar_lea.vmem %s9, 1
        %v2240 = vld [vmem:[%s2239] sm:$0x1]
        %v2242 = vperm.slane %v2240, 0
        %v2244 = vadd.f32 %v2238, %v2242
        %s2245 = scalar_lea.vmem %s10, 1
        %v2246 = vld [vmem:[%s2245] sm:$0x1]
        %s2247 = scalar_lea.vmem %s11, 1
        %v2248 = vld [vmem:[%s2247] sm:$0x1]
        %v2249 = vsel %vm1386, %v2244, 0.0
        %2250 = vadd.xlane.f32.xlu0 %v2249
        %v2251 = vpop.xlane.xlu0 %2250
        %v2252 = vmul.f32 %v2251, %v1396
        %v2253 = vsub.f32 %v2244, %v2252
        %v2254 = vmul.f32 %v2253, %v2253
        %v2255 = vsel %vm1386, %v2254, 0.0
        %2256 = vadd.xlane.f32.xlu0 %v2255
        %v2257 = vpop.xlane.xlu0 %2256
        %v2258 = vmul.f32 %v2257, %v1396
        %v2259 = vadd.f32 %v2258, 1e-05
        %v2260 = vrsqrt.pop %v2259
        %v2261 = vmul.f32 %v2260, %v2259
        %v2262 = vmul.f32 %v2261, %v2260
        %v2263 = vmul.f32 0.5, %v2262
        %v2264 = vsub.f32 1.5, %v2263
        %v2265 = vmul.f32 %v2260, %v2264
        %vm2266 = vweird.f32 %v2259
        %vm2267 = vweird.f32 %v2260
        %vm2268 = vmor %vm2266, %vm2267
        %v2269 = vsel %vm2268, %v2260, %v2265
        %v2270 = vmul.f32 %v2253, %v2269
        %v2272 = vperm.slane %v2246, 0
        %v2274 = vmul.f32 %v2270, %v2272
        %v2276 = vperm.slane %v2248, 0
        %v2278 = vadd.f32 %v2274, %v2276
        %v2279 = vpack.c.bf16 %v2278, %v2278
        %s2280 = scalar_lea.vmem %s12, 16
        %v2281 = vld [vmem:[%s2280] sm:$0xf]
        %v2282 = vld [vmem:[%s2280 + $0x4] sm:$0xf]
        %v2283 = vld [vmem:[%s2280 + $0x8] sm:$0xf]
        %v2284 = vld [vmem:[%s2280 + $0xc] sm:$0xf]
        %s2285 = scalar_lea.vmem %s13, 1
        %v2286 = vld [vmem:[%s2285] sm:$0x1]
        %v2288 = vperm.slane %v2286, 0
        %v2294 = vunpack.c.l.b16 %v2281
        %v2295 = vunpack.c.l.b16 %v2282
        %v2296 = vunpack.c.l.b16 %v2283
        %v2297 = vunpack.c.l.b16 %v2284
        %v2298 = vpack.c.b16 %v2295, %v2294
        %v2299 = vpack.c.b16 %v2297, %v2296
        %v2303 = vsel %vm783, %v2279, 0
        %2305 = vmatpush.bf16.msra.mxu0 0
        %2306 = vmatpush.bf16.msra.mxu0 0
        %2307 = vmatpush.bf16.msra.mxu0 0
        %2308 = vmatpush.bf16.msra.mxu0 0
        %2309 = vmatpush.bf16.msra.mxu0 0
        %2310 = vmatpush.bf16.msra.mxu0 0
        %2311 = vmatpush.bf16.msra.mxu0 %v2299
        %2312 = vmatpush.bf16.msra.mxu0 %v2298
        %2313 = vmatmul.bf16.gmra.mxu0 %v2303
        %v2314 = vpop.f32.mrf.mxu0
        %v2315 = vadd.f32 %v2288, %v2314
        %v2316 = vpop.f32.mrf.mxu0
        %2317 = vdwg.mxu0
        %v2318 = vmul.f32 %v2315, 0.5
        %v2319 = vmul.f32 %v2315, 0.70710677
        %v2320 = vmul.f32 %v2319, %v2319
        %v2321 = vmin.f32 16.0, %v2320
        %v2322 = vmul.f32 %v2321, 2.1237322e-06
        %v2323 = vadd.f32 %v2322, 0.00028619796
        %v2324 = vmul.f32 %v2321, %v2323
        %v2325 = vadd.f32 %v2324, 0.0036580483
        %v2326 = vmul.f32 %v2321, %v2325
        %v2327 = vadd.f32 %v2326, 0.05243302
        %v2328 = vmul.f32 %v2321, %v2327
        %v2329 = vadd.f32 %v2328, 0.18741608
        %v2330 = vmul.f32 %v2321, %v2329
        %v2331 = vadd.f32 %v2330, 1.1283791
        %v2332 = vmul.f32 %v2319, %v2331
        %v2333 = vmul.f32 %v2321, 3.8918573e-05
        %v2334 = vadd.f32 %v2333, 0.001143296
        %v2335 = vmul.f32 %v2321, %v2334
        %v2336 = vadd.f32 %v2335, 0.014752088
        %v2337 = vmul.f32 %v2321, %v2336
        %v2338 = vadd.f32 %v2337, 0.112945676
        %v2339 = vmul.f32 %v2321, %v2338
        %v2340 = vadd.f32 %v2339, 0.4994258
        %v2341 = vmul.f32 %v2321, %v2340
        %v2342 = vadd.f32 %v2341, 1.0
        %v2343 = vrcp.pop %v2342
        %v2344 = vmul.f32 %v2342, %v2343
        %v2345 = vsub.f32 1.0, %v2344
        %v2346 = vmul.f32 %v2343, %v2345
        %v2347 = vadd.f32 %v2343, %v2346
        %vm2348 = vweird.f32 %v2342
        %vm2349 = vweird.f32 %v2343
        %vm2350 = vmor %vm2348, %vm2349
        %v2351 = vsel %vm2350, %v2343, %v2347
        %v2352 = vand.u32 2147483647, %v2342
        %vm2353 = vcmp.eq.f32.partialorder %v2352, 8.507059e+37
        %v2354 = vand.u32 %v2342, 2147483648
        %v2355 = vor.u32 1.1754944e-38, %v2354
        %v2356 = vsel %vm2353, %v2355, %v2351
        %v2357 = vmul.f32 %v2332, %v2356
        %v2358 = vmin.f32 %v2357, 1.0
        %v2359 = vmax.f32 %v2358, -1.0
        %v2360 = vadd.f32 %v2359, 1.0
        %v2361 = vmul.f32 %v2318, %v2360
        %v2362 = vpack.c.bf16 %v2361, %v2361
        %s2363 = scalar_lea.vmem %s14, 64
        %v2364 = vld [vmem:[%s2363] sm:$0xf]
        %v2365 = vld [vmem:[%s2363 + $0x4] sm:$0xf]
        %v2366 = vld [vmem:[%s2363 + $0x8] sm:$0xf]
        %v2367 = vld [vmem:[%s2363 + $0xc] sm:$0xf]
        %v2368 = vld [vmem:[%s2363 + $0x10] sm:$0xf]
        %v2369 = vld [vmem:[%s2363 + $0x14] sm:$0xf]
        %v2370 = vld [vmem:[%s2363 + $0x18] sm:$0xf]
        %v2371 = vld [vmem:[%s2363 + $0x1c] sm:$0xf]
        %v2372 = vld [vmem:[%s2363 + $0x20] sm:$0xf]
        %v2373 = vld [vmem:[%s2363 + $0x24] sm:$0xf]
        %v2374 = vld [vmem:[%s2363 + $0x28] sm:$0xf]
        %v2375 = vld [vmem:[%s2363 + $0x2c] sm:$0xf]
        %v2376 = vld [vmem:[%s2363 + $0x30] sm:$0xf]
        %v2377 = vld [vmem:[%s2363 + $0x34] sm:$0xf]
        %v2378 = vld [vmem:[%s2363 + $0x38] sm:$0xf]
        %v2379 = vld [vmem:[%s2363 + $0x3c] sm:$0xf]
        %s2380 = scalar_lea.vmem %s15, 1
        %v2381 = vld [vmem:[%s2380] sm:$0x1]
        %v2383 = vperm.slane %v2381, 0
        %v2401 = vunpack.c.l.b16 %v2364
        %v2402 = vunpack.c.l.b16 %v2365
        %v2403 = vunpack.c.l.b16 %v2366
        %v2404 = vunpack.c.l.b16 %v2367
        %v2405 = vunpack.c.l.b16 %v2368
        %v2406 = vunpack.c.l.b16 %v2369
        %v2407 = vunpack.c.l.b16 %v2370
        %v2408 = vunpack.c.l.b16 %v2371
        %v2409 = vunpack.c.l.b16 %v2372
        %v2410 = vunpack.c.l.b16 %v2373
        %v2411 = vunpack.c.l.b16 %v2374
        %v2412 = vunpack.c.l.b16 %v2375
        %v2413 = vunpack.c.l.b16 %v2376
        %v2414 = vunpack.c.l.b16 %v2377
        %v2415 = vunpack.c.l.b16 %v2378
        %v2416 = vunpack.c.l.b16 %v2379
        %v2417 = vpack.c.b16 %v2402, %v2401
        %v2418 = vpack.c.b16 %v2404, %v2403
        %v2419 = vpack.c.b16 %v2406, %v2405
        %v2420 = vpack.c.b16 %v2408, %v2407
        %v2421 = vpack.c.b16 %v2410, %v2409
        %v2422 = vpack.c.b16 %v2412, %v2411
        %v2423 = vpack.c.b16 %v2414, %v2413
        %v2424 = vpack.c.b16 %v2416, %v2415
        %2433 = vmatpush.bf16.msra.mxu0 %v2424
        %2434 = vmatpush.bf16.msra.mxu0 %v2423
        %2435 = vmatpush.bf16.msra.mxu0 %v2422
        %2436 = vmatpush.bf16.msra.mxu0 %v2421
        %2437 = vmatpush.bf16.msra.mxu0 %v2420
        %2438 = vmatpush.bf16.msra.mxu0 %v2419
        %2439 = vmatpush.bf16.msra.mxu0 %v2418
        %2440 = vmatpush.bf16.msra.mxu0 %v2417
        %2441 = vmatmul.bf16.gmra.mxu0 %v2362
        %v2442 = vpop.f32.mrf.mxu0
        %v2443 = vadd.f32 %v2383, %v2442
        %v2444 = vpop.f32.mrf.mxu0
        %2445 = vdwg.mxu0
        %v2446 = vadd.f32 %v2278, %v2443
        %s2447 = scalar_lea.vmem %s16, 1
        %v2448 = vld [vmem:[%s2447] sm:$0x1]
        %s2449 = scalar_lea.vmem %s17, 1
        %v2450 = vld [vmem:[%s2449] sm:$0x1]
        %v2451 = vsel %vm1386, %v2446, 0.0
        %2452 = vadd.xlane.f32.xlu0 %v2451
        %v2453 = vpop.xlane.xlu0 %2452
        %v2454 = vmul.f32 %v2453, %v1396
        %v2455 = vsub.f32 %v2446, %v2454
        %v2456 = vmul.f32 %v2455, %v2455
        %v2457 = vsel %vm1386, %v2456, 0.0
        %2458 = vadd.xlane.f32.xlu0 %v2457
        %v2459 = vpop.xlane.xlu0 %2458
        %v2460 = vmul.f32 %v2459, %v1396
        %v2461 = vadd.f32 %v2460, 1e-05
        %v2462 = vrsqrt.pop %v2461
        %v2463 = vmul.f32 %v2462, %v2461
        %v2464 = vmul.f32 %v2463, %v2462
        %v2465 = vmul.f32 0.5, %v2464
        %v2466 = vsub.f32 1.5, %v2465
        %v2467 = vmul.f32 %v2462, %v2466
        %vm2468 = vweird.f32 %v2461
        %vm2469 = vweird.f32 %v2462
        %vm2470 = vmor %vm2468, %vm2469
        %v2471 = vsel %vm2470, %v2462, %v2467
        %v2472 = vmul.f32 %v2455, %v2471
        %v2474 = vperm.slane %v2448, 0
        %v2476 = vmul.f32 %v2472, %v2474
        %v2478 = vperm.slane %v2450, 0
        %v2480 = vadd.f32 %v2476, %v2478
        %v2481 = vsel %vm1386, %v2480, 0.0
        %v2482 = vrot.slane %v2481, 4
        %v2483 = vadd.f32 %v2481, %v2482
        %v2484 = vrot.slane %v2483, 2
        %v2485 = vadd.f32 %v2483, %v2484
        %v2486 = vrot.slane %v2485, 1
        %v2487 = vadd.f32 %v2485, %v2486
        %v2488 = vmul.f32 %v2487, 0.25
        %v2489 = vld [vmem:[%s18] sm:$0x1]
        %v2490 = vld [vmem:[%s19] sm:$0x1]
        %v2491 = vsel %vm783, %v2488, 0.0
        %2492 = vadd.xlane.f32.xlu0 %v2491
        %v2493 = vpop.xlane.xlu0 %2492
        %v2494 = vmul.f32 %v2493, %v1396
        %v2495 = vsub.f32 %v2488, %v2494
        %v2496 = vmul.f32 %v2495, %v2495
        %v2497 = vsel %vm783, %v2496, 0.0
        %2498 = vadd.xlane.f32.xlu0 %v2497
        %v2499 = vpop.xlane.xlu0 %2498
        %v2500 = vmul.f32 %v2499, %v1396
        %v2501 = vadd.f32 %v2500, 1e-05
        %v2502 = vrsqrt.pop %v2501
        %v2503 = vmul.f32 %v2502, %v2501
        %v2504 = vmul.f32 %v2503, %v2502
        %v2505 = vmul.f32 0.5, %v2504
        %v2506 = vsub.f32 1.5, %v2505
        %v2507 = vmul.f32 %v2502, %v2506
        %vm2508 = vweird.f32 %v2501
        %vm2509 = vweird.f32 %v2502
        %vm2510 = vmor %vm2508, %vm2509
        %v2511 = vsel %vm2510, %v2502, %v2507
        %v2512 = vmul.f32 %v2495, %v2511
        %v2513 = vmul.f32 %v2512, %v2489
        %v2514 = vadd.f32 %v2513, %v2490
        %v2515 = vpack.c.bf16 %v2514, %v2514
        %v2516 = vld [vmem:[%s20] sm:$0xf]
        %v2517 = vld [vmem:[%s20 + $0x4] sm:$0xf]
        %v2518 = vld [vmem:[%s20 + $0x8] sm:$0xf]
        %v2519 = vld [vmem:[%s20 + $0xc] sm:$0xf]
        %v2520 = vld [vmem:[%s21] sm:$0x1]
        %v2525 = vunpack.c.l.b16 %v2516
        %v2526 = vunpack.c.l.b16 %v2517
        %v2527 = vunpack.c.l.b16 %v2518
        %v2528 = vunpack.c.l.b16 %v2519
        %v2529 = vpack.c.b16 %v2526, %v2525
        %v2530 = vpack.c.b16 %v2528, %v2527
        %v2534 = vsel %vm783, %v2515, 0
        %2536 = vmatpush.bf16.msra.mxu0 0
        %2537 = vmatpush.bf16.msra.mxu0 0
        %2538 = vmatpush.bf16.msra.mxu0 0
        %2539 = vmatpush.bf16.msra.mxu0 0
        %2540 = vmatpush.bf16.msra.mxu0 0
        %2541 = vmatpush.bf16.msra.mxu0 0
        %2542 = vmatpush.bf16.msra.mxu0 %v2530
        %2543 = vmatpush.bf16.msra.mxu0 %v2529
        %2544 = vmatmul.bf16.gmra.mxu0 %v2534
        %v2545 = vpop.f32.mrf.mxu0
        %v2546 = vadd.f32 %v2520, %v2545
        %v2547 = vpop.f32.mrf.mxu0
        %2548 = vdwg.mxu0
        %v2549 = vmul.f32 %v2546, 0.5
        %v2550 = vmul.f32 %v2546, 0.70710677
        %v2551 = vmul.f32 %v2550, %v2550
        %v2552 = vmin.f32 16.0, %v2551
        %v2553 = vmul.f32 %v2552, 2.1237322e-06
        %v2554 = vadd.f32 %v2553, 0.00028619796
        %v2555 = vmul.f32 %v2552, %v2554
        %v2556 = vadd.f32 %v2555, 0.0036580483
        %v2557 = vmul.f32 %v2552, %v2556
        %v2558 = vadd.f32 %v2557, 0.05243302
        %v2559 = vmul.f32 %v2552, %v2558
        %v2560 = vadd.f32 %v2559, 0.18741608
        %v2561 = vmul.f32 %v2552, %v2560
        %v2562 = vadd.f32 %v2561, 1.1283791
        %v2563 = vmul.f32 %v2550, %v2562
        %v2564 = vmul.f32 %v2552, 3.8918573e-05
        %v2565 = vadd.f32 %v2564, 0.001143296
        %v2566 = vmul.f32 %v2552, %v2565
        %v2567 = vadd.f32 %v2566, 0.014752088
        %v2568 = vmul.f32 %v2552, %v2567
        %v2569 = vadd.f32 %v2568, 0.112945676
        %v2570 = vmul.f32 %v2552, %v2569
        %v2571 = vadd.f32 %v2570, 0.4994258
        %v2572 = vmul.f32 %v2552, %v2571
        %v2573 = vadd.f32 %v2572, 1.0
        %v2574 = vrcp.pop %v2573
        %v2575 = vmul.f32 %v2573, %v2574
        %v2576 = vsub.f32 1.0, %v2575
        %v2577 = vmul.f32 %v2574, %v2576
        %v2578 = vadd.f32 %v2574, %v2577
        %vm2579 = vweird.f32 %v2573
        %vm2580 = vweird.f32 %v2574
        %vm2581 = vmor %vm2579, %vm2580
        %v2582 = vsel %vm2581, %v2574, %v2578
        %v2583 = vand.u32 2147483647, %v2573
        %vm2584 = vcmp.eq.f32.partialorder %v2583, 8.507059e+37
        %v2585 = vand.u32 %v2573, 2147483648
        %v2586 = vor.u32 1.1754944e-38, %v2585
        %v2587 = vsel %vm2584, %v2586, %v2582
        %v2588 = vmul.f32 %v2563, %v2587
        %v2589 = vmin.f32 %v2588, 1.0
        %v2590 = vmax.f32 %v2589, -1.0
        %v2591 = vadd.f32 %v2590, 1.0
        %v2592 = vmul.f32 %v2549, %v2591
        %v2593 = vpack.c.bf16 %v2592, %v2592
        %v2594 = vld [vmem:[%s22] sm:$0xf]
        %v2595 = vld [vmem:[%s22 + $0x4] sm:$0xf]
        %v2596 = vld [vmem:[%s22 + $0x8] sm:$0xf]
        %v2597 = vld [vmem:[%s22 + $0xc] sm:$0xf]
        %v2598 = vld [vmem:[%s23] sm:$0x1]
        %v2603 = vunpack.c.l.b16 %v2594
        %v2604 = vunpack.c.l.b16 %v2595
        %v2605 = vunpack.c.l.b16 %v2596
        %v2606 = vunpack.c.l.b16 %v2597
        %v2607 = vpack.c.b16 %v2604, %v2603
        %v2608 = vpack.c.b16 %v2606, %v2605
        %v2612 = vsel %vm783, %v2593, 0
        %2614 = vmatpush.bf16.msra.mxu0 0
        %2615 = vmatpush.bf16.msra.mxu0 0
        %2616 = vmatpush.bf16.msra.mxu0 0
        %2617 = vmatpush.bf16.msra.mxu0 0
        %2618 = vmatpush.bf16.msra.mxu0 0
        %2619 = vmatpush.bf16.msra.mxu0 0
        %2620 = vmatpush.bf16.msra.mxu0 %v2608
        %2621 = vmatpush.bf16.msra.mxu0 %v2607
        %2622 = vmatmul.bf16.gmra.mxu0 %v2612
        %v2623 = vpop.f32.mrf.mxu0
        %v2624 = vadd.f32 %v2598, %v2623
        %v2625 = vpop.f32.mrf.mxu0
        %2626 = vdwg.mxu0
        %2627 = vst [vmem:[%s727] sm:$0x1] %v2624
        %s2628 = sand.u32 %s555, 1
        %s2629 = scalar_lea.sflag [#allocation3], %s2628
        %s2630 = sand.u32 %s555, 1
        %s2631 = scalar_lea.vmem [#allocation2], %s2630
        // Predicated region
        $region117: #{tpu_custom_call.1} parent=115 // pred_check
          %p2632 = pneg %p565
        $region118: #{tpu_custom_call.1} parent=115 // pred_check_branch
          %2634 = sbr.rel (%p2632) target = $region120
        $region119: #{tpu_custom_call.1} parent=115 // pred_region
          %2636 = vsyncadd %s2629, 0
          %s2637 = scalar_lea.hbm %s24, %s38
          %s2639 = sshll.u32 %s2631, 4
          %s2640 = int_to_ptr.vmem [resolvable:$true] %s2639
          %s2641 = sshll.u32 %s2637, 4
          %s2642 = int_to_ptr.hbm [resolvable:$true] %s2641
          %2644 = dma.vmem_to_hbm [thread:$0]  %s2640, 16, %s2642, %s2629
        $region120: #{tpu_custom_call.1} parent=115 // pred_fallthru
          _
      $region116: #{tpu_custom_call.1} parent=5 // pred_fallthru
        _
      %p2645 = scmp.le.s32.totalorder 2, %s33
      // Predicated region
      $region121: #{tpu_custom_call.1} parent=5 // pred_check
        %p2646 = pneg %p2645
      $region122: #{tpu_custom_call.1} parent=5 // pred_check_branch
        %2648 = sbr.rel (%p2646) target = $region124
      $region123: #{tpu_custom_call.1} parent=5 // pred_region
        %s2649 = ssub.s32 %s33, 2
        // Predicated region
        $region125: #{tpu_custom_call.1} parent=123 // pred_check
          %p2650 = pneg %p571
        $region126: #{tpu_custom_call.1} parent=123 // pred_check_branch
          %2652 = sbr.rel (%p2650) target = $region128
        $region127: #{tpu_custom_call.1} parent=123 // pred_region
          %s2653 = sand.u32 %s556, 1
          %s2654 = scalar_lea.sflag [#allocation3], %s2653
          %s2655 = sand.u32 %s556, 1
          %s2656 = scalar_lea.vmem [#allocation2], %s2655
          %2658 = dma.done %s2654, 16
        $region128: #{tpu_custom_call.1} parent=123 // pred_fallthru
          _
      $region124: #{tpu_custom_call.1} parent=5 // pred_fallthru
        _
    $region6: #{tpu_custom_call.1} parent=1 // loop_footer
      %s37 = sadd.s32 1, %s33
    $region7: #{tpu_custom_call.1} parent=1 // loop_footer_branch
      %32 = sbr.rel target = $region3
    $region8: #{tpu_custom_call.1} parent=1 // loop_exit
      _
    %2659 = vsyncpa [#allocation3], 1
    %s2660 = scalar_lea.sflag [#allocation3], 1
    %2661 = vsyncpa %s2660, 1

</llo_original>
